<compile_context>
chip_gen: v5e
topology: v5e:2x2
jax: 0.10.0
libtpu: 0.0.40
codegen_flags: <defaults>
</compile_context>

<pallas_src>
import functools
import math

import jax
import jax.numpy as jnp
from jax import lax
from jax.experimental import pallas as pl
from jax.experimental.pallas import tpu as pltpu


# ----------------------------- fused Pallas kernel -------------------------- #

def _fused_kernel(*refs, big_layout, small_layout, n_heads):
    """Whole FrameQAReasonLayer forward for one batch block, VMEM-resident."""
    frame_ref, qa_ref, small_ref = refs[0], refs[1], refs[2]
    big_refs = refs[3:-2]
    frame_out_ref, qa_out_ref = refs[-2], refs[-1]

    def W(name):
        # Big weight matrices: keep bf16 (native MXU operand dtype).
        return big_refs[big_layout[name]][...]

    def S(name):
        # Small params packed into one f32 (n_rows, width) block; static slices.
        row, width = small_layout[name]
        return small_ref[row:row + 1, :width]            # (1, width) f32

    def mha(x_q, x_kv, prefix, add_residual):
        bk, sq, d = x_q.shape
        sk = x_kv.shape[1]
        hd = d // n_heads

        xq2 = x_q.reshape(bk * sq, d).astype(jnp.bfloat16)
        xkv2 = x_kv.reshape(bk * sk, d).astype(jnp.bfloat16)

        # Full-width projections (1/sqrt(hd) already folded into wq / bq).
        q2 = jnp.dot(xq2, W(prefix + "wq"),
                     preferred_element_type=jnp.float32) + S(prefix + "bq")
        kv2 = jnp.dot(xkv2, W(prefix + "wkv"),
                      preferred_element_type=jnp.float32)
        k2 = kv2[:, :d] + S(prefix + "bk")
        v2 = kv2[:, d:] + S(prefix + "bv")

        q3 = q2.reshape(bk, sq, d).astype(jnp.bfloat16)
        k3 = k2.reshape(bk, sk, d).astype(jnp.bfloat16)
        v3 = v2.reshape(bk, sk, d).astype(jnp.bfloat16)

        # Per-(batch, head) score / PV matmuls via static lane slices,
        # leading-batch einsums (f32 softmax, bf16 MXU operands).
        heads_out = []
        for h in range(n_heads):
            sl = slice(h * hd, (h + 1) * hd)
            s_h = jnp.einsum("bqe,bke->bqk", q3[:, :, sl], k3[:, :, sl],
                             preferred_element_type=jnp.float32)
            s_h = s_h - jnp.max(s_h, axis=-1, keepdims=True)
            p_h = jnp.exp(s_h)
            p_h = p_h / jnp.sum(p_h, axis=-1, keepdims=True)
            o_h = jnp.einsum("bqk,bke->bqe", p_h.astype(jnp.bfloat16),
                             v3[:, :, sl],
                             preferred_element_type=jnp.float32)
            heads_out.append(o_h)

        # concat(heads) @ Wo.T as a single K=D MXU contraction.
        o = jnp.concatenate(heads_out, axis=-1)          # (bk, sq, d) f32
        o2 = o.reshape(bk * sq, d).astype(jnp.bfloat16)
        out2 = jnp.dot(o2, W(prefix + "wo"),
                       preferred_element_type=jnp.float32) + S(prefix + "bo")
        out = out2.reshape(bk, sq, d)
        if add_residual:
            out = out + x_q
        return out

    def add_ln(x, y, g, b):
        z = x + y
        mu = jnp.mean(z, axis=-1, keepdims=True)
        zc = z - mu
        var = jnp.mean(zc * zc, axis=-1, keepdims=True)
        return zc * lax.rsqrt(var + 1e-5) * g + b

    def ffn(x, prefix):
        bk, s, d = x.shape
        x2 = x.reshape(bk * s, d).astype(jnp.bfloat16)
        h = jnp.dot(x2, W(prefix + "w1T"),
                    preferred_element_type=jnp.float32) + S(prefix + "b1")
        h = jnp.maximum(h, 0.0).astype(jnp.bfloat16)
        y2 = jnp.dot(h, W(prefix + "w2T"),
                     preferred_element_type=jnp.float32) + S(prefix + "b2")
        return y2.reshape(bk, s, d)

    def encoder(x, prefix):
        # PyTorch post-norm TransformerEncoderLayer (relu, eval mode).
        sa = mha(x, x, prefix + "attn_", add_residual=False)
        x = add_ln(x, sa, S(prefix + "ln1_g"), S(prefix + "ln1_b"))
        ff = ffn(x, prefix)
        return add_ln(x, ff, S(prefix + "ln2_g"), S(prefix + "ln2_b"))

    frame = frame_ref[...].astype(jnp.float32)           # (bk, sf, d)
    qa = qa_ref[...].astype(jnp.float32)                 # (bk, sq, d)

    qa = encoder(qa, "qa_enc_")
    frame = mha(frame, qa, "fq_", add_residual=True)      # frame + MHA(frame, qa, qa)
    frame = encoder(frame, "frame_enc_")
    qa = mha(qa, frame, "qf_", add_residual=True)          # qa + MHA(qa, frame, frame)

    frame_out_ref[...] = frame.astype(frame_out_ref.dtype)
    qa_out_ref[...] = qa.astype(qa_out_ref.dtype)


# ----------------------- wrapper: weight prep + pallas_call ------------------ #

def _prep_params(params, n_heads):
    """Pre-transpose / fuse / scale weights (bf16) and pack small params (f32)."""
    big_entries = []       # (name, bf16 matrix)
    small_entries = []     # (name, 1-D f32 vector)

    def add_attn(prefix, p):
        d = p["wq"].shape[0]
        hd = d // n_heads
        scale = 1.0 / math.sqrt(hd)
        big_entries.append((prefix + "wq",
                            (p["wq"].T * scale).astype(jnp.bfloat16)))
        big_entries.append((prefix + "wkv",
                            jnp.concatenate([p["wk"].T, p["wv"].T],
                                            axis=1).astype(jnp.bfloat16)))
        big_entries.append((prefix + "wo", p["wo"].T.astype(jnp.bfloat16)))
        small_entries.extend([
            (prefix + "bq", p["bq"].reshape(-1) * scale),
            (prefix + "bk", p["bk"].reshape(-1)),
            (prefix + "bv", p["bv"].reshape(-1)),
            (prefix + "bo", p["bo"].reshape(-1)),
        ])

    def add_encoder(prefix, p):
        add_attn(prefix + "attn_", p["attn"])
        big_entries.append((prefix + "w1T", p["w1"].T.astype(jnp.bfloat16)))
        big_entries.append((prefix + "w2T", p["w2"].T.astype(jnp.bfloat16)))
        small_entries.extend([
            (prefix + "b1", p["b1"].reshape(-1)),
            (prefix + "b2", p["b2"].reshape(-1)),
            (prefix + "ln1_g", p["ln1_g"].reshape(-1)),
            (prefix + "ln1_b", p["ln1_b"].reshape(-1)),
            (prefix + "ln2_g", p["ln2_g"].reshape(-1)),
            (prefix + "ln2_b", p["ln2_b"].reshape(-1)),
        ])

    add_encoder("qa_enc_", params["qa_encoder"])
    add_encoder("frame_enc_", params["frame_encoder"])
    add_attn("fq_", params["frame_qa_cond"])
    add_attn("qf_", params["qa_frame_cond"])

    width = max(128, max(int(v.shape[0]) for _, v in small_entries))
    small_layout = {}
    small_rows = []
    for i, (name, v) in enumerate(small_entries):
        w = int(v.shape[0])
        small_layout[name] = (i, w)
        small_rows.append(jnp.pad(v.astype(jnp.float32), (0, width - w)))
    small_packed = jnp.stack(small_rows, axis=0)          # (n_rows, width) f32

    big_layout = {name: i for i, (name, _) in enumerate(big_entries)}
    big_arrays = [a for _, a in big_entries]
    return big_layout, big_arrays, small_layout, small_packed


@functools.partial(jax.jit, static_argnames=("n_heads",))
def frame_qa_reason_forward(frame_inputs, qa_inputs, params, *, n_heads):
    b, sf, d = frame_inputs.shape
    _, sq, _ = qa_inputs.shape
    big_layout, big_arrays, small_layout, small_packed = _prep_params(params, n_heads)

    # >=2 grid steps (keeps both v7x cores busy); fold the rest of the batch
    # into the per-step block so projection/FFN matmuls get M = block_b * seq.
    block_b = b // 2 if (b >= 2 and b % 2 == 0) else 1
    grid_b = b // block_b

    kernel = functools.partial(_fused_kernel, big_layout=big_layout,
                               small_layout=small_layout, n_heads=n_heads)

    def act_spec(s):
        return pl.BlockSpec((block_b, s, d), lambda i: (i, 0, 0))

    def const_spec(a):
        # Constant across the grid -> single-buffered replicated block.
        nd = a.ndim
        return pl.BlockSpec(a.shape, lambda i: (0,) * nd,
                            pipeline_mode=pl.Buffered(1))

    weight_bytes = sum(int(a.size) * a.dtype.itemsize for a in big_arrays)
    weight_bytes += int(small_packed.size) * small_packed.dtype.itemsize
    act_bytes = 4 * block_b * d * (sf + sq) * 2 * 2       # f32, in+out, dbl-buffered
    vmem_limit = int(min(48 * 2**20,
                         max(24 * 2**20, 4 * (weight_bytes + act_bytes))))

    return pl.pallas_call(
        kernel,
        out_shape=(jax.ShapeDtypeStruct((b, sf, d), frame_inputs.dtype),
                   jax.ShapeDtypeStruct((b, sq, d), qa_inputs.dtype)),
        grid=(grid_b,),
        in_specs=[act_spec(sf), act_spec(sq), const_spec(small_packed)]
                 + [const_spec(a) for a in big_arrays],
        out_specs=(act_spec(sf), act_spec(sq)),
        compiler_params=pltpu.CompilerParams(
            dimension_semantics=("parallel",),
            vmem_limit_bytes=vmem_limit),
    )(frame_inputs, qa_inputs, small_packed, *big_arrays)


# ------------------------- deterministic parameter init --------------------- #

def _round_bf16(w):
    # Weight matrices are stored in bf16 for the kernel; keep the "true" params
    # bf16-representable so the f32 reference uses identical values.
    return w.astype(jnp.bfloat16).astype(jnp.float32)


def _init_linear(key, out_dim, in_dim, scale=0.05):
    kw, kb = jax.random.split(key)
    w = _round_bf16(scale * jax.random.normal(kw, (out_dim, in_dim), jnp.float32))
    b = scale * jax.random.normal(kb, (1, out_dim), jnp.float32)
    return w, b


def make_attn_params(key, d_model):
    ks = jax.random.split(key, 4)
    wq, bq = _init_linear(ks[0], d_model, d_model)
    wk, bk = _init_linear(ks[1], d_model, d_model)
    wv, bv = _init_linear(ks[2], d_model, d_model)
    wo, bo = _init_linear(ks[3], d_model, d_model)
    return dict(wq=wq, wk=wk, wv=wv, bq=bq, bk=bk, bv=bv, wo=wo, bo=bo)


def make_encoder_params(key, d_model, d_ff):
    ks = jax.random.split(key, 7)
    attn = make_attn_params(ks[0], d_model)
    w1, b1 = _init_linear(ks[1], d_ff, d_model)
    w2, b2 = _init_linear(ks[2], d_model, d_ff)
    ln1_g = 1.0 + 0.05 * jax.random.normal(ks[3], (1, d_model), jnp.float32)
    ln1_b = 0.05 * jax.random.normal(ks[4], (1, d_model), jnp.float32)
    ln2_g = 1.0 + 0.05 * jax.random.normal(ks[5], (1, d_model), jnp.float32)
    ln2_b = 0.05 * jax.random.normal(ks[6], (1, d_model), jnp.float32)
    return dict(attn=attn, w1=w1, b1=b1, w2=w2, b2=b2,
                ln1_g=ln1_g, ln1_b=ln1_b, ln2_g=ln2_g, ln2_b=ln2_b)


# ------------------------------ pure-JAX reference -------------------------- #

def _mha_ref(q, kv, p, n_heads, add_residual):
    b, sq, d = q.shape
    sk = kv.shape[1]
    hd = d // n_heads
    qp = q @ p["wq"].T + p["bq"][0]
    kp = kv @ p["wk"].T + p["bk"][0]
    vp = kv @ p["wv"].T + p["bv"][0]
    qh = qp.reshape(b, sq, n_heads, hd).transpose(0, 2, 1, 3)
    kh = kp.reshape(b, sk, n_heads, hd).transpose(0, 2, 1, 3)
    vh = vp.reshape(b, sk, n_heads, hd).transpose(0, 2, 1, 3)
    s = jnp.einsum("bhqd,bhkd->bhqk", qh, kh) / math.sqrt(hd)
    a = jax.nn.softmax(s, axis=-1)
    o = jnp.einsum("bhqk,bhkd->bhqd", a, vh).transpose(0, 2, 1, 3).reshape(b, sq, d)
    o = o @ p["wo"].T + p["bo"][0]
    return o + q if add_residual else o


def _add_ln_ref(x, y, g, b):
    z = x + y
    mu = z.mean(-1, keepdims=True)
    var = ((z - mu) ** 2).mean(-1, keepdims=True)
    return (z - mu) / jnp.sqrt(var + 1e-5) * g[0] + b[0]


def _encoder_ref(x, p, n_heads):
    sa = _mha_ref(x, x, p["attn"], n_heads, False)
    x = _add_ln_ref(x, sa, p["ln1_g"], p["ln1_b"])
    h = jnp.maximum(x @ p["w1"].T + p["b1"][0], 0.0)
    ff = h @ p["w2"].T + p["b2"][0]
    return _add_ln_ref(x, ff, p["ln2_g"], p["ln2_b"])


def _forward_ref(frame, qa, params, n_heads):
    qa = _encoder_ref(qa, params["qa_encoder"], n_heads)
    frame = _mha_ref(frame, qa, params["frame_qa_cond"], n_heads, True)
    frame = _encoder_ref(frame, params["frame_encoder"], n_heads)
    qa = _mha_ref(qa, frame, params["qa_frame_cond"], n_heads, True)
    return frame, qa


# ----------------------------------- main ----------------------------------- #

if __name__ == "__main__":
    # Small shapes consistent with the module (scaled down from d_model=512 etc.)
    B, S_FRAMES, S_QA, D_MODEL, N_HEADS, D_FF = 2, 16, 8, 128, 4, 128

    key = jax.random.PRNGKey(0)
    k_frame, k_qa, k_params = jax.random.split(key, 3)
    frame_inputs = jax.random.normal(k_frame, (B, S_FRAMES, D_MODEL), jnp.float32)
    qa_inputs = jax.random.normal(k_qa, (B, S_QA, D_MODEL), jnp.float32)

    kp = jax.random.split(k_params, 4)
    params = dict(
        qa_encoder=make_encoder_params(kp[0], D_MODEL, D_FF),
        frame_encoder=make_encoder_params(kp[1], D_MODEL, D_FF),
        frame_qa_cond=make_attn_params(kp[2], D_MODEL),
        qa_frame_cond=make_attn_params(kp[3], D_MODEL),
    )

    frame_out, qa_out = frame_qa_reason_forward(frame_inputs, qa_inputs, params,
                                                n_heads=N_HEADS)
    jax.block_until_ready((frame_out, qa_out))

    # sanity / correctness check against a pure-JAX reference
    with jax.default_matmul_precision("highest"):
        frame_ref, qa_ref = _forward_ref(frame_inputs, qa_inputs, params, N_HEADS)
    ok = (
        bool(jnp.all(jnp.isfinite(frame_out))) and bool(jnp.all(jnp.isfinite(qa_out)))
        and bool(jnp.allclose(frame_out, frame_ref, atol=2e-2, rtol=2e-2))
        and bool(jnp.allclose(qa_out, qa_ref, atol=2e-2, rtol=2e-2))
    )
    assert ok, "Pallas output does not match the JAX reference"
    print("KERNEL_OK")
</pallas_src>

<mosaic_0001>
module attributes {stable_mosaic.version = 11 : i64} {
  func.func @_fused_kernel(%arg0: i32, %arg1: memref<1x16x128xf32, #tpu.memory_space<vmem>>, %arg2: memref<1x8x128xf32, #tpu.memory_space<vmem>>, %arg3: memref<28x128xf32, #tpu.memory_space<vmem>>, %arg4: memref<128x128xbf16, #tpu.memory_space<vmem>>, %arg5: memref<128x256xbf16, #tpu.memory_space<vmem>>, %arg6: memref<128x128xbf16, #tpu.memory_space<vmem>>, %arg7: memref<128x128xbf16, #tpu.memory_space<vmem>>, %arg8: memref<128x128xbf16, #tpu.memory_space<vmem>>, %arg9: memref<128x128xbf16, #tpu.memory_space<vmem>>, %arg10: memref<128x256xbf16, #tpu.memory_space<vmem>>, %arg11: memref<128x128xbf16, #tpu.memory_space<vmem>>, %arg12: memref<128x128xbf16, #tpu.memory_space<vmem>>, %arg13: memref<128x128xbf16, #tpu.memory_space<vmem>>, %arg14: memref<128x128xbf16, #tpu.memory_space<vmem>>, %arg15: memref<128x256xbf16, #tpu.memory_space<vmem>>, %arg16: memref<128x128xbf16, #tpu.memory_space<vmem>>, %arg17: memref<128x128xbf16, #tpu.memory_space<vmem>>, %arg18: memref<128x256xbf16, #tpu.memory_space<vmem>>, %arg19: memref<128x128xbf16, #tpu.memory_space<vmem>>, %arg20: memref<1x16x128xf32, #tpu.memory_space<vmem>>, %arg21: memref<1x8x128xf32, #tpu.memory_space<vmem>>) attributes {dimension_semantics = [#tpu.dimension_semantics<parallel>], iteration_bounds = array<i64: 2>, scalar_prefetch = 0 : i64, scratch_operands = 0 : i64, tpu.core_type = #tpu.core_type<tc>, window_params = [{transform_indices = @transform_0, window_bounds = array<i64: 1, 16, 128>}, {transform_indices = @transform_1, window_bounds = array<i64: 1, 8, 128>}, {pipeline_mode = #tpu.pipeline_mode<synchronous>, transform_indices = @transform_2, window_bounds = array<i64: 28, 128>}, {pipeline_mode = #tpu.pipeline_mode<synchronous>, transform_indices = @transform_3, window_bounds = array<i64: 128, 128>}, {pipeline_mode = #tpu.pipeline_mode<synchronous>, transform_indices = @transform_4, window_bounds = array<i64: 128, 256>}, {pipeline_mode = #tpu.pipeline_mode<synchronous>, transform_indices = @transform_5, window_bounds = array<i64: 128, 128>}, {pipeline_mode = #tpu.pipeline_mode<synchronous>, transform_indices = @transform_6, window_bounds = array<i64: 128, 128>}, {pipeline_mode = #tpu.pipeline_mode<synchronous>, transform_indices = @transform_7, window_bounds = array<i64: 128, 128>}, {pipeline_mode = #tpu.pipeline_mode<synchronous>, transform_indices = @transform_8, window_bounds = array<i64: 128, 128>}, {pipeline_mode = #tpu.pipeline_mode<synchronous>, transform_indices = @transform_9, window_bounds = array<i64: 128, 256>}, {pipeline_mode = #tpu.pipeline_mode<synchronous>, transform_indices = @transform_10, window_bounds = array<i64: 128, 128>}, {pipeline_mode = #tpu.pipeline_mode<synchronous>, transform_indices = @transform_11, window_bounds = array<i64: 128, 128>}, {pipeline_mode = #tpu.pipeline_mode<synchronous>, transform_indices = @transform_12, window_bounds = array<i64: 128, 128>}, {pipeline_mode = #tpu.pipeline_mode<synchronous>, transform_indices = @transform_13, window_bounds = array<i64: 128, 128>}, {pipeline_mode = #tpu.pipeline_mode<synchronous>, transform_indices = @transform_14, window_bounds = array<i64: 128, 256>}, {pipeline_mode = #tpu.pipeline_mode<synchronous>, transform_indices = @transform_15, window_bounds = array<i64: 128, 128>}, {pipeline_mode = #tpu.pipeline_mode<synchronous>, transform_indices = @transform_16, window_bounds = array<i64: 128, 128>}, {pipeline_mode = #tpu.pipeline_mode<synchronous>, transform_indices = @transform_17, window_bounds = array<i64: 128, 256>}, {pipeline_mode = #tpu.pipeline_mode<synchronous>, transform_indices = @transform_18, window_bounds = array<i64: 128, 128>}, {transform_indices = @transform_19, window_bounds = array<i64: 1, 16, 128>}, {transform_indices = @transform_20, window_bounds = array<i64: 1, 8, 128>}]} {
    %c0 = arith.constant 0 : index
    %c0_0 = arith.constant 0 : index
    %c0_1 = arith.constant 0 : index
    %0 = vector.load %arg1[%c0, %c0_0, %c0_1] : memref<1x16x128xf32, #tpu.memory_space<vmem>>, vector<1x16x128xf32>
    %c0_2 = arith.constant 0 : index
    %c0_3 = arith.constant 0 : index
    %c0_4 = arith.constant 0 : index
    %1 = vector.load %arg2[%c0_2, %c0_3, %c0_4] : memref<1x8x128xf32, #tpu.memory_space<vmem>>, vector<1x8x128xf32>
    %2 = vector.shape_cast %1 : vector<1x8x128xf32> to vector<8x128xf32>
    %3 = arith.truncf %2 : vector<8x128xf32> to vector<8x128xbf16>
    %4 = vector.shape_cast %1 : vector<1x8x128xf32> to vector<8x128xf32>
    %5 = arith.truncf %4 : vector<8x128xf32> to vector<8x128xbf16>
    %c0_5 = arith.constant 0 : index
    %c0_6 = arith.constant 0 : index
    %6 = vector.load %arg4[%c0_5, %c0_6] : memref<128x128xbf16, #tpu.memory_space<vmem>>, vector<128x128xbf16>
    %cst = arith.constant dense<0.000000e+00> : vector<8x128xf32>
    %7 = tpu.matmul %3, %6, %cst {dimension_numbers = #tpu.dot_dimension_numbers<[1], [0], [0], [1], [0, 0, 1, 1], [], []>} : vector<8x128xbf16>, vector<128x128xbf16>, vector<8x128xf32> -> vector<8x128xf32>
    %c0_7 = arith.constant 0 : index
    %c0_8 = arith.constant 0 : index
    %8 = vector.load %arg3[%c0_7, %c0_8] : memref<28x128xf32, #tpu.memory_space<vmem>>, vector<1x128xf32>
    %9 = vector.broadcast %8 : vector<1x128xf32> to vector<8x128xf32>
    %10 = arith.addf %7, %9 : vector<8x128xf32>
    %c0_9 = arith.constant 0 : index
    %c0_10 = arith.constant 0 : index
    %11 = vector.load %arg5[%c0_9, %c0_10] : memref<128x256xbf16, #tpu.memory_space<vmem>>, vector<128x256xbf16>
    %cst_11 = arith.constant dense<0.000000e+00> : vector<8x256xf32>
    %12 = tpu.matmul %5, %11, %cst_11 {dimension_numbers = #tpu.dot_dimension_numbers<[1], [0], [0], [1], [0, 0, 1, 1], [], []>} : vector<8x128xbf16>, vector<128x256xbf16>, vector<8x256xf32> -> vector<8x256xf32>
    %13 = vector.extract_strided_slice %12 {offsets = [0, 0], sizes = [8, 128], strides = [1, 1]} : vector<8x256xf32> to vector<8x128xf32>
    %c1 = arith.constant 1 : index
    %c0_12 = arith.constant 0 : index
    %14 = vector.load %arg3[%c1, %c0_12] : memref<28x128xf32, #tpu.memory_space<vmem>>, vector<1x128xf32>
    %15 = vector.broadcast %14 : vector<1x128xf32> to vector<8x128xf32>
    %16 = arith.addf %13, %15 : vector<8x128xf32>
    %17 = vector.extract_strided_slice %12 {offsets = [0, 128], sizes = [8, 128], strides = [1, 1]} : vector<8x256xf32> to vector<8x128xf32>
    %c2 = arith.constant 2 : index
    %c0_13 = arith.constant 0 : index
    %18 = vector.load %arg3[%c2, %c0_13] : memref<28x128xf32, #tpu.memory_space<vmem>>, vector<1x128xf32>
    %19 = vector.broadcast %18 : vector<1x128xf32> to vector<8x128xf32>
    %20 = arith.addf %17, %19 : vector<8x128xf32>
    %21 = vector.shape_cast %10 : vector<8x128xf32> to vector<1x8x128xf32>
    %22 = arith.truncf %21 : vector<1x8x128xf32> to vector<1x8x128xbf16>
    %23 = vector.shape_cast %16 : vector<8x128xf32> to vector<1x8x128xf32>
    %24 = arith.truncf %23 : vector<1x8x128xf32> to vector<1x8x128xbf16>
    %25 = vector.shape_cast %20 : vector<8x128xf32> to vector<1x8x128xf32>
    %26 = arith.truncf %25 : vector<1x8x128xf32> to vector<1x8x128xbf16>
    %27 = vector.extract_strided_slice %22 {offsets = [0, 0, 0], sizes = [1, 8, 32], strides = [1, 1, 1]} : vector<1x8x128xbf16> to vector<1x8x32xbf16>
    %28 = vector.extract_strided_slice %24 {offsets = [0, 0, 0], sizes = [1, 8, 32], strides = [1, 1, 1]} : vector<1x8x128xbf16> to vector<1x8x32xbf16>
    "tpu.trace_start"() <{level = 10 : i32, message = "bqe,bke->bqk"}> : () -> ()
    %cst_14 = arith.constant dense<0.000000e+00> : vector<1x8x8xf32>
    %29 = tpu.matmul %27, %28, %cst_14 {dimension_numbers = #tpu.dot_dimension_numbers<[2], [2], [1], [1], [0, 0, 0, 1, 1, 1], [0], [0]>} : vector<1x8x32xbf16>, vector<1x8x32xbf16>, vector<1x8x8xf32> -> vector<1x8x8xf32>
    "tpu.trace_stop"() : () -> ()
    %cst_15 = arith.constant dense<0xFF800000> : vector<1x8xf32>
    %30 = vector.multi_reduction <maximumf>, %29, %cst_15 [2] : vector<1x8x8xf32> to vector<1x8xf32>
    %31 = vector.shape_cast %30 : vector<1x8xf32> to vector<1x8x1xf32>
    %32 = vector.broadcast %31 : vector<1x8x1xf32> to vector<1x8x8xf32>
    %33 = arith.subf %29, %32 : vector<1x8x8xf32>
    %34 = math.exp %33 : vector<1x8x8xf32>
    %cst_16 = arith.constant dense<0.000000e+00> : vector<1x8xf32>
    %35 = vector.multi_reduction <add>, %34, %cst_16 [2] : vector<1x8x8xf32> to vector<1x8xf32>
    %36 = vector.shape_cast %35 : vector<1x8xf32> to vector<1x8x1xf32>
    %37 = vector.broadcast %36 : vector<1x8x1xf32> to vector<1x8x8xf32>
    %38 = arith.divf %34, %37 : vector<1x8x8xf32>
    %39 = arith.truncf %38 : vector<1x8x8xf32> to vector<1x8x8xbf16>
    %40 = vector.extract_strided_slice %26 {offsets = [0, 0, 0], sizes = [1, 8, 32], strides = [1, 1, 1]} : vector<1x8x128xbf16> to vector<1x8x32xbf16>
    "tpu.trace_start"() <{level = 10 : i32, message = "bqk,bke->bqe"}> : () -> ()
    %cst_17 = arith.constant dense<0.000000e+00> : vector<1x8x32xf32>
    %41 = tpu.matmul %39, %40, %cst_17 {dimension_numbers = #tpu.dot_dimension_numbers<[2], [1], [1], [2], [0, 0, 0, 1, 1, 2], [0], [0]>} : vector<1x8x8xbf16>, vector<1x8x32xbf16>, vector<1x8x32xf32> -> vector<1x8x32xf32>
    "tpu.trace_stop"() : () -> ()
    %42 = vector.extract_strided_slice %22 {offsets = [0, 0, 32], sizes = [1, 8, 32], strides = [1, 1, 1]} : vector<1x8x128xbf16> to vector<1x8x32xbf16>
    %43 = vector.extract_strided_slice %24 {offsets = [0, 0, 32], sizes = [1, 8, 32], strides = [1, 1, 1]} : vector<1x8x128xbf16> to vector<1x8x32xbf16>
    "tpu.trace_start"() <{level = 10 : i32, message = "bqe,bke->bqk"}> : () -> ()
    %cst_18 = arith.constant dense<0.000000e+00> : vector<1x8x8xf32>
    %44 = tpu.matmul %42, %43, %cst_18 {dimension_numbers = #tpu.dot_dimension_numbers<[2], [2], [1], [1], [0, 0, 0, 1, 1, 1], [0], [0]>} : vector<1x8x32xbf16>, vector<1x8x32xbf16>, vector<1x8x8xf32> -> vector<1x8x8xf32>
    "tpu.trace_stop"() : () -> ()
    %cst_19 = arith.constant dense<0xFF800000> : vector<1x8xf32>
    %45 = vector.multi_reduction <maximumf>, %44, %cst_19 [2] : vector<1x8x8xf32> to vector<1x8xf32>
    %46 = vector.shape_cast %45 : vector<1x8xf32> to vector<1x8x1xf32>
    %47 = vector.broadcast %46 : vector<1x8x1xf32> to vector<1x8x8xf32>
    %48 = arith.subf %44, %47 : vector<1x8x8xf32>
    %49 = math.exp %48 : vector<1x8x8xf32>
    %cst_20 = arith.constant dense<0.000000e+00> : vector<1x8xf32>
    %50 = vector.multi_reduction <add>, %49, %cst_20 [2] : vector<1x8x8xf32> to vector<1x8xf32>
    %51 = vector.shape_cast %50 : vector<1x8xf32> to vector<1x8x1xf32>
    %52 = vector.broadcast %51 : vector<1x8x1xf32> to vector<1x8x8xf32>
    %53 = arith.divf %49, %52 : vector<1x8x8xf32>
    %54 = arith.truncf %53 : vector<1x8x8xf32> to vector<1x8x8xbf16>
    %55 = vector.extract_strided_slice %26 {offsets = [0, 0, 32], sizes = [1, 8, 32], strides = [1, 1, 1]} : vector<1x8x128xbf16> to vector<1x8x32xbf16>
    "tpu.trace_start"() <{level = 10 : i32, message = "bqk,bke->bqe"}> : () -> ()
    %cst_21 = arith.constant dense<0.000000e+00> : vector<1x8x32xf32>
    %56 = tpu.matmul %54, %55, %cst_21 {dimension_numbers = #tpu.dot_dimension_numbers<[2], [1], [1], [2], [0, 0, 0, 1, 1, 2], [0], [0]>} : vector<1x8x8xbf16>, vector<1x8x32xbf16>, vector<1x8x32xf32> -> vector<1x8x32xf32>
    "tpu.trace_stop"() : () -> ()
    %57 = vector.extract_strided_slice %22 {offsets = [0, 0, 64], sizes = [1, 8, 32], strides = [1, 1, 1]} : vector<1x8x128xbf16> to vector<1x8x32xbf16>
    %58 = vector.extract_strided_slice %24 {offsets = [0, 0, 64], sizes = [1, 8, 32], strides = [1, 1, 1]} : vector<1x8x128xbf16> to vector<1x8x32xbf16>
    "tpu.trace_start"() <{level = 10 : i32, message = "bqe,bke->bqk"}> : () -> ()
    %cst_22 = arith.constant dense<0.000000e+00> : vector<1x8x8xf32>
    %59 = tpu.matmul %57, %58, %cst_22 {dimension_numbers = #tpu.dot_dimension_numbers<[2], [2], [1], [1], [0, 0, 0, 1, 1, 1], [0], [0]>} : vector<1x8x32xbf16>, vector<1x8x32xbf16>, vector<1x8x8xf32> -> vector<1x8x8xf32>
    "tpu.trace_stop"() : () -> ()
    %cst_23 = arith.constant dense<0xFF800000> : vector<1x8xf32>
    %60 = vector.multi_reduction <maximumf>, %59, %cst_23 [2] : vector<1x8x8xf32> to vector<1x8xf32>
    %61 = vector.shape_cast %60 : vector<1x8xf32> to vector<1x8x1xf32>
    %62 = vector.broadcast %61 : vector<1x8x1xf32> to vector<1x8x8xf32>
    %63 = arith.subf %59, %62 : vector<1x8x8xf32>
    %64 = math.exp %63 : vector<1x8x8xf32>
    %cst_24 = arith.constant dense<0.000000e+00> : vector<1x8xf32>
    %65 = vector.multi_reduction <add>, %64, %cst_24 [2] : vector<1x8x8xf32> to vector<1x8xf32>
    %66 = vector.shape_cast %65 : vector<1x8xf32> to vector<1x8x1xf32>
    %67 = vector.broadcast %66 : vector<1x8x1xf32> to vector<1x8x8xf32>
    %68 = arith.divf %64, %67 : vector<1x8x8xf32>
    %69 = arith.truncf %68 : vector<1x8x8xf32> to vector<1x8x8xbf16>
    %70 = vector.extract_strided_slice %26 {offsets = [0, 0, 64], sizes = [1, 8, 32], strides = [1, 1, 1]} : vector<1x8x128xbf16> to vector<1x8x32xbf16>
    "tpu.trace_start"() <{level = 10 : i32, message = "bqk,bke->bqe"}> : () -> ()
    %cst_25 = arith.constant dense<0.000000e+00> : vector<1x8x32xf32>
    %71 = tpu.matmul %69, %70, %cst_25 {dimension_numbers = #tpu.dot_dimension_numbers<[2], [1], [1], [2], [0, 0, 0, 1, 1, 2], [0], [0]>} : vector<1x8x8xbf16>, vector<1x8x32xbf16>, vector<1x8x32xf32> -> vector<1x8x32xf32>
    "tpu.trace_stop"() : () -> ()
    %72 = vector.extract_strided_slice %22 {offsets = [0, 0, 96], sizes = [1, 8, 32], strides = [1, 1, 1]} : vector<1x8x128xbf16> to vector<1x8x32xbf16>
    %73 = vector.extract_strided_slice %24 {offsets = [0, 0, 96], sizes = [1, 8, 32], strides = [1, 1, 1]} : vector<1x8x128xbf16> to vector<1x8x32xbf16>
    "tpu.trace_start"() <{level = 10 : i32, message = "bqe,bke->bqk"}> : () -> ()
    %cst_26 = arith.constant dense<0.000000e+00> : vector<1x8x8xf32>
    %74 = tpu.matmul %72, %73, %cst_26 {dimension_numbers = #tpu.dot_dimension_numbers<[2], [2], [1], [1], [0, 0, 0, 1, 1, 1], [0], [0]>} : vector<1x8x32xbf16>, vector<1x8x32xbf16>, vector<1x8x8xf32> -> vector<1x8x8xf32>
    "tpu.trace_stop"() : () -> ()
    %cst_27 = arith.constant dense<0xFF800000> : vector<1x8xf32>
    %75 = vector.multi_reduction <maximumf>, %74, %cst_27 [2] : vector<1x8x8xf32> to vector<1x8xf32>
    %76 = vector.shape_cast %75 : vector<1x8xf32> to vector<1x8x1xf32>
    %77 = vector.broadcast %76 : vector<1x8x1xf32> to vector<1x8x8xf32>
    %78 = arith.subf %74, %77 : vector<1x8x8xf32>
    %79 = math.exp %78 : vector<1x8x8xf32>
    %cst_28 = arith.constant dense<0.000000e+00> : vector<1x8xf32>
    %80 = vector.multi_reduction <add>, %79, %cst_28 [2] : vector<1x8x8xf32> to vector<1x8xf32>
    %81 = vector.shape_cast %80 : vector<1x8xf32> to vector<1x8x1xf32>
    %82 = vector.broadcast %81 : vector<1x8x1xf32> to vector<1x8x8xf32>
    %83 = arith.divf %79, %82 : vector<1x8x8xf32>
    %84 = arith.truncf %83 : vector<1x8x8xf32> to vector<1x8x8xbf16>
    %85 = vector.extract_strided_slice %26 {offsets = [0, 0, 96], sizes = [1, 8, 32], strides = [1, 1, 1]} : vector<1x8x128xbf16> to vector<1x8x32xbf16>
    "tpu.trace_start"() <{level = 10 : i32, message = "bqk,bke->bqe"}> : () -> ()
    %cst_29 = arith.constant dense<0.000000e+00> : vector<1x8x32xf32>
    %86 = tpu.matmul %84, %85, %cst_29 {dimension_numbers = #tpu.dot_dimension_numbers<[2], [1], [1], [2], [0, 0, 0, 1, 1, 2], [0], [0]>} : vector<1x8x8xbf16>, vector<1x8x32xbf16>, vector<1x8x32xf32> -> vector<1x8x32xf32>
    "tpu.trace_stop"() : () -> ()
    %87 = tpu.concatenate %41, %56, %71, %86 in 2 : vector<1x8x32xf32>, vector<1x8x32xf32>, vector<1x8x32xf32>, vector<1x8x32xf32> -> vector<1x8x128xf32>
    %88 = vector.shape_cast %87 : vector<1x8x128xf32> to vector<8x128xf32>
    %89 = arith.truncf %88 : vector<8x128xf32> to vector<8x128xbf16>
    %c0_30 = arith.constant 0 : index
    %c0_31 = arith.constant 0 : index
    %90 = vector.load %arg6[%c0_30, %c0_31] : memref<128x128xbf16, #tpu.memory_space<vmem>>, vector<128x128xbf16>
    %cst_32 = arith.constant dense<0.000000e+00> : vector<8x128xf32>
    %91 = tpu.matmul %89, %90, %cst_32 {dimension_numbers = #tpu.dot_dimension_numbers<[1], [0], [0], [1], [0, 0, 1, 1], [], []>} : vector<8x128xbf16>, vector<128x128xbf16>, vector<8x128xf32> -> vector<8x128xf32>
    %c3 = arith.constant 3 : index
    %c0_33 = arith.constant 0 : index
    %92 = vector.load %arg3[%c3, %c0_33] : memref<28x128xf32, #tpu.memory_space<vmem>>, vector<1x128xf32>
    %93 = vector.broadcast %92 : vector<1x128xf32> to vector<8x128xf32>
    %94 = arith.addf %91, %93 : vector<8x128xf32>
    %95 = vector.shape_cast %94 : vector<8x128xf32> to vector<1x8x128xf32>
    %c6 = arith.constant 6 : index
    %c0_34 = arith.constant 0 : index
    %96 = vector.load %arg3[%c6, %c0_34] : memref<28x128xf32, #tpu.memory_space<vmem>>, vector<1x128xf32>
    %c7 = arith.constant 7 : index
    %c0_35 = arith.constant 0 : index
    %97 = vector.load %arg3[%c7, %c0_35] : memref<28x128xf32, #tpu.memory_space<vmem>>, vector<1x128xf32>
    %98 = arith.addf %1, %95 : vector<1x8x128xf32>
    %cst_36 = arith.constant dense<0.000000e+00> : vector<1x8xf32>
    %99 = vector.multi_reduction <add>, %98, %cst_36 [2] : vector<1x8x128xf32> to vector<1x8xf32>
    %100 = vector.shape_cast %99 : vector<1x8xf32> to vector<1x8x1xf32>
    %cst_37 = arith.constant 1.280000e+02 : f32
    %101 = vector.broadcast %cst_37 : f32 to vector<1x8x1xf32>
    %102 = arith.divf %100, %101 : vector<1x8x1xf32>
    %103 = vector.broadcast %102 : vector<1x8x1xf32> to vector<1x8x128xf32>
    %104 = arith.subf %98, %103 : vector<1x8x128xf32>
    %105 = arith.mulf %104, %104 : vector<1x8x128xf32>
    %cst_38 = arith.constant dense<0.000000e+00> : vector<1x8xf32>
    %106 = vector.multi_reduction <add>, %105, %cst_38 [2] : vector<1x8x128xf32> to vector<1x8xf32>
    %107 = vector.shape_cast %106 : vector<1x8xf32> to vector<1x8x1xf32>
    %cst_39 = arith.constant 1.280000e+02 : f32
    %108 = vector.broadcast %cst_39 : f32 to vector<1x8x1xf32>
    %109 = arith.divf %107, %108 : vector<1x8x1xf32>
    %cst_40 = arith.constant 9.99999974E-6 : f32
    %110 = vector.broadcast %cst_40 : f32 to vector<1x8x1xf32>
    %111 = arith.addf %109, %110 : vector<1x8x1xf32>
    %112 = math.rsqrt %111 : vector<1x8x1xf32>
    %113 = vector.broadcast %112 : vector<1x8x1xf32> to vector<1x8x128xf32>
    %114 = arith.mulf %104, %113 : vector<1x8x128xf32>
    %115 = vector.shape_cast %96 : vector<1x128xf32> to vector<1x1x128xf32>
    %116 = vector.broadcast %115 : vector<1x1x128xf32> to vector<1x8x128xf32>
    %117 = arith.mulf %114, %116 : vector<1x8x128xf32>
    %118 = vector.shape_cast %97 : vector<1x128xf32> to vector<1x1x128xf32>
    %119 = vector.broadcast %118 : vector<1x1x128xf32> to vector<1x8x128xf32>
    %120 = arith.addf %117, %119 : vector<1x8x128xf32>
    %121 = vector.shape_cast %120 : vector<1x8x128xf32> to vector<8x128xf32>
    %122 = arith.truncf %121 : vector<8x128xf32> to vector<8x128xbf16>
    %c0_41 = arith.constant 0 : index
    %c0_42 = arith.constant 0 : index
    %123 = vector.load %arg7[%c0_41, %c0_42] : memref<128x128xbf16, #tpu.memory_space<vmem>>, vector<128x128xbf16>
    %cst_43 = arith.constant dense<0.000000e+00> : vector<8x128xf32>
    %124 = tpu.matmul %122, %123, %cst_43 {dimension_numbers = #tpu.dot_dimension_numbers<[1], [0], [0], [1], [0, 0, 1, 1], [], []>} : vector<8x128xbf16>, vector<128x128xbf16>, vector<8x128xf32> -> vector<8x128xf32>
    %c4 = arith.constant 4 : index
    %c0_44 = arith.constant 0 : index
    %125 = vector.load %arg3[%c4, %c0_44] : memref<28x128xf32, #tpu.memory_space<vmem>>, vector<1x128xf32>
    %126 = vector.broadcast %125 : vector<1x128xf32> to vector<8x128xf32>
    %127 = arith.addf %124, %126 : vector<8x128xf32>
    %cst_45 = arith.constant 0.000000e+00 : f32
    %128 = vector.broadcast %cst_45 : f32 to vector<8x128xf32>
    %129 = arith.maximumf %127, %128 : vector<8x128xf32>
    %130 = arith.truncf %129 : vector<8x128xf32> to vector<8x128xbf16>
    %c0_46 = arith.constant 0 : index
    %c0_47 = arith.constant 0 : index
    %131 = vector.load %arg8[%c0_46, %c0_47] : memref<128x128xbf16, #tpu.memory_space<vmem>>, vector<128x128xbf16>
    %cst_48 = arith.constant dense<0.000000e+00> : vector<8x128xf32>
    %132 = tpu.matmul %130, %131, %cst_48 {dimension_numbers = #tpu.dot_dimension_numbers<[1], [0], [0], [1], [0, 0, 1, 1], [], []>} : vector<8x128xbf16>, vector<128x128xbf16>, vector<8x128xf32> -> vector<8x128xf32>
    %c5 = arith.constant 5 : index
    %c0_49 = arith.constant 0 : index
    %133 = vector.load %arg3[%c5, %c0_49] : memref<28x128xf32, #tpu.memory_space<vmem>>, vector<1x128xf32>
    %134 = vector.broadcast %133 : vector<1x128xf32> to vector<8x128xf32>
    %135 = arith.addf %132, %134 : vector<8x128xf32>
    %136 = vector.shape_cast %135 : vector<8x128xf32> to vector<1x8x128xf32>
    %c8 = arith.constant 8 : index
    %c0_50 = arith.constant 0 : index
    %137 = vector.load %arg3[%c8, %c0_50] : memref<28x128xf32, #tpu.memory_space<vmem>>, vector<1x128xf32>
    %c9 = arith.constant 9 : index
    %c0_51 = arith.constant 0 : index
    %138 = vector.load %arg3[%c9, %c0_51] : memref<28x128xf32, #tpu.memory_space<vmem>>, vector<1x128xf32>
    %139 = arith.addf %120, %136 : vector<1x8x128xf32>
    %cst_52 = arith.constant dense<0.000000e+00> : vector<1x8xf32>
    %140 = vector.multi_reduction <add>, %139, %cst_52 [2] : vector<1x8x128xf32> to vector<1x8xf32>
    %141 = vector.shape_cast %140 : vector<1x8xf32> to vector<1x8x1xf32>
    %cst_53 = arith.constant 1.280000e+02 : f32
    %142 = vector.broadcast %cst_53 : f32 to vector<1x8x1xf32>
    %143 = arith.divf %141, %142 : vector<1x8x1xf32>
    %144 = vector.broadcast %143 : vector<1x8x1xf32> to vector<1x8x128xf32>
    %145 = arith.subf %139, %144 : vector<1x8x128xf32>
    %146 = arith.mulf %145, %145 : vector<1x8x128xf32>
    %cst_54 = arith.constant dense<0.000000e+00> : vector<1x8xf32>
    %147 = vector.multi_reduction <add>, %146, %cst_54 [2] : vector<1x8x128xf32> to vector<1x8xf32>
    %148 = vector.shape_cast %147 : vector<1x8xf32> to vector<1x8x1xf32>
    %cst_55 = arith.constant 1.280000e+02 : f32
    %149 = vector.broadcast %cst_55 : f32 to vector<1x8x1xf32>
    %150 = arith.divf %148, %149 : vector<1x8x1xf32>
    %cst_56 = arith.constant 9.99999974E-6 : f32
    %151 = vector.broadcast %cst_56 : f32 to vector<1x8x1xf32>
    %152 = arith.addf %150, %151 : vector<1x8x1xf32>
    %153 = math.rsqrt %152 : vector<1x8x1xf32>
    %154 = vector.broadcast %153 : vector<1x8x1xf32> to vector<1x8x128xf32>
    %155 = arith.mulf %145, %154 : vector<1x8x128xf32>
    %156 = vector.shape_cast %137 : vector<1x128xf32> to vector<1x1x128xf32>
    %157 = vector.broadcast %156 : vector<1x1x128xf32> to vector<1x8x128xf32>
    %158 = arith.mulf %155, %157 : vector<1x8x128xf32>
    %159 = vector.shape_cast %138 : vector<1x128xf32> to vector<1x1x128xf32>
    %160 = vector.broadcast %159 : vector<1x1x128xf32> to vector<1x8x128xf32>
    %161 = arith.addf %158, %160 : vector<1x8x128xf32>
    %162 = vector.shape_cast %0 : vector<1x16x128xf32> to vector<16x128xf32>
    %163 = arith.truncf %162 : vector<16x128xf32> to vector<16x128xbf16>
    %164 = vector.shape_cast %161 : vector<1x8x128xf32> to vector<8x128xf32>
    %165 = arith.truncf %164 : vector<8x128xf32> to vector<8x128xbf16>
    %c0_57 = arith.constant 0 : index
    %c0_58 = arith.constant 0 : index
    %166 = vector.load %arg14[%c0_57, %c0_58] : memref<128x128xbf16, #tpu.memory_space<vmem>>, vector<128x128xbf16>
    %cst_59 = arith.constant dense<0.000000e+00> : vector<16x128xf32>
    %167 = tpu.matmul %163, %166, %cst_59 {dimension_numbers = #tpu.dot_dimension_numbers<[1], [0], [0], [1], [0, 0, 1, 1], [], []>} : vector<16x128xbf16>, vector<128x128xbf16>, vector<16x128xf32> -> vector<16x128xf32>
    %c20 = arith.constant 20 : index
    %c0_60 = arith.constant 0 : index
    %168 = vector.load %arg3[%c20, %c0_60] : memref<28x128xf32, #tpu.memory_space<vmem>>, vector<1x128xf32>
    %169 = vector.broadcast %168 : vector<1x128xf32> to vector<16x128xf32>
    %170 = arith.addf %167, %169 : vector<16x128xf32>
    %c0_61 = arith.constant 0 : index
    %c0_62 = arith.constant 0 : index
    %171 = vector.load %arg15[%c0_61, %c0_62] : memref<128x256xbf16, #tpu.memory_space<vmem>>, vector<128x256xbf16>
    %cst_63 = arith.constant dense<0.000000e+00> : vector<8x256xf32>
    %172 = tpu.matmul %165, %171, %cst_63 {dimension_numbers = #tpu.dot_dimension_numbers<[1], [0], [0], [1], [0, 0, 1, 1], [], []>} : vector<8x128xbf16>, vector<128x256xbf16>, vector<8x256xf32> -> vector<8x256xf32>
    %173 = vector.extract_strided_slice %172 {offsets = [0, 0], sizes = [8, 128], strides = [1, 1]} : vector<8x256xf32> to vector<8x128xf32>
    %c21 = arith.constant 21 : index
    %c0_64 = arith.constant 0 : index
    %174 = vector.load %arg3[%c21, %c0_64] : memref<28x128xf32, #tpu.memory_space<vmem>>, vector<1x128xf32>
    %175 = vector.broadcast %174 : vector<1x128xf32> to vector<8x128xf32>
    %176 = arith.addf %173, %175 : vector<8x128xf32>
    %177 = vector.extract_strided_slice %172 {offsets = [0, 128], sizes = [8, 128], strides = [1, 1]} : vector<8x256xf32> to vector<8x128xf32>
    %c22 = arith.constant 22 : index
    %c0_65 = arith.constant 0 : index
    %178 = vector.load %arg3[%c22, %c0_65] : memref<28x128xf32, #tpu.memory_space<vmem>>, vector<1x128xf32>
    %179 = vector.broadcast %178 : vector<1x128xf32> to vector<8x128xf32>
    %180 = arith.addf %177, %179 : vector<8x128xf32>
    %181 = vector.shape_cast %170 : vector<16x128xf32> to vector<1x16x128xf32>
    %182 = arith.truncf %181 : vector<1x16x128xf32> to vector<1x16x128xbf16>
    %183 = vector.shape_cast %176 : vector<8x128xf32> to vector<1x8x128xf32>
    %184 = arith.truncf %183 : vector<1x8x128xf32> to vector<1x8x128xbf16>
    %185 = vector.shape_cast %180 : vector<8x128xf32> to vector<1x8x128xf32>
    %186 = arith.truncf %185 : vector<1x8x128xf32> to vector<1x8x128xbf16>
    %187 = vector.extract_strided_slice %182 {offsets = [0, 0, 0], sizes = [1, 16, 32], strides = [1, 1, 1]} : vector<1x16x128xbf16> to vector<1x16x32xbf16>
    %188 = vector.extract_strided_slice %184 {offsets = [0, 0, 0], sizes = [1, 8, 32], strides = [1, 1, 1]} : vector<1x8x128xbf16> to vector<1x8x32xbf16>
    "tpu.trace_start"() <{level = 10 : i32, message = "bqe,bke->bqk"}> : () -> ()
    %cst_66 = arith.constant dense<0.000000e+00> : vector<1x16x8xf32>
    %189 = tpu.matmul %187, %188, %cst_66 {dimension_numbers = #tpu.dot_dimension_numbers<[2], [2], [1], [1], [0, 0, 0, 1, 1, 1], [0], [0]>} : vector<1x16x32xbf16>, vector<1x8x32xbf16>, vector<1x16x8xf32> -> vector<1x16x8xf32>
    "tpu.trace_stop"() : () -> ()
    %cst_67 = arith.constant dense<0xFF800000> : vector<1x16xf32>
    %190 = vector.multi_reduction <maximumf>, %189, %cst_67 [2] : vector<1x16x8xf32> to vector<1x16xf32>
    %191 = vector.shape_cast %190 : vector<1x16xf32> to vector<1x16x1xf32>
    %192 = vector.broadcast %191 : vector<1x16x1xf32> to vector<1x16x8xf32>
    %193 = arith.subf %189, %192 : vector<1x16x8xf32>
    %194 = math.exp %193 : vector<1x16x8xf32>
    %cst_68 = arith.constant dense<0.000000e+00> : vector<1x16xf32>
    %195 = vector.multi_reduction <add>, %194, %cst_68 [2] : vector<1x16x8xf32> to vector<1x16xf32>
    %196 = vector.shape_cast %195 : vector<1x16xf32> to vector<1x16x1xf32>
    %197 = vector.broadcast %196 : vector<1x16x1xf32> to vector<1x16x8xf32>
    %198 = arith.divf %194, %197 : vector<1x16x8xf32>
    %199 = arith.truncf %198 : vector<1x16x8xf32> to vector<1x16x8xbf16>
    %200 = vector.extract_strided_slice %186 {offsets = [0, 0, 0], sizes = [1, 8, 32], strides = [1, 1, 1]} : vector<1x8x128xbf16> to vector<1x8x32xbf16>
    "tpu.trace_start"() <{level = 10 : i32, message = "bqk,bke->bqe"}> : () -> ()
    %cst_69 = arith.constant dense<0.000000e+00> : vector<1x16x32xf32>
    %201 = tpu.matmul %199, %200, %cst_69 {dimension_numbers = #tpu.dot_dimension_numbers<[2], [1], [1], [2], [0, 0, 0, 1, 1, 2], [0], [0]>} : vector<1x16x8xbf16>, vector<1x8x32xbf16>, vector<1x16x32xf32> -> vector<1x16x32xf32>
    "tpu.trace_stop"() : () -> ()
    %202 = vector.extract_strided_slice %182 {offsets = [0, 0, 32], sizes = [1, 16, 32], strides = [1, 1, 1]} : vector<1x16x128xbf16> to vector<1x16x32xbf16>
    %203 = vector.extract_strided_slice %184 {offsets = [0, 0, 32], sizes = [1, 8, 32], strides = [1, 1, 1]} : vector<1x8x128xbf16> to vector<1x8x32xbf16>
    "tpu.trace_start"() <{level = 10 : i32, message = "bqe,bke->bqk"}> : () -> ()
    %cst_70 = arith.constant dense<0.000000e+00> : vector<1x16x8xf32>
    %204 = tpu.matmul %202, %203, %cst_70 {dimension_numbers = #tpu.dot_dimension_numbers<[2], [2], [1], [1], [0, 0, 0, 1, 1, 1], [0], [0]>} : vector<1x16x32xbf16>, vector<1x8x32xbf16>, vector<1x16x8xf32> -> vector<1x16x8xf32>
    "tpu.trace_stop"() : () -> ()
    %cst_71 = arith.constant dense<0xFF800000> : vector<1x16xf32>
    %205 = vector.multi_reduction <maximumf>, %204, %cst_71 [2] : vector<1x16x8xf32> to vector<1x16xf32>
    %206 = vector.shape_cast %205 : vector<1x16xf32> to vector<1x16x1xf32>
    %207 = vector.broadcast %206 : vector<1x16x1xf32> to vector<1x16x8xf32>
    %208 = arith.subf %204, %207 : vector<1x16x8xf32>
    %209 = math.exp %208 : vector<1x16x8xf32>
    %cst_72 = arith.constant dense<0.000000e+00> : vector<1x16xf32>
    %210 = vector.multi_reduction <add>, %209, %cst_72 [2] : vector<1x16x8xf32> to vector<1x16xf32>
    %211 = vector.shape_cast %210 : vector<1x16xf32> to vector<1x16x1xf32>
    %212 = vector.broadcast %211 : vector<1x16x1xf32> to vector<1x16x8xf32>
    %213 = arith.divf %209, %212 : vector<1x16x8xf32>
    %214 = arith.truncf %213 : vector<1x16x8xf32> to vector<1x16x8xbf16>
    %215 = vector.extract_strided_slice %186 {offsets = [0, 0, 32], sizes = [1, 8, 32], strides = [1, 1, 1]} : vector<1x8x128xbf16> to vector<1x8x32xbf16>
    "tpu.trace_start"() <{level = 10 : i32, message = "bqk,bke->bqe"}> : () -> ()
    %cst_73 = arith.constant dense<0.000000e+00> : vector<1x16x32xf32>
    %216 = tpu.matmul %214, %215, %cst_73 {dimension_numbers = #tpu.dot_dimension_numbers<[2], [1], [1], [2], [0, 0, 0, 1, 1, 2], [0], [0]>} : vector<1x16x8xbf16>, vector<1x8x32xbf16>, vector<1x16x32xf32> -> vector<1x16x32xf32>
    "tpu.trace_stop"() : () -> ()
    %217 = vector.extract_strided_slice %182 {offsets = [0, 0, 64], sizes = [1, 16, 32], strides = [1, 1, 1]} : vector<1x16x128xbf16> to vector<1x16x32xbf16>
    %218 = vector.extract_strided_slice %184 {offsets = [0, 0, 64], sizes = [1, 8, 32], strides = [1, 1, 1]} : vector<1x8x128xbf16> to vector<1x8x32xbf16>
    "tpu.trace_start"() <{level = 10 : i32, message = "bqe,bke->bqk"}> : () -> ()
    %cst_74 = arith.constant dense<0.000000e+00> : vector<1x16x8xf32>
    %219 = tpu.matmul %217, %218, %cst_74 {dimension_numbers = #tpu.dot_dimension_numbers<[2], [2], [1], [1], [0, 0, 0, 1, 1, 1], [0], [0]>} : vector<1x16x32xbf16>, vector<1x8x32xbf16>, vector<1x16x8xf32> -> vector<1x16x8xf32>
    "tpu.trace_stop"() : () -> ()
    %cst_75 = arith.constant dense<0xFF800000> : vector<1x16xf32>
    %220 = vector.multi_reduction <maximumf>, %219, %cst_75 [2] : vector<1x16x8xf32> to vector<1x16xf32>
    %221 = vector.shape_cast %220 : vector<1x16xf32> to vector<1x16x1xf32>
    %222 = vector.broadcast %221 : vector<1x16x1xf32> to vector<1x16x8xf32>
    %223 = arith.subf %219, %222 : vector<1x16x8xf32>
    %224 = math.exp %223 : vector<1x16x8xf32>
    %cst_76 = arith.constant dense<0.000000e+00> : vector<1x16xf32>
    %225 = vector.multi_reduction <add>, %224, %cst_76 [2] : vector<1x16x8xf32> to vector<1x16xf32>
    %226 = vector.shape_cast %225 : vector<1x16xf32> to vector<1x16x1xf32>
    %227 = vector.broadcast %226 : vector<1x16x1xf32> to vector<1x16x8xf32>
    %228 = arith.divf %224, %227 : vector<1x16x8xf32>
    %229 = arith.truncf %228 : vector<1x16x8xf32> to vector<1x16x8xbf16>
    %230 = vector.extract_strided_slice %186 {offsets = [0, 0, 64], sizes = [1, 8, 32], strides = [1, 1, 1]} : vector<1x8x128xbf16> to vector<1x8x32xbf16>
    "tpu.trace_start"() <{level = 10 : i32, message = "bqk,bke->bqe"}> : () -> ()
    %cst_77 = arith.constant dense<0.000000e+00> : vector<1x16x32xf32>
    %231 = tpu.matmul %229, %230, %cst_77 {dimension_numbers = #tpu.dot_dimension_numbers<[2], [1], [1], [2], [0, 0, 0, 1, 1, 2], [0], [0]>} : vector<1x16x8xbf16>, vector<1x8x32xbf16>, vector<1x16x32xf32> -> vector<1x16x32xf32>
    "tpu.trace_stop"() : () -> ()
    %232 = vector.extract_strided_slice %182 {offsets = [0, 0, 96], sizes = [1, 16, 32], strides = [1, 1, 1]} : vector<1x16x128xbf16> to vector<1x16x32xbf16>
    %233 = vector.extract_strided_slice %184 {offsets = [0, 0, 96], sizes = [1, 8, 32], strides = [1, 1, 1]} : vector<1x8x128xbf16> to vector<1x8x32xbf16>
    "tpu.trace_start"() <{level = 10 : i32, message = "bqe,bke->bqk"}> : () -> ()
    %cst_78 = arith.constant dense<0.000000e+00> : vector<1x16x8xf32>
    %234 = tpu.matmul %232, %233, %cst_78 {dimension_numbers = #tpu.dot_dimension_numbers<[2], [2], [1], [1], [0, 0, 0, 1, 1, 1], [0], [0]>} : vector<1x16x32xbf16>, vector<1x8x32xbf16>, vector<1x16x8xf32> -> vector<1x16x8xf32>
    "tpu.trace_stop"() : () -> ()
    %cst_79 = arith.constant dense<0xFF800000> : vector<1x16xf32>
    %235 = vector.multi_reduction <maximumf>, %234, %cst_79 [2] : vector<1x16x8xf32> to vector<1x16xf32>
    %236 = vector.shape_cast %235 : vector<1x16xf32> to vector<1x16x1xf32>
    %237 = vector.broadcast %236 : vector<1x16x1xf32> to vector<1x16x8xf32>
    %238 = arith.subf %234, %237 : vector<1x16x8xf32>
    %239 = math.exp %238 : vector<1x16x8xf32>
    %cst_80 = arith.constant dense<0.000000e+00> : vector<1x16xf32>
    %240 = vector.multi_reduction <add>, %239, %cst_80 [2] : vector<1x16x8xf32> to vector<1x16xf32>
    %241 = vector.shape_cast %240 : vector<1x16xf32> to vector<1x16x1xf32>
    %242 = vector.broadcast %241 : vector<1x16x1xf32> to vector<1x16x8xf32>
    %243 = arith.divf %239, %242 : vector<1x16x8xf32>
    %244 = arith.truncf %243 : vector<1x16x8xf32> to vector<1x16x8xbf16>
    %245 = vector.extract_strided_slice %186 {offsets = [0, 0, 96], sizes = [1, 8, 32], strides = [1, 1, 1]} : vector<1x8x128xbf16> to vector<1x8x32xbf16>
    "tpu.trace_start"() <{level = 10 : i32, message = "bqk,bke->bqe"}> : () -> ()
    %cst_81 = arith.constant dense<0.000000e+00> : vector<1x16x32xf32>
    %246 = tpu.matmul %244, %245, %cst_81 {dimension_numbers = #tpu.dot_dimension_numbers<[2], [1], [1], [2], [0, 0, 0, 1, 1, 2], [0], [0]>} : vector<1x16x8xbf16>, vector<1x8x32xbf16>, vector<1x16x32xf32> -> vector<1x16x32xf32>
    "tpu.trace_stop"() : () -> ()
    %247 = tpu.concatenate %201, %216, %231, %246 in 2 : vector<1x16x32xf32>, vector<1x16x32xf32>, vector<1x16x32xf32>, vector<1x16x32xf32> -> vector<1x16x128xf32>
    %248 = vector.shape_cast %247 : vector<1x16x128xf32> to vector<16x128xf32>
    %249 = arith.truncf %248 : vector<16x128xf32> to vector<16x128xbf16>
    %c0_82 = arith.constant 0 : index
    %c0_83 = arith.constant 0 : index
    %250 = vector.load %arg16[%c0_82, %c0_83] : memref<128x128xbf16, #tpu.memory_space<vmem>>, vector<128x128xbf16>
    %cst_84 = arith.constant dense<0.000000e+00> : vector<16x128xf32>
    %251 = tpu.matmul %249, %250, %cst_84 {dimension_numbers = #tpu.dot_dimension_numbers<[1], [0], [0], [1], [0, 0, 1, 1], [], []>} : vector<16x128xbf16>, vector<128x128xbf16>, vector<16x128xf32> -> vector<16x128xf32>
    %c23 = arith.constant 23 : index
    %c0_85 = arith.constant 0 : index
    %252 = vector.load %arg3[%c23, %c0_85] : memref<28x128xf32, #tpu.memory_space<vmem>>, vector<1x128xf32>
    %253 = vector.broadcast %252 : vector<1x128xf32> to vector<16x128xf32>
    %254 = arith.addf %251, %253 : vector<16x128xf32>
    %255 = vector.shape_cast %254 : vector<16x128xf32> to vector<1x16x128xf32>
    %256 = arith.addf %255, %0 : vector<1x16x128xf32>
    %257 = vector.shape_cast %256 : vector<1x16x128xf32> to vector<16x128xf32>
    %258 = arith.truncf %257 : vector<16x128xf32> to vector<16x128xbf16>
    %259 = vector.shape_cast %256 : vector<1x16x128xf32> to vector<16x128xf32>
    %260 = arith.truncf %259 : vector<16x128xf32> to vector<16x128xbf16>
    %c0_86 = arith.constant 0 : index
    %c0_87 = arith.constant 0 : index
    %261 = vector.load %arg9[%c0_86, %c0_87] : memref<128x128xbf16, #tpu.memory_space<vmem>>, vector<128x128xbf16>
    %cst_88 = arith.constant dense<0.000000e+00> : vector<16x128xf32>
    %262 = tpu.matmul %258, %261, %cst_88 {dimension_numbers = #tpu.dot_dimension_numbers<[1], [0], [0], [1], [0, 0, 1, 1], [], []>} : vector<16x128xbf16>, vector<128x128xbf16>, vector<16x128xf32> -> vector<16x128xf32>
    %c10 = arith.constant 10 : index
    %c0_89 = arith.constant 0 : index
    %263 = vector.load %arg3[%c10, %c0_89] : memref<28x128xf32, #tpu.memory_space<vmem>>, vector<1x128xf32>
    %264 = vector.broadcast %263 : vector<1x128xf32> to vector<16x128xf32>
    %265 = arith.addf %262, %264 : vector<16x128xf32>
    %c0_90 = arith.constant 0 : index
    %c0_91 = arith.constant 0 : index
    %266 = vector.load %arg10[%c0_90, %c0_91] : memref<128x256xbf16, #tpu.memory_space<vmem>>, vector<128x256xbf16>
    %cst_92 = arith.constant dense<0.000000e+00> : vector<16x256xf32>
    %267 = tpu.matmul %260, %266, %cst_92 {dimension_numbers = #tpu.dot_dimension_numbers<[1], [0], [0], [1], [0, 0, 1, 1], [], []>} : vector<16x128xbf16>, vector<128x256xbf16>, vector<16x256xf32> -> vector<16x256xf32>
    %268 = vector.extract_strided_slice %267 {offsets = [0, 0], sizes = [16, 128], strides = [1, 1]} : vector<16x256xf32> to vector<16x128xf32>
    %c11 = arith.constant 11 : index
    %c0_93 = arith.constant 0 : index
    %269 = vector.load %arg3[%c11, %c0_93] : memref<28x128xf32, #tpu.memory_space<vmem>>, vector<1x128xf32>
    %270 = vector.broadcast %269 : vector<1x128xf32> to vector<16x128xf32>
    %271 = arith.addf %268, %270 : vector<16x128xf32>
    %272 = vector.extract_strided_slice %267 {offsets = [0, 128], sizes = [16, 128], strides = [1, 1]} : vector<16x256xf32> to vector<16x128xf32>
    %c12 = arith.constant 12 : index
    %c0_94 = arith.constant 0 : index
    %273 = vector.load %arg3[%c12, %c0_94] : memref<28x128xf32, #tpu.memory_space<vmem>>, vector<1x128xf32>
    %274 = vector.broadcast %273 : vector<1x128xf32> to vector<16x128xf32>
    %275 = arith.addf %272, %274 : vector<16x128xf32>
    %276 = vector.shape_cast %265 : vector<16x128xf32> to vector<1x16x128xf32>
    %277 = arith.truncf %276 : vector<1x16x128xf32> to vector<1x16x128xbf16>
    %278 = vector.shape_cast %271 : vector<16x128xf32> to vector<1x16x128xf32>
    %279 = arith.truncf %278 : vector<1x16x128xf32> to vector<1x16x128xbf16>
    %280 = vector.shape_cast %275 : vector<16x128xf32> to vector<1x16x128xf32>
    %281 = arith.truncf %280 : vector<1x16x128xf32> to vector<1x16x128xbf16>
    %282 = vector.extract_strided_slice %277 {offsets = [0, 0, 0], sizes = [1, 16, 32], strides = [1, 1, 1]} : vector<1x16x128xbf16> to vector<1x16x32xbf16>
    %283 = vector.extract_strided_slice %279 {offsets = [0, 0, 0], sizes = [1, 16, 32], strides = [1, 1, 1]} : vector<1x16x128xbf16> to vector<1x16x32xbf16>
    "tpu.trace_start"() <{level = 10 : i32, message = "bqe,bke->bqk"}> : () -> ()
    %cst_95 = arith.constant dense<0.000000e+00> : vector<1x16x16xf32>
    %284 = tpu.matmul %282, %283, %cst_95 {dimension_numbers = #tpu.dot_dimension_numbers<[2], [2], [1], [1], [0, 0, 0, 1, 1, 1], [0], [0]>} : vector<1x16x32xbf16>, vector<1x16x32xbf16>, vector<1x16x16xf32> -> vector<1x16x16xf32>
    "tpu.trace_stop"() : () -> ()
    %cst_96 = arith.constant dense<0xFF800000> : vector<1x16xf32>
    %285 = vector.multi_reduction <maximumf>, %284, %cst_96 [2] : vector<1x16x16xf32> to vector<1x16xf32>
    %286 = vector.shape_cast %285 : vector<1x16xf32> to vector<1x16x1xf32>
    %287 = vector.broadcast %286 : vector<1x16x1xf32> to vector<1x16x16xf32>
    %288 = arith.subf %284, %287 : vector<1x16x16xf32>
    %289 = math.exp %288 : vector<1x16x16xf32>
    %cst_97 = arith.constant dense<0.000000e+00> : vector<1x16xf32>
    %290 = vector.multi_reduction <add>, %289, %cst_97 [2] : vector<1x16x16xf32> to vector<1x16xf32>
    %291 = vector.shape_cast %290 : vector<1x16xf32> to vector<1x16x1xf32>
    %292 = vector.broadcast %291 : vector<1x16x1xf32> to vector<1x16x16xf32>
    %293 = arith.divf %289, %292 : vector<1x16x16xf32>
    %294 = arith.truncf %293 : vector<1x16x16xf32> to vector<1x16x16xbf16>
    %295 = vector.extract_strided_slice %281 {offsets = [0, 0, 0], sizes = [1, 16, 32], strides = [1, 1, 1]} : vector<1x16x128xbf16> to vector<1x16x32xbf16>
    "tpu.trace_start"() <{level = 10 : i32, message = "bqk,bke->bqe"}> : () -> ()
    %cst_98 = arith.constant dense<0.000000e+00> : vector<1x16x32xf32>
    %296 = tpu.matmul %294, %295, %cst_98 {dimension_numbers = #tpu.dot_dimension_numbers<[2], [1], [1], [2], [0, 0, 0, 1, 1, 2], [0], [0]>} : vector<1x16x16xbf16>, vector<1x16x32xbf16>, vector<1x16x32xf32> -> vector<1x16x32xf32>
    "tpu.trace_stop"() : () -> ()
    %297 = vector.extract_strided_slice %277 {offsets = [0, 0, 32], sizes = [1, 16, 32], strides = [1, 1, 1]} : vector<1x16x128xbf16> to vector<1x16x32xbf16>
    %298 = vector.extract_strided_slice %279 {offsets = [0, 0, 32], sizes = [1, 16, 32], strides = [1, 1, 1]} : vector<1x16x128xbf16> to vector<1x16x32xbf16>
    "tpu.trace_start"() <{level = 10 : i32, message = "bqe,bke->bqk"}> : () -> ()
    %cst_99 = arith.constant dense<0.000000e+00> : vector<1x16x16xf32>
    %299 = tpu.matmul %297, %298, %cst_99 {dimension_numbers = #tpu.dot_dimension_numbers<[2], [2], [1], [1], [0, 0, 0, 1, 1, 1], [0], [0]>} : vector<1x16x32xbf16>, vector<1x16x32xbf16>, vector<1x16x16xf32> -> vector<1x16x16xf32>
    "tpu.trace_stop"() : () -> ()
    %cst_100 = arith.constant dense<0xFF800000> : vector<1x16xf32>
    %300 = vector.multi_reduction <maximumf>, %299, %cst_100 [2] : vector<1x16x16xf32> to vector<1x16xf32>
    %301 = vector.shape_cast %300 : vector<1x16xf32> to vector<1x16x1xf32>
    %302 = vector.broadcast %301 : vector<1x16x1xf32> to vector<1x16x16xf32>
    %303 = arith.subf %299, %302 : vector<1x16x16xf32>
    %304 = math.exp %303 : vector<1x16x16xf32>
    %cst_101 = arith.constant dense<0.000000e+00> : vector<1x16xf32>
    %305 = vector.multi_reduction <add>, %304, %cst_101 [2] : vector<1x16x16xf32> to vector<1x16xf32>
    %306 = vector.shape_cast %305 : vector<1x16xf32> to vector<1x16x1xf32>
    %307 = vector.broadcast %306 : vector<1x16x1xf32> to vector<1x16x16xf32>
    %308 = arith.divf %304, %307 : vector<1x16x16xf32>
    %309 = arith.truncf %308 : vector<1x16x16xf32> to vector<1x16x16xbf16>
    %310 = vector.extract_strided_slice %281 {offsets = [0, 0, 32], sizes = [1, 16, 32], strides = [1, 1, 1]} : vector<1x16x128xbf16> to vector<1x16x32xbf16>
    "tpu.trace_start"() <{level = 10 : i32, message = "bqk,bke->bqe"}> : () -> ()
    %cst_102 = arith.constant dense<0.000000e+00> : vector<1x16x32xf32>
    %311 = tpu.matmul %309, %310, %cst_102 {dimension_numbers = #tpu.dot_dimension_numbers<[2], [1], [1], [2], [0, 0, 0, 1, 1, 2], [0], [0]>} : vector<1x16x16xbf16>, vector<1x16x32xbf16>, vector<1x16x32xf32> -> vector<1x16x32xf32>
    "tpu.trace_stop"() : () -> ()
    %312 = vector.extract_strided_slice %277 {offsets = [0, 0, 64], sizes = [1, 16, 32], strides = [1, 1, 1]} : vector<1x16x128xbf16> to vector<1x16x32xbf16>
    %313 = vector.extract_strided_slice %279 {offsets = [0, 0, 64], sizes = [1, 16, 32], strides = [1, 1, 1]} : vector<1x16x128xbf16> to vector<1x16x32xbf16>
    "tpu.trace_start"() <{level = 10 : i32, message = "bqe,bke->bqk"}> : () -> ()
    %cst_103 = arith.constant dense<0.000000e+00> : vector<1x16x16xf32>
    %314 = tpu.matmul %312, %313, %cst_103 {dimension_numbers = #tpu.dot_dimension_numbers<[2], [2], [1], [1], [0, 0, 0, 1, 1, 1], [0], [0]>} : vector<1x16x32xbf16>, vector<1x16x32xbf16>, vector<1x16x16xf32> -> vector<1x16x16xf32>
    "tpu.trace_stop"() : () -> ()
    %cst_104 = arith.constant dense<0xFF800000> : vector<1x16xf32>
    %315 = vector.multi_reduction <maximumf>, %314, %cst_104 [2] : vector<1x16x16xf32> to vector<1x16xf32>
    %316 = vector.shape_cast %315 : vector<1x16xf32> to vector<1x16x1xf32>
    %317 = vector.broadcast %316 : vector<1x16x1xf32> to vector<1x16x16xf32>
    %318 = arith.subf %314, %317 : vector<1x16x16xf32>
    %319 = math.exp %318 : vector<1x16x16xf32>
    %cst_105 = arith.constant dense<0.000000e+00> : vector<1x16xf32>
    %320 = vector.multi_reduction <add>, %319, %cst_105 [2] : vector<1x16x16xf32> to vector<1x16xf32>
    %321 = vector.shape_cast %320 : vector<1x16xf32> to vector<1x16x1xf32>
    %322 = vector.broadcast %321 : vector<1x16x1xf32> to vector<1x16x16xf32>
    %323 = arith.divf %319, %322 : vector<1x16x16xf32>
    %324 = arith.truncf %323 : vector<1x16x16xf32> to vector<1x16x16xbf16>
    %325 = vector.extract_strided_slice %281 {offsets = [0, 0, 64], sizes = [1, 16, 32], strides = [1, 1, 1]} : vector<1x16x128xbf16> to vector<1x16x32xbf16>
    "tpu.trace_start"() <{level = 10 : i32, message = "bqk,bke->bqe"}> : () -> ()
    %cst_106 = arith.constant dense<0.000000e+00> : vector<1x16x32xf32>
    %326 = tpu.matmul %324, %325, %cst_106 {dimension_numbers = #tpu.dot_dimension_numbers<[2], [1], [1], [2], [0, 0, 0, 1, 1, 2], [0], [0]>} : vector<1x16x16xbf16>, vector<1x16x32xbf16>, vector<1x16x32xf32> -> vector<1x16x32xf32>
    "tpu.trace_stop"() : () -> ()
    %327 = vector.extract_strided_slice %277 {offsets = [0, 0, 96], sizes = [1, 16, 32], strides = [1, 1, 1]} : vector<1x16x128xbf16> to vector<1x16x32xbf16>
    %328 = vector.extract_strided_slice %279 {offsets = [0, 0, 96], sizes = [1, 16, 32], strides = [1, 1, 1]} : vector<1x16x128xbf16> to vector<1x16x32xbf16>
    "tpu.trace_start"() <{level = 10 : i32, message = "bqe,bke->bqk"}> : () -> ()
    %cst_107 = arith.constant dense<0.000000e+00> : vector<1x16x16xf32>
    %329 = tpu.matmul %327, %328, %cst_107 {dimension_numbers = #tpu.dot_dimension_numbers<[2], [2], [1], [1], [0, 0, 0, 1, 1, 1], [0], [0]>} : vector<1x16x32xbf16>, vector<1x16x32xbf16>, vector<1x16x16xf32> -> vector<1x16x16xf32>
    "tpu.trace_stop"() : () -> ()
    %cst_108 = arith.constant dense<0xFF800000> : vector<1x16xf32>
    %330 = vector.multi_reduction <maximumf>, %329, %cst_108 [2] : vector<1x16x16xf32> to vector<1x16xf32>
    %331 = vector.shape_cast %330 : vector<1x16xf32> to vector<1x16x1xf32>
    %332 = vector.broadcast %331 : vector<1x16x1xf32> to vector<1x16x16xf32>
    %333 = arith.subf %329, %332 : vector<1x16x16xf32>
    %334 = math.exp %333 : vector<1x16x16xf32>
    %cst_109 = arith.constant dense<0.000000e+00> : vector<1x16xf32>
    %335 = vector.multi_reduction <add>, %334, %cst_109 [2] : vector<1x16x16xf32> to vector<1x16xf32>
    %336 = vector.shape_cast %335 : vector<1x16xf32> to vector<1x16x1xf32>
    %337 = vector.broadcast %336 : vector<1x16x1xf32> to vector<1x16x16xf32>
    %338 = arith.divf %334, %337 : vector<1x16x16xf32>
    %339 = arith.truncf %338 : vector<1x16x16xf32> to vector<1x16x16xbf16>
    %340 = vector.extract_strided_slice %281 {offsets = [0, 0, 96], sizes = [1, 16, 32], strides = [1, 1, 1]} : vector<1x16x128xbf16> to vector<1x16x32xbf16>
    "tpu.trace_start"() <{level = 10 : i32, message = "bqk,bke->bqe"}> : () -> ()
    %cst_110 = arith.constant dense<0.000000e+00> : vector<1x16x32xf32>
    %341 = tpu.matmul %339, %340, %cst_110 {dimension_numbers = #tpu.dot_dimension_numbers<[2], [1], [1], [2], [0, 0, 0, 1, 1, 2], [0], [0]>} : vector<1x16x16xbf16>, vector<1x16x32xbf16>, vector<1x16x32xf32> -> vector<1x16x32xf32>
    "tpu.trace_stop"() : () -> ()
    %342 = tpu.concatenate %296, %311, %326, %341 in 2 : vector<1x16x32xf32>, vector<1x16x32xf32>, vector<1x16x32xf32>, vector<1x16x32xf32> -> vector<1x16x128xf32>
    %343 = vector.shape_cast %342 : vector<1x16x128xf32> to vector<16x128xf32>
    %344 = arith.truncf %343 : vector<16x128xf32> to vector<16x128xbf16>
    %c0_111 = arith.constant 0 : index
    %c0_112 = arith.constant 0 : index
    %345 = vector.load %arg11[%c0_111, %c0_112] : memref<128x128xbf16, #tpu.memory_space<vmem>>, vector<128x128xbf16>
    %cst_113 = arith.constant dense<0.000000e+00> : vector<16x128xf32>
    %346 = tpu.matmul %344, %345, %cst_113 {dimension_numbers = #tpu.dot_dimension_numbers<[1], [0], [0], [1], [0, 0, 1, 1], [], []>} : vector<16x128xbf16>, vector<128x128xbf16>, vector<16x128xf32> -> vector<16x128xf32>
    %c13 = arith.constant 13 : index
    %c0_114 = arith.constant 0 : index
    %347 = vector.load %arg3[%c13, %c0_114] : memref<28x128xf32, #tpu.memory_space<vmem>>, vector<1x128xf32>
    %348 = vector.broadcast %347 : vector<1x128xf32> to vector<16x128xf32>
    %349 = arith.addf %346, %348 : vector<16x128xf32>
    %350 = vector.shape_cast %349 : vector<16x128xf32> to vector<1x16x128xf32>
    %c16 = arith.constant 16 : index
    %c0_115 = arith.constant 0 : index
    %351 = vector.load %arg3[%c16, %c0_115] : memref<28x128xf32, #tpu.memory_space<vmem>>, vector<1x128xf32>
    %c17 = arith.constant 17 : index
    %c0_116 = arith.constant 0 : index
    %352 = vector.load %arg3[%c17, %c0_116] : memref<28x128xf32, #tpu.memory_space<vmem>>, vector<1x128xf32>
    %353 = arith.addf %256, %350 : vector<1x16x128xf32>
    %cst_117 = arith.constant dense<0.000000e+00> : vector<1x16xf32>
    %354 = vector.multi_reduction <add>, %353, %cst_117 [2] : vector<1x16x128xf32> to vector<1x16xf32>
    %355 = vector.shape_cast %354 : vector<1x16xf32> to vector<1x16x1xf32>
    %cst_118 = arith.constant 1.280000e+02 : f32
    %356 = vector.broadcast %cst_118 : f32 to vector<1x16x1xf32>
    %357 = arith.divf %355, %356 : vector<1x16x1xf32>
    %358 = vector.broadcast %357 : vector<1x16x1xf32> to vector<1x16x128xf32>
    %359 = arith.subf %353, %358 : vector<1x16x128xf32>
    %360 = arith.mulf %359, %359 : vector<1x16x128xf32>
    %cst_119 = arith.constant dense<0.000000e+00> : vector<1x16xf32>
    %361 = vector.multi_reduction <add>, %360, %cst_119 [2] : vector<1x16x128xf32> to vector<1x16xf32>
    %362 = vector.shape_cast %361 : vector<1x16xf32> to vector<1x16x1xf32>
    %cst_120 = arith.constant 1.280000e+02 : f32
    %363 = vector.broadcast %cst_120 : f32 to vector<1x16x1xf32>
    %364 = arith.divf %362, %363 : vector<1x16x1xf32>
    %cst_121 = arith.constant 9.99999974E-6 : f32
    %365 = vector.broadcast %cst_121 : f32 to vector<1x16x1xf32>
    %366 = arith.addf %364, %365 : vector<1x16x1xf32>
    %367 = math.rsqrt %366 : vector<1x16x1xf32>
    %368 = vector.broadcast %367 : vector<1x16x1xf32> to vector<1x16x128xf32>
    %369 = arith.mulf %359, %368 : vector<1x16x128xf32>
    %370 = vector.shape_cast %351 : vector<1x128xf32> to vector<1x1x128xf32>
    %371 = vector.broadcast %370 : vector<1x1x128xf32> to vector<1x16x128xf32>
    %372 = arith.mulf %369, %371 : vector<1x16x128xf32>
    %373 = vector.shape_cast %352 : vector<1x128xf32> to vector<1x1x128xf32>
    %374 = vector.broadcast %373 : vector<1x1x128xf32> to vector<1x16x128xf32>
    %375 = arith.addf %372, %374 : vector<1x16x128xf32>
    %376 = vector.shape_cast %375 : vector<1x16x128xf32> to vector<16x128xf32>
    %377 = arith.truncf %376 : vector<16x128xf32> to vector<16x128xbf16>
    %c0_122 = arith.constant 0 : index
    %c0_123 = arith.constant 0 : index
    %378 = vector.load %arg12[%c0_122, %c0_123] : memref<128x128xbf16, #tpu.memory_space<vmem>>, vector<128x128xbf16>
    %cst_124 = arith.constant dense<0.000000e+00> : vector<16x128xf32>
    %379 = tpu.matmul %377, %378, %cst_124 {dimension_numbers = #tpu.dot_dimension_numbers<[1], [0], [0], [1], [0, 0, 1, 1], [], []>} : vector<16x128xbf16>, vector<128x128xbf16>, vector<16x128xf32> -> vector<16x128xf32>
    %c14 = arith.constant 14 : index
    %c0_125 = arith.constant 0 : index
    %380 = vector.load %arg3[%c14, %c0_125] : memref<28x128xf32, #tpu.memory_space<vmem>>, vector<1x128xf32>
    %381 = vector.broadcast %380 : vector<1x128xf32> to vector<16x128xf32>
    %382 = arith.addf %379, %381 : vector<16x128xf32>
    %cst_126 = arith.constant 0.000000e+00 : f32
    %383 = vector.broadcast %cst_126 : f32 to vector<16x128xf32>
    %384 = arith.maximumf %382, %383 : vector<16x128xf32>
    %385 = arith.truncf %384 : vector<16x128xf32> to vector<16x128xbf16>
    %c0_127 = arith.constant 0 : index
    %c0_128 = arith.constant 0 : index
    %386 = vector.load %arg13[%c0_127, %c0_128] : memref<128x128xbf16, #tpu.memory_space<vmem>>, vector<128x128xbf16>
    %cst_129 = arith.constant dense<0.000000e+00> : vector<16x128xf32>
    %387 = tpu.matmul %385, %386, %cst_129 {dimension_numbers = #tpu.dot_dimension_numbers<[1], [0], [0], [1], [0, 0, 1, 1], [], []>} : vector<16x128xbf16>, vector<128x128xbf16>, vector<16x128xf32> -> vector<16x128xf32>
    %c15 = arith.constant 15 : index
    %c0_130 = arith.constant 0 : index
    %388 = vector.load %arg3[%c15, %c0_130] : memref<28x128xf32, #tpu.memory_space<vmem>>, vector<1x128xf32>
    %389 = vector.broadcast %388 : vector<1x128xf32> to vector<16x128xf32>
    %390 = arith.addf %387, %389 : vector<16x128xf32>
    %391 = vector.shape_cast %390 : vector<16x128xf32> to vector<1x16x128xf32>
    %c18 = arith.constant 18 : index
    %c0_131 = arith.constant 0 : index
    %392 = vector.load %arg3[%c18, %c0_131] : memref<28x128xf32, #tpu.memory_space<vmem>>, vector<1x128xf32>
    %c19 = arith.constant 19 : index
    %c0_132 = arith.constant 0 : index
    %393 = vector.load %arg3[%c19, %c0_132] : memref<28x128xf32, #tpu.memory_space<vmem>>, vector<1x128xf32>
    %394 = arith.addf %375, %391 : vector<1x16x128xf32>
    %cst_133 = arith.constant dense<0.000000e+00> : vector<1x16xf32>
    %395 = vector.multi_reduction <add>, %394, %cst_133 [2] : vector<1x16x128xf32> to vector<1x16xf32>
    %396 = vector.shape_cast %395 : vector<1x16xf32> to vector<1x16x1xf32>
    %cst_134 = arith.constant 1.280000e+02 : f32
    %397 = vector.broadcast %cst_134 : f32 to vector<1x16x1xf32>
    %398 = arith.divf %396, %397 : vector<1x16x1xf32>
    %399 = vector.broadcast %398 : vector<1x16x1xf32> to vector<1x16x128xf32>
    %400 = arith.subf %394, %399 : vector<1x16x128xf32>
    %401 = arith.mulf %400, %400 : vector<1x16x128xf32>
    %cst_135 = arith.constant dense<0.000000e+00> : vector<1x16xf32>
    %402 = vector.multi_reduction <add>, %401, %cst_135 [2] : vector<1x16x128xf32> to vector<1x16xf32>
    %403 = vector.shape_cast %402 : vector<1x16xf32> to vector<1x16x1xf32>
    %cst_136 = arith.constant 1.280000e+02 : f32
    %404 = vector.broadcast %cst_136 : f32 to vector<1x16x1xf32>
    %405 = arith.divf %403, %404 : vector<1x16x1xf32>
    %cst_137 = arith.constant 9.99999974E-6 : f32
    %406 = vector.broadcast %cst_137 : f32 to vector<1x16x1xf32>
    %407 = arith.addf %405, %406 : vector<1x16x1xf32>
    %408 = math.rsqrt %407 : vector<1x16x1xf32>
    %409 = vector.broadcast %408 : vector<1x16x1xf32> to vector<1x16x128xf32>
    %410 = arith.mulf %400, %409 : vector<1x16x128xf32>
    %411 = vector.shape_cast %392 : vector<1x128xf32> to vector<1x1x128xf32>
    %412 = vector.broadcast %411 : vector<1x1x128xf32> to vector<1x16x128xf32>
    %413 = arith.mulf %410, %412 : vector<1x16x128xf32>
    %414 = vector.shape_cast %393 : vector<1x128xf32> to vector<1x1x128xf32>
    %415 = vector.broadcast %414 : vector<1x1x128xf32> to vector<1x16x128xf32>
    %416 = arith.addf %413, %415 : vector<1x16x128xf32>
    %417 = vector.shape_cast %161 : vector<1x8x128xf32> to vector<8x128xf32>
    %418 = arith.truncf %417 : vector<8x128xf32> to vector<8x128xbf16>
    %419 = vector.shape_cast %416 : vector<1x16x128xf32> to vector<16x128xf32>
    %420 = arith.truncf %419 : vector<16x128xf32> to vector<16x128xbf16>
    %c0_138 = arith.constant 0 : index
    %c0_139 = arith.constant 0 : index
    %421 = vector.load %arg17[%c0_138, %c0_139] : memref<128x128xbf16, #tpu.memory_space<vmem>>, vector<128x128xbf16>
    %cst_140 = arith.constant dense<0.000000e+00> : vector<8x128xf32>
    %422 = tpu.matmul %418, %421, %cst_140 {dimension_numbers = #tpu.dot_dimension_numbers<[1], [0], [0], [1], [0, 0, 1, 1], [], []>} : vector<8x128xbf16>, vector<128x128xbf16>, vector<8x128xf32> -> vector<8x128xf32>
    %c24 = arith.constant 24 : index
    %c0_141 = arith.constant 0 : index
    %423 = vector.load %arg3[%c24, %c0_141] : memref<28x128xf32, #tpu.memory_space<vmem>>, vector<1x128xf32>
    %424 = vector.broadcast %423 : vector<1x128xf32> to vector<8x128xf32>
    %425 = arith.addf %422, %424 : vector<8x128xf32>
    %c0_142 = arith.constant 0 : index
    %c0_143 = arith.constant 0 : index
    %426 = vector.load %arg18[%c0_142, %c0_143] : memref<128x256xbf16, #tpu.memory_space<vmem>>, vector<128x256xbf16>
    %cst_144 = arith.constant dense<0.000000e+00> : vector<16x256xf32>
    %427 = tpu.matmul %420, %426, %cst_144 {dimension_numbers = #tpu.dot_dimension_numbers<[1], [0], [0], [1], [0, 0, 1, 1], [], []>} : vector<16x128xbf16>, vector<128x256xbf16>, vector<16x256xf32> -> vector<16x256xf32>
    %428 = vector.extract_strided_slice %427 {offsets = [0, 0], sizes = [16, 128], strides = [1, 1]} : vector<16x256xf32> to vector<16x128xf32>
    %c25 = arith.constant 25 : index
    %c0_145 = arith.constant 0 : index
    %429 = vector.load %arg3[%c25, %c0_145] : memref<28x128xf32, #tpu.memory_space<vmem>>, vector<1x128xf32>
    %430 = vector.broadcast %429 : vector<1x128xf32> to vector<16x128xf32>
    %431 = arith.addf %428, %430 : vector<16x128xf32>
    %432 = vector.extract_strided_slice %427 {offsets = [0, 128], sizes = [16, 128], strides = [1, 1]} : vector<16x256xf32> to vector<16x128xf32>
    %c26 = arith.constant 26 : index
    %c0_146 = arith.constant 0 : index
    %433 = vector.load %arg3[%c26, %c0_146] : memref<28x128xf32, #tpu.memory_space<vmem>>, vector<1x128xf32>
    %434 = vector.broadcast %433 : vector<1x128xf32> to vector<16x128xf32>
    %435 = arith.addf %432, %434 : vector<16x128xf32>
    %436 = vector.shape_cast %425 : vector<8x128xf32> to vector<1x8x128xf32>
    %437 = arith.truncf %436 : vector<1x8x128xf32> to vector<1x8x128xbf16>
    %438 = vector.shape_cast %431 : vector<16x128xf32> to vector<1x16x128xf32>
    %439 = arith.truncf %438 : vector<1x16x128xf32> to vector<1x16x128xbf16>
    %440 = vector.shape_cast %435 : vector<16x128xf32> to vector<1x16x128xf32>
    %441 = arith.truncf %440 : vector<1x16x128xf32> to vector<1x16x128xbf16>
    %442 = vector.extract_strided_slice %437 {offsets = [0, 0, 0], sizes = [1, 8, 32], strides = [1, 1, 1]} : vector<1x8x128xbf16> to vector<1x8x32xbf16>
    %443 = vector.extract_strided_slice %439 {offsets = [0, 0, 0], sizes = [1, 16, 32], strides = [1, 1, 1]} : vector<1x16x128xbf16> to vector<1x16x32xbf16>
    "tpu.trace_start"() <{level = 10 : i32, message = "bqe,bke->bqk"}> : () -> ()
    %cst_147 = arith.constant dense<0.000000e+00> : vector<1x8x16xf32>
    %444 = tpu.matmul %442, %443, %cst_147 {dimension_numbers = #tpu.dot_dimension_numbers<[2], [2], [1], [1], [0, 0, 0, 1, 1, 1], [0], [0]>} : vector<1x8x32xbf16>, vector<1x16x32xbf16>, vector<1x8x16xf32> -> vector<1x8x16xf32>
    "tpu.trace_stop"() : () -> ()
    %cst_148 = arith.constant dense<0xFF800000> : vector<1x8xf32>
    %445 = vector.multi_reduction <maximumf>, %444, %cst_148 [2] : vector<1x8x16xf32> to vector<1x8xf32>
    %446 = vector.shape_cast %445 : vector<1x8xf32> to vector<1x8x1xf32>
    %447 = vector.broadcast %446 : vector<1x8x1xf32> to vector<1x8x16xf32>
    %448 = arith.subf %444, %447 : vector<1x8x16xf32>
    %449 = math.exp %448 : vector<1x8x16xf32>
    %cst_149 = arith.constant dense<0.000000e+00> : vector<1x8xf32>
    %450 = vector.multi_reduction <add>, %449, %cst_149 [2] : vector<1x8x16xf32> to vector<1x8xf32>
    %451 = vector.shape_cast %450 : vector<1x8xf32> to vector<1x8x1xf32>
    %452 = vector.broadcast %451 : vector<1x8x1xf32> to vector<1x8x16xf32>
    %453 = arith.divf %449, %452 : vector<1x8x16xf32>
    %454 = arith.truncf %453 : vector<1x8x16xf32> to vector<1x8x16xbf16>
    %455 = vector.extract_strided_slice %441 {offsets = [0, 0, 0], sizes = [1, 16, 32], strides = [1, 1, 1]} : vector<1x16x128xbf16> to vector<1x16x32xbf16>
    "tpu.trace_start"() <{level = 10 : i32, message = "bqk,bke->bqe"}> : () -> ()
    %cst_150 = arith.constant dense<0.000000e+00> : vector<1x8x32xf32>
    %456 = tpu.matmul %454, %455, %cst_150 {dimension_numbers = #tpu.dot_dimension_numbers<[2], [1], [1], [2], [0, 0, 0, 1, 1, 2], [0], [0]>} : vector<1x8x16xbf16>, vector<1x16x32xbf16>, vector<1x8x32xf32> -> vector<1x8x32xf32>
    "tpu.trace_stop"() : () -> ()
    %457 = vector.extract_strided_slice %437 {offsets = [0, 0, 32], sizes = [1, 8, 32], strides = [1, 1, 1]} : vector<1x8x128xbf16> to vector<1x8x32xbf16>
    %458 = vector.extract_strided_slice %439 {offsets = [0, 0, 32], sizes = [1, 16, 32], strides = [1, 1, 1]} : vector<1x16x128xbf16> to vector<1x16x32xbf16>
    "tpu.trace_start"() <{level = 10 : i32, message = "bqe,bke->bqk"}> : () -> ()
    %cst_151 = arith.constant dense<0.000000e+00> : vector<1x8x16xf32>
    %459 = tpu.matmul %457, %458, %cst_151 {dimension_numbers = #tpu.dot_dimension_numbers<[2], [2], [1], [1], [0, 0, 0, 1, 1, 1], [0], [0]>} : vector<1x8x32xbf16>, vector<1x16x32xbf16>, vector<1x8x16xf32> -> vector<1x8x16xf32>
    "tpu.trace_stop"() : () -> ()
    %cst_152 = arith.constant dense<0xFF800000> : vector<1x8xf32>
    %460 = vector.multi_reduction <maximumf>, %459, %cst_152 [2] : vector<1x8x16xf32> to vector<1x8xf32>
    %461 = vector.shape_cast %460 : vector<1x8xf32> to vector<1x8x1xf32>
    %462 = vector.broadcast %461 : vector<1x8x1xf32> to vector<1x8x16xf32>
    %463 = arith.subf %459, %462 : vector<1x8x16xf32>
    %464 = math.exp %463 : vector<1x8x16xf32>
    %cst_153 = arith.constant dense<0.000000e+00> : vector<1x8xf32>
    %465 = vector.multi_reduction <add>, %464, %cst_153 [2] : vector<1x8x16xf32> to vector<1x8xf32>
    %466 = vector.shape_cast %465 : vector<1x8xf32> to vector<1x8x1xf32>
    %467 = vector.broadcast %466 : vector<1x8x1xf32> to vector<1x8x16xf32>
    %468 = arith.divf %464, %467 : vector<1x8x16xf32>
    %469 = arith.truncf %468 : vector<1x8x16xf32> to vector<1x8x16xbf16>
    %470 = vector.extract_strided_slice %441 {offsets = [0, 0, 32], sizes = [1, 16, 32], strides = [1, 1, 1]} : vector<1x16x128xbf16> to vector<1x16x32xbf16>
    "tpu.trace_start"() <{level = 10 : i32, message = "bqk,bke->bqe"}> : () -> ()
    %cst_154 = arith.constant dense<0.000000e+00> : vector<1x8x32xf32>
    %471 = tpu.matmul %469, %470, %cst_154 {dimension_numbers = #tpu.dot_dimension_numbers<[2], [1], [1], [2], [0, 0, 0, 1, 1, 2], [0], [0]>} : vector<1x8x16xbf16>, vector<1x16x32xbf16>, vector<1x8x32xf32> -> vector<1x8x32xf32>
    "tpu.trace_stop"() : () -> ()
    %472 = vector.extract_strided_slice %437 {offsets = [0, 0, 64], sizes = [1, 8, 32], strides = [1, 1, 1]} : vector<1x8x128xbf16> to vector<1x8x32xbf16>
    %473 = vector.extract_strided_slice %439 {offsets = [0, 0, 64], sizes = [1, 16, 32], strides = [1, 1, 1]} : vector<1x16x128xbf16> to vector<1x16x32xbf16>
    "tpu.trace_start"() <{level = 10 : i32, message = "bqe,bke->bqk"}> : () -> ()
    %cst_155 = arith.constant dense<0.000000e+00> : vector<1x8x16xf32>
    %474 = tpu.matmul %472, %473, %cst_155 {dimension_numbers = #tpu.dot_dimension_numbers<[2], [2], [1], [1], [0, 0, 0, 1, 1, 1], [0], [0]>} : vector<1x8x32xbf16>, vector<1x16x32xbf16>, vector<1x8x16xf32> -> vector<1x8x16xf32>
    "tpu.trace_stop"() : () -> ()
    %cst_156 = arith.constant dense<0xFF800000> : vector<1x8xf32>
    %475 = vector.multi_reduction <maximumf>, %474, %cst_156 [2] : vector<1x8x16xf32> to vector<1x8xf32>
    %476 = vector.shape_cast %475 : vector<1x8xf32> to vector<1x8x1xf32>
    %477 = vector.broadcast %476 : vector<1x8x1xf32> to vector<1x8x16xf32>
    %478 = arith.subf %474, %477 : vector<1x8x16xf32>
    %479 = math.exp %478 : vector<1x8x16xf32>
    %cst_157 = arith.constant dense<0.000000e+00> : vector<1x8xf32>
    %480 = vector.multi_reduction <add>, %479, %cst_157 [2] : vector<1x8x16xf32> to vector<1x8xf32>
    %481 = vector.shape_cast %480 : vector<1x8xf32> to vector<1x8x1xf32>
    %482 = vector.broadcast %481 : vector<1x8x1xf32> to vector<1x8x16xf32>
    %483 = arith.divf %479, %482 : vector<1x8x16xf32>
    %484 = arith.truncf %483 : vector<1x8x16xf32> to vector<1x8x16xbf16>
    %485 = vector.extract_strided_slice %441 {offsets = [0, 0, 64], sizes = [1, 16, 32], strides = [1, 1, 1]} : vector<1x16x128xbf16> to vector<1x16x32xbf16>
    "tpu.trace_start"() <{level = 10 : i32, message = "bqk,bke->bqe"}> : () -> ()
    %cst_158 = arith.constant dense<0.000000e+00> : vector<1x8x32xf32>
    %486 = tpu.matmul %484, %485, %cst_158 {dimension_numbers = #tpu.dot_dimension_numbers<[2], [1], [1], [2], [0, 0, 0, 1, 1, 2], [0], [0]>} : vector<1x8x16xbf16>, vector<1x16x32xbf16>, vector<1x8x32xf32> -> vector<1x8x32xf32>
    "tpu.trace_stop"() : () -> ()
    %487 = vector.extract_strided_slice %437 {offsets = [0, 0, 96], sizes = [1, 8, 32], strides = [1, 1, 1]} : vector<1x8x128xbf16> to vector<1x8x32xbf16>
    %488 = vector.extract_strided_slice %439 {offsets = [0, 0, 96], sizes = [1, 16, 32], strides = [1, 1, 1]} : vector<1x16x128xbf16> to vector<1x16x32xbf16>
    "tpu.trace_start"() <{level = 10 : i32, message = "bqe,bke->bqk"}> : () -> ()
    %cst_159 = arith.constant dense<0.000000e+00> : vector<1x8x16xf32>
    %489 = tpu.matmul %487, %488, %cst_159 {dimension_numbers = #tpu.dot_dimension_numbers<[2], [2], [1], [1], [0, 0, 0, 1, 1, 1], [0], [0]>} : vector<1x8x32xbf16>, vector<1x16x32xbf16>, vector<1x8x16xf32> -> vector<1x8x16xf32>
    "tpu.trace_stop"() : () -> ()
    %cst_160 = arith.constant dense<0xFF800000> : vector<1x8xf32>
    %490 = vector.multi_reduction <maximumf>, %489, %cst_160 [2] : vector<1x8x16xf32> to vector<1x8xf32>
    %491 = vector.shape_cast %490 : vector<1x8xf32> to vector<1x8x1xf32>
    %492 = vector.broadcast %491 : vector<1x8x1xf32> to vector<1x8x16xf32>
    %493 = arith.subf %489, %492 : vector<1x8x16xf32>
    %494 = math.exp %493 : vector<1x8x16xf32>
    %cst_161 = arith.constant dense<0.000000e+00> : vector<1x8xf32>
    %495 = vector.multi_reduction <add>, %494, %cst_161 [2] : vector<1x8x16xf32> to vector<1x8xf32>
    %496 = vector.shape_cast %495 : vector<1x8xf32> to vector<1x8x1xf32>
    %497 = vector.broadcast %496 : vector<1x8x1xf32> to vector<1x8x16xf32>
    %498 = arith.divf %494, %497 : vector<1x8x16xf32>
    %499 = arith.truncf %498 : vector<1x8x16xf32> to vector<1x8x16xbf16>
    %500 = vector.extract_strided_slice %441 {offsets = [0, 0, 96], sizes = [1, 16, 32], strides = [1, 1, 1]} : vector<1x16x128xbf16> to vector<1x16x32xbf16>
    "tpu.trace_start"() <{level = 10 : i32, message = "bqk,bke->bqe"}> : () -> ()
    %cst_162 = arith.constant dense<0.000000e+00> : vector<1x8x32xf32>
    %501 = tpu.matmul %499, %500, %cst_162 {dimension_numbers = #tpu.dot_dimension_numbers<[2], [1], [1], [2], [0, 0, 0, 1, 1, 2], [0], [0]>} : vector<1x8x16xbf16>, vector<1x16x32xbf16>, vector<1x8x32xf32> -> vector<1x8x32xf32>
    "tpu.trace_stop"() : () -> ()
    %502 = tpu.concatenate %456, %471, %486, %501 in 2 : vector<1x8x32xf32>, vector<1x8x32xf32>, vector<1x8x32xf32>, vector<1x8x32xf32> -> vector<1x8x128xf32>
    %503 = vector.shape_cast %502 : vector<1x8x128xf32> to vector<8x128xf32>
    %504 = arith.truncf %503 : vector<8x128xf32> to vector<8x128xbf16>
    %c0_163 = arith.constant 0 : index
    %c0_164 = arith.constant 0 : index
    %505 = vector.load %arg19[%c0_163, %c0_164] : memref<128x128xbf16, #tpu.memory_space<vmem>>, vector<128x128xbf16>
    %cst_165 = arith.constant dense<0.000000e+00> : vector<8x128xf32>
    %506 = tpu.matmul %504, %505, %cst_165 {dimension_numbers = #tpu.dot_dimension_numbers<[1], [0], [0], [1], [0, 0, 1, 1], [], []>} : vector<8x128xbf16>, vector<128x128xbf16>, vector<8x128xf32> -> vector<8x128xf32>
    %c27 = arith.constant 27 : index
    %c0_166 = arith.constant 0 : index
    %507 = vector.load %arg3[%c27, %c0_166] : memref<28x128xf32, #tpu.memory_space<vmem>>, vector<1x128xf32>
    %508 = vector.broadcast %507 : vector<1x128xf32> to vector<8x128xf32>
    %509 = arith.addf %506, %508 : vector<8x128xf32>
    %510 = vector.shape_cast %509 : vector<8x128xf32> to vector<1x8x128xf32>
    %511 = arith.addf %510, %161 : vector<1x8x128xf32>
    %c0_167 = arith.constant 0 : index
    %c0_168 = arith.constant 0 : index
    %c0_169 = arith.constant 0 : index
    %512 = vector.load %arg20[%c0_167, %c0_168, %c0_169] : memref<1x16x128xf32, #tpu.memory_space<vmem>>, vector<1x16x128xf32>
    tpu.vector_store %arg20[%c0_167, %c0_168, %c0_169], %416 {strides = array<i32>} : memref<1x16x128xf32, #tpu.memory_space<vmem>>, vector<1x16x128xf32>,
    %c0_170 = arith.constant 0 : index
    %c0_171 = arith.constant 0 : index
    %c0_172 = arith.constant 0 : index
    %513 = vector.load %arg21[%c0_170, %c0_171, %c0_172] : memref<1x8x128xf32, #tpu.memory_space<vmem>>, vector<1x8x128xf32>
    tpu.vector_store %arg21[%c0_170, %c0_171, %c0_172], %511 {strides = array<i32>} : memref<1x8x128xf32, #tpu.memory_space<vmem>>, vector<1x8x128xf32>,
    return
  }
  func.func @transform_0(%arg0: i32) -> (i32, i32, i32) {
    %c0_i32 = arith.constant 0 : i32
    %c0_i32_0 = arith.constant 0 : i32
    %c0_i32_1 = arith.constant 0 : i32
    return %arg0, %c0_i32, %c0_i32_0 : i32, i32, i32
  }
  func.func @transform_1(%arg0: i32) -> (i32, i32, i32) {
    %c0_i32 = arith.constant 0 : i32
    %c0_i32_0 = arith.constant 0 : i32
    %c0_i32_1 = arith.constant 0 : i32
    return %arg0, %c0_i32, %c0_i32_0 : i32, i32, i32
  }
  func.func @transform_2(%arg0: i32) -> (i32, i32) {
    %c0_i32 = arith.constant 0 : i32
    %c0_i32_0 = arith.constant 0 : i32
    %c0_i32_1 = arith.constant 0 : i32
    return %c0_i32, %c0_i32_0 : i32, i32
  }
  func.func @transform_3(%arg0: i32) -> (i32, i32) {
    %c0_i32 = arith.constant 0 : i32
    %c0_i32_0 = arith.constant 0 : i32
    %c0_i32_1 = arith.constant 0 : i32
    return %c0_i32, %c0_i32_0 : i32, i32
  }
  func.func @transform_4(%arg0: i32) -> (i32, i32) {
    %c0_i32 = arith.constant 0 : i32
    %c0_i32_0 = arith.constant 0 : i32
    %c0_i32_1 = arith.constant 0 : i32
    return %c0_i32, %c0_i32_0 : i32, i32
  }
  func.func @transform_5(%arg0: i32) -> (i32, i32) {
    %c0_i32 = arith.constant 0 : i32
    %c0_i32_0 = arith.constant 0 : i32
    %c0_i32_1 = arith.constant 0 : i32
    return %c0_i32, %c0_i32_0 : i32, i32
  }
  func.func @transform_6(%arg0: i32) -> (i32, i32) {
    %c0_i32 = arith.constant 0 : i32
    %c0_i32_0 = arith.constant 0 : i32
    %c0_i32_1 = arith.constant 0 : i32
    return %c0_i32, %c0_i32_0 : i32, i32
  }
  func.func @transform_7(%arg0: i32) -> (i32, i32) {
    %c0_i32 = arith.constant 0 : i32
    %c0_i32_0 = arith.constant 0 : i32
    %c0_i32_1 = arith.constant 0 : i32
    return %c0_i32, %c0_i32_0 : i32, i32
  }
  func.func @transform_8(%arg0: i32) -> (i32, i32) {
    %c0_i32 = arith.constant 0 : i32
    %c0_i32_0 = arith.constant 0 : i32
    %c0_i32_1 = arith.constant 0 : i32
    return %c0_i32, %c0_i32_0 : i32, i32
  }
  func.func @transform_9(%arg0: i32) -> (i32, i32) {
    %c0_i32 = arith.constant 0 : i32
    %c0_i32_0 = arith.constant 0 : i32
    %c0_i32_1 = arith.constant 0 : i32
    return %c0_i32, %c0_i32_0 : i32, i32
  }
  func.func @transform_10(%arg0: i32) -> (i32, i32) {
    %c0_i32 = arith.constant 0 : i32
    %c0_i32_0 = arith.constant 0 : i32
    %c0_i32_1 = arith.constant 0 : i32
    return %c0_i32, %c0_i32_0 : i32, i32
  }
  func.func @transform_11(%arg0: i32) -> (i32, i32) {
    %c0_i32 = arith.constant 0 : i32
    %c0_i32_0 = arith.constant 0 : i32
    %c0_i32_1 = arith.constant 0 : i32
    return %c0_i32, %c0_i32_0 : i32, i32
  }
  func.func @transform_12(%arg0: i32) -> (i32, i32) {
    %c0_i32 = arith.constant 0 : i32
    %c0_i32_0 = arith.constant 0 : i32
    %c0_i32_1 = arith.constant 0 : i32
    return %c0_i32, %c0_i32_0 : i32, i32
  }
  func.func @transform_13(%arg0: i32) -> (i32, i32) {
    %c0_i32 = arith.constant 0 : i32
    %c0_i32_0 = arith.constant 0 : i32
    %c0_i32_1 = arith.constant 0 : i32
    return %c0_i32, %c0_i32_0 : i32, i32
  }
  func.func @transform_14(%arg0: i32) -> (i32, i32) {
    %c0_i32 = arith.constant 0 : i32
    %c0_i32_0 = arith.constant 0 : i32
    %c0_i32_1 = arith.constant 0 : i32
    return %c0_i32, %c0_i32_0 : i32, i32
  }
  func.func @transform_15(%arg0: i32) -> (i32, i32) {
    %c0_i32 = arith.constant 0 : i32
    %c0_i32_0 = arith.constant 0 : i32
    %c0_i32_1 = arith.constant 0 : i32
    return %c0_i32, %c0_i32_0 : i32, i32
  }
  func.func @transform_16(%arg0: i32) -> (i32, i32) {
    %c0_i32 = arith.constant 0 : i32
    %c0_i32_0 = arith.constant 0 : i32
    %c0_i32_1 = arith.constant 0 : i32
    return %c0_i32, %c0_i32_0 : i32, i32
  }
  func.func @transform_17(%arg0: i32) -> (i32, i32) {
    %c0_i32 = arith.constant 0 : i32
    %c0_i32_0 = arith.constant 0 : i32
    %c0_i32_1 = arith.constant 0 : i32
    return %c0_i32, %c0_i32_0 : i32, i32
  }
  func.func @transform_18(%arg0: i32) -> (i32, i32) {
    %c0_i32 = arith.constant 0 : i32
    %c0_i32_0 = arith.constant 0 : i32
    %c0_i32_1 = arith.constant 0 : i32
    return %c0_i32, %c0_i32_0 : i32, i32
  }
  func.func @transform_19(%arg0: i32) -> (i32, i32, i32) {
    %c0_i32 = arith.constant 0 : i32
    %c0_i32_0 = arith.constant 0 : i32
    %c0_i32_1 = arith.constant 0 : i32
    return %arg0, %c0_i32, %c0_i32_0 : i32, i32, i32
  }
  func.func @transform_20(%arg0: i32) -> (i32, i32, i32) {
    %c0_i32 = arith.constant 0 : i32
    %c0_i32_0 = arith.constant 0 : i32
    %c0_i32_1 = arith.constant 0 : i32
    return %arg0, %c0_i32, %c0_i32_0 : i32, i32, i32
  }
}

</mosaic_0001>

<llo_original>
// kernel: frame_qa_reason_forward.1
$region0: #{frame_qa_reason_forward.1}
  #allocation0 [shape = 'u32[]', space=smem, size = 0x4, offset = 0x4, fixed_abs, tag = 'smem constant byte address 0x4 - core index']
  #allocation1 [shape = 'u32[72,128]{1,0:T(1,128)}', space=vmem, size = 0x9000, scoped, tag = 'internal scratch']
  %s0 = inlined_call_operand.vmem [shape: f32[2,16,128], index: 0, kind: input, shape index: {}]
  %s1 = inlined_call_operand.vmem [shape: f32[2,8,128], index: 1, kind: input, shape index: {}]
  %s2 = inlined_call_operand.vmem [shape: f32[28,128], index: 2, kind: input, shape index: {}]
  %s3 = inlined_call_operand.vmem [shape: bf16[128,128], index: 3, kind: input, shape index: {}]
  %s4 = inlined_call_operand.vmem [shape: bf16[128,256], index: 4, kind: input, shape index: {}]
  %s5 = inlined_call_operand.vmem [shape: bf16[128,128], index: 5, kind: input, shape index: {}]
  %s6 = inlined_call_operand.vmem [shape: bf16[128,128], index: 6, kind: input, shape index: {}]
  %s7 = inlined_call_operand.vmem [shape: bf16[128,128], index: 7, kind: input, shape index: {}]
  %s8 = inlined_call_operand.vmem [shape: bf16[128,128], index: 8, kind: input, shape index: {}]
  %s9 = inlined_call_operand.vmem [shape: bf16[128,256], index: 9, kind: input, shape index: {}]
  %s10 = inlined_call_operand.vmem [shape: bf16[128,128], index: 10, kind: input, shape index: {}]
  %s11 = inlined_call_operand.vmem [shape: bf16[128,128], index: 11, kind: input, shape index: {}]
  %s12 = inlined_call_operand.vmem [shape: bf16[128,128], index: 12, kind: input, shape index: {}]
  %s13 = inlined_call_operand.vmem [shape: bf16[128,128], index: 13, kind: input, shape index: {}]
  %s14 = inlined_call_operand.vmem [shape: bf16[128,256], index: 14, kind: input, shape index: {}]
  %s15 = inlined_call_operand.vmem [shape: bf16[128,128], index: 15, kind: input, shape index: {}]
  %s16 = inlined_call_operand.vmem [shape: bf16[128,128], index: 16, kind: input, shape index: {}]
  %s17 = inlined_call_operand.vmem [shape: bf16[128,256], index: 17, kind: input, shape index: {}]
  %s18 = inlined_call_operand.vmem [shape: bf16[128,128], index: 18, kind: input, shape index: {}]
  %s19 = inlined_call_operand.hbm [shape: f32[2,16,128], index: 19, kind: output, shape index: {0}]
  %s20 = inlined_call_operand.hbm [shape: f32[2,8,128], index: 20, kind: output, shape index: {1}]
  %21 = xla_tuple %s19, %s20
  %s22 = sld [smem:[#allocation0]]
  $region117: #{frame_qa_reason_forward.1} parent=0
    _
  %s24 = ssub.s32 1, %s22
  %s25 = scalar_select 0, %s24, %s22
  $region1: #{frame_qa_reason_forward.1} parent=0
    #allocation2 [shape = 'u8[16384]{0}', space=vmem, size = 0x4000, scoped, tag = 'output window, operand 0']
    #allocation3 [shape = 's32[2]{0}', space=sflag, size = 0x8, scoped, tag = 'scoped memory for frame_qa_reason_forward.1']
    #allocation4 [shape = 'u8[8192]{0}', space=vmem, size = 0x2000, scoped, tag = 'output window, operand 1']
    #allocation5 [shape = 's32[2]{0}', space=sflag, size = 0x8, scoped, tag = 'scoped memory for frame_qa_reason_forward.1']
    %26 = vsyncpa [#allocation3], 0
    %s27 = scalar_lea.sflag [#allocation3], 1
    %28 = vsyncpa %s27, 0
    %29 = vsyncpa [#allocation5], 0
    %s30 = scalar_lea.sflag [#allocation5], 1
    %31 = vsyncpa %s30, 0
    loop: start=0, step=1, limit=4
    $region2: #{frame_qa_reason_forward.1} parent=1 // loop_pre_header
      _
    $region3: #{frame_qa_reason_forward.1} parent=1 // loop_header
      %s33 = sphi 0, %s37
      %p34 = scmp.ge.s32.totalorder %s33, 4
      %s43 = sphi 0, %s45
      %s46 = sphi 0, %s43
      %s47 = sphi 0, %s46
      %s63 = sphi 0, %s47
      %s69 = sphi 0, %s71
      %s72 = sphi 0, %s69
      %s73 = sphi 0, %s72
      %s89 = sphi 0, %s73
      %s93 = sphi 0, %s93
      %s95 = sphi 0, %s93
      %s96 = sphi 0, %s95
      %s110 = sphi 0, %s96
      %s114 = sphi 0, %s114
      %s116 = sphi 0, %s114
      %s117 = sphi 0, %s116
      %s131 = sphi 0, %s117
      %s135 = sphi 0, %s135
      %s137 = sphi 0, %s135
      %s138 = sphi 0, %s137
      %s152 = sphi 0, %s138
      %s156 = sphi 0, %s156
      %s158 = sphi 0, %s156
      %s159 = sphi 0, %s158
      %s173 = sphi 0, %s159
      %s177 = sphi 0, %s177
      %s179 = sphi 0, %s177
      %s180 = sphi 0, %s179
      %s194 = sphi 0, %s180
      %s198 = sphi 0, %s198
      %s200 = sphi 0, %s198
      %s201 = sphi 0, %s200
      %s215 = sphi 0, %s201
      %s219 = sphi 0, %s219
      %s221 = sphi 0, %s219
      %s222 = sphi 0, %s221
      %s236 = sphi 0, %s222
      %s240 = sphi 0, %s240
      %s242 = sphi 0, %s240
      %s243 = sphi 0, %s242
      %s257 = sphi 0, %s243
      %s261 = sphi 0, %s261
      %s263 = sphi 0, %s261
      %s264 = sphi 0, %s263
      %s278 = sphi 0, %s264
      %s282 = sphi 0, %s282
      %s284 = sphi 0, %s282
      %s285 = sphi 0, %s284
      %s299 = sphi 0, %s285
      %s303 = sphi 0, %s303
      %s305 = sphi 0, %s303
      %s306 = sphi 0, %s305
      %s320 = sphi 0, %s306
      %s324 = sphi 0, %s324
      %s326 = sphi 0, %s324
      %s327 = sphi 0, %s326
      %s341 = sphi 0, %s327
      %s345 = sphi 0, %s345
      %s347 = sphi 0, %s345
      %s348 = sphi 0, %s347
      %s362 = sphi 0, %s348
      %s366 = sphi 0, %s366
      %s368 = sphi 0, %s366
      %s369 = sphi 0, %s368
      %s383 = sphi 0, %s369
      %s387 = sphi 0, %s387
      %s389 = sphi 0, %s387
      %s390 = sphi 0, %s389
      %s404 = sphi 0, %s390
      %s408 = sphi 0, %s408
      %s410 = sphi 0, %s408
      %s411 = sphi 0, %s410
      %s425 = sphi 0, %s411
      %s429 = sphi 0, %s429
      %s431 = sphi 0, %s429
      %s432 = sphi 0, %s431
      %s446 = sphi 0, %s432
      %s452 = sphi 0, %s454
      %s455 = sphi 0, %s452
      %s456 = sphi 0, %s455
      %s472 = sphi 0, %s456
      %s478 = sphi 0, %s480
      %s481 = sphi 0, %s478
      %s482 = sphi 0, %s481
      %s498 = sphi 0, %s482
    $region4: #{frame_qa_reason_forward.1} parent=1 // loop_header_branch
      %36 = sbr.rel (%p34) target = $region8
    $region5: #{frame_qa_reason_forward.1} parent=1 // loop_body
      %s38 = ssub.s32 %s33, 1
      %s39 = ssub.s32 %s33, 2
      %s40 = sadd.s32 %s33, 1
      %s41 = ssub.s32 %s33, %s40
      %p42 = scmp.eq.s32.totalorder %s41, 0
      %s44 = sadd.s32 %s43, 1
      %s45 = scalar_select %p42, %s43, %s44
      %p48 = pneg %p42
      %p49 = scmp.eq.s32.totalorder %s33, 1
      %p50 = por %p48, %p49
      %p51 = scmp.ne.s32.totalorder %s43, %s46
      %p52 = scmp.eq.s32.totalorder %s33, 0
      %p53 = por %p51, %p52
      %p54 = scmp.ne.s32.totalorder %s43, %s46
      %p55 = scmp.eq.s32.totalorder %s38, 1
      %p56 = por %p54, %p55
      %p57 = scmp.ne.s32.totalorder %s46, %s47
      %p58 = scmp.eq.s32.totalorder %s38, 0
      %p59 = por %p57, %p58
      %p60 = scmp.ne.s32.totalorder %s46, %s47
      %p61 = scmp.eq.s32.totalorder %s39, 1
      %p62 = por %p60, %p61
      %p64 = scmp.ne.s32.totalorder %s47, %s63
      %p65 = scmp.eq.s32.totalorder %s39, 0
      %p66 = por %p64, %p65
      %s67 = ssub.s32 %s33, %s40
      %p68 = scmp.eq.s32.totalorder %s67, 0
      %s70 = sadd.s32 %s69, 1
      %s71 = scalar_select %p68, %s69, %s70
      %p74 = pneg %p68
      %p75 = scmp.eq.s32.totalorder %s33, 1
      %p76 = por %p74, %p75
      %p77 = scmp.ne.s32.totalorder %s69, %s72
      %p78 = scmp.eq.s32.totalorder %s33, 0
      %p79 = por %p77, %p78
      %p80 = scmp.ne.s32.totalorder %s69, %s72
      %p81 = scmp.eq.s32.totalorder %s38, 1
      %p82 = por %p80, %p81
      %p83 = scmp.ne.s32.totalorder %s72, %s73
      %p84 = scmp.eq.s32.totalorder %s38, 0
      %p85 = por %p83, %p84
      %p86 = scmp.ne.s32.totalorder %s72, %s73
      %p87 = scmp.eq.s32.totalorder %s39, 1
      %p88 = por %p86, %p87
      %p90 = scmp.ne.s32.totalorder %s73, %s89
      %p91 = scmp.eq.s32.totalorder %s39, 0
      %p92 = por %p90, %p91
      %s94 = sadd.s32 %s93, 1
      %p97 = scmp.eq.s32.totalorder %s33, 1
      %p98 = scmp.ne.s32.totalorder %s93, %s95
      %p99 = scmp.eq.s32.totalorder %s33, 0
      %p100 = por %p98, %p99
      %p101 = scmp.ne.s32.totalorder %s93, %s95
      %p102 = scmp.eq.s32.totalorder %s38, 1
      %p103 = por %p101, %p102
      %p104 = scmp.ne.s32.totalorder %s95, %s96
      %p105 = scmp.eq.s32.totalorder %s38, 0
      %p106 = por %p104, %p105
      %p107 = scmp.ne.s32.totalorder %s95, %s96
      %p108 = scmp.eq.s32.totalorder %s39, 1
      %p109 = por %p107, %p108
      %p111 = scmp.ne.s32.totalorder %s96, %s110
      %p112 = scmp.eq.s32.totalorder %s39, 0
      %p113 = por %p111, %p112
      %s115 = sadd.s32 %s114, 1
      %p118 = scmp.eq.s32.totalorder %s33, 1
      %p119 = scmp.ne.s32.totalorder %s114, %s116
      %p120 = scmp.eq.s32.totalorder %s33, 0
      %p121 = por %p119, %p120
      %p122 = scmp.ne.s32.totalorder %s114, %s116
      %p123 = scmp.eq.s32.totalorder %s38, 1
      %p124 = por %p122, %p123
      %p125 = scmp.ne.s32.totalorder %s116, %s117
      %p126 = scmp.eq.s32.totalorder %s38, 0
      %p127 = por %p125, %p126
      %p128 = scmp.ne.s32.totalorder %s116, %s117
      %p129 = scmp.eq.s32.totalorder %s39, 1
      %p130 = por %p128, %p129
      %p132 = scmp.ne.s32.totalorder %s117, %s131
      %p133 = scmp.eq.s32.totalorder %s39, 0
      %p134 = por %p132, %p133
      %s136 = sadd.s32 %s135, 1
      %p139 = scmp.eq.s32.totalorder %s33, 1
      %p140 = scmp.ne.s32.totalorder %s135, %s137
      %p141 = scmp.eq.s32.totalorder %s33, 0
      %p142 = por %p140, %p141
      %p143 = scmp.ne.s32.totalorder %s135, %s137
      %p144 = scmp.eq.s32.totalorder %s38, 1
      %p145 = por %p143, %p144
      %p146 = scmp.ne.s32.totalorder %s137, %s138
      %p147 = scmp.eq.s32.totalorder %s38, 0
      %p148 = por %p146, %p147
      %p149 = scmp.ne.s32.totalorder %s137, %s138
      %p150 = scmp.eq.s32.totalorder %s39, 1
      %p151 = por %p149, %p150
      %p153 = scmp.ne.s32.totalorder %s138, %s152
      %p154 = scmp.eq.s32.totalorder %s39, 0
      %p155 = por %p153, %p154
      %s157 = sadd.s32 %s156, 1
      %p160 = scmp.eq.s32.totalorder %s33, 1
      %p161 = scmp.ne.s32.totalorder %s156, %s158
      %p162 = scmp.eq.s32.totalorder %s33, 0
      %p163 = por %p161, %p162
      %p164 = scmp.ne.s32.totalorder %s156, %s158
      %p165 = scmp.eq.s32.totalorder %s38, 1
      %p166 = por %p164, %p165
      %p167 = scmp.ne.s32.totalorder %s158, %s159
      %p168 = scmp.eq.s32.totalorder %s38, 0
      %p169 = por %p167, %p168
      %p170 = scmp.ne.s32.totalorder %s158, %s159
      %p171 = scmp.eq.s32.totalorder %s39, 1
      %p172 = por %p170, %p171
      %p174 = scmp.ne.s32.totalorder %s159, %s173
      %p175 = scmp.eq.s32.totalorder %s39, 0
      %p176 = por %p174, %p175
      %s178 = sadd.s32 %s177, 1
      %p181 = scmp.eq.s32.totalorder %s33, 1
      %p182 = scmp.ne.s32.totalorder %s177, %s179
      %p183 = scmp.eq.s32.totalorder %s33, 0
      %p184 = por %p182, %p183
      %p185 = scmp.ne.s32.totalorder %s177, %s179
      %p186 = scmp.eq.s32.totalorder %s38, 1
      %p187 = por %p185, %p186
      %p188 = scmp.ne.s32.totalorder %s179, %s180
      %p189 = scmp.eq.s32.totalorder %s38, 0
      %p190 = por %p188, %p189
      %p191 = scmp.ne.s32.totalorder %s179, %s180
      %p192 = scmp.eq.s32.totalorder %s39, 1
      %p193 = por %p191, %p192
      %p195 = scmp.ne.s32.totalorder %s180, %s194
      %p196 = scmp.eq.s32.totalorder %s39, 0
      %p197 = por %p195, %p196
      %s199 = sadd.s32 %s198, 1
      %p202 = scmp.eq.s32.totalorder %s33, 1
      %p203 = scmp.ne.s32.totalorder %s198, %s200
      %p204 = scmp.eq.s32.totalorder %s33, 0
      %p205 = por %p203, %p204
      %p206 = scmp.ne.s32.totalorder %s198, %s200
      %p207 = scmp.eq.s32.totalorder %s38, 1
      %p208 = por %p206, %p207
      %p209 = scmp.ne.s32.totalorder %s200, %s201
      %p210 = scmp.eq.s32.totalorder %s38, 0
      %p211 = por %p209, %p210
      %p212 = scmp.ne.s32.totalorder %s200, %s201
      %p213 = scmp.eq.s32.totalorder %s39, 1
      %p214 = por %p212, %p213
      %p216 = scmp.ne.s32.totalorder %s201, %s215
      %p217 = scmp.eq.s32.totalorder %s39, 0
      %p218 = por %p216, %p217
      %s220 = sadd.s32 %s219, 1
      %p223 = scmp.eq.s32.totalorder %s33, 1
      %p224 = scmp.ne.s32.totalorder %s219, %s221
      %p225 = scmp.eq.s32.totalorder %s33, 0
      %p226 = por %p224, %p225
      %p227 = scmp.ne.s32.totalorder %s219, %s221
      %p228 = scmp.eq.s32.totalorder %s38, 1
      %p229 = por %p227, %p228
      %p230 = scmp.ne.s32.totalorder %s221, %s222
      %p231 = scmp.eq.s32.totalorder %s38, 0
      %p232 = por %p230, %p231
      %p233 = scmp.ne.s32.totalorder %s221, %s222
      %p234 = scmp.eq.s32.totalorder %s39, 1
      %p235 = por %p233, %p234
      %p237 = scmp.ne.s32.totalorder %s222, %s236
      %p238 = scmp.eq.s32.totalorder %s39, 0
      %p239 = por %p237, %p238
      %s241 = sadd.s32 %s240, 1
      %p244 = scmp.eq.s32.totalorder %s33, 1
      %p245 = scmp.ne.s32.totalorder %s240, %s242
      %p246 = scmp.eq.s32.totalorder %s33, 0
      %p247 = por %p245, %p246
      %p248 = scmp.ne.s32.totalorder %s240, %s242
      %p249 = scmp.eq.s32.totalorder %s38, 1
      %p250 = por %p248, %p249
      %p251 = scmp.ne.s32.totalorder %s242, %s243
      %p252 = scmp.eq.s32.totalorder %s38, 0
      %p253 = por %p251, %p252
      %p254 = scmp.ne.s32.totalorder %s242, %s243
      %p255 = scmp.eq.s32.totalorder %s39, 1
      %p256 = por %p254, %p255
      %p258 = scmp.ne.s32.totalorder %s243, %s257
      %p259 = scmp.eq.s32.totalorder %s39, 0
      %p260 = por %p258, %p259
      %s262 = sadd.s32 %s261, 1
      %p265 = scmp.eq.s32.totalorder %s33, 1
      %p266 = scmp.ne.s32.totalorder %s261, %s263
      %p267 = scmp.eq.s32.totalorder %s33, 0
      %p268 = por %p266, %p267
      %p269 = scmp.ne.s32.totalorder %s261, %s263
      %p270 = scmp.eq.s32.totalorder %s38, 1
      %p271 = por %p269, %p270
      %p272 = scmp.ne.s32.totalorder %s263, %s264
      %p273 = scmp.eq.s32.totalorder %s38, 0
      %p274 = por %p272, %p273
      %p275 = scmp.ne.s32.totalorder %s263, %s264
      %p276 = scmp.eq.s32.totalorder %s39, 1
      %p277 = por %p275, %p276
      %p279 = scmp.ne.s32.totalorder %s264, %s278
      %p280 = scmp.eq.s32.totalorder %s39, 0
      %p281 = por %p279, %p280
      %s283 = sadd.s32 %s282, 1
      %p286 = scmp.eq.s32.totalorder %s33, 1
      %p287 = scmp.ne.s32.totalorder %s282, %s284
      %p288 = scmp.eq.s32.totalorder %s33, 0
      %p289 = por %p287, %p288
      %p290 = scmp.ne.s32.totalorder %s282, %s284
      %p291 = scmp.eq.s32.totalorder %s38, 1
      %p292 = por %p290, %p291
      %p293 = scmp.ne.s32.totalorder %s284, %s285
      %p294 = scmp.eq.s32.totalorder %s38, 0
      %p295 = por %p293, %p294
      %p296 = scmp.ne.s32.totalorder %s284, %s285
      %p297 = scmp.eq.s32.totalorder %s39, 1
      %p298 = por %p296, %p297
      %p300 = scmp.ne.s32.totalorder %s285, %s299
      %p301 = scmp.eq.s32.totalorder %s39, 0
      %p302 = por %p300, %p301
      %s304 = sadd.s32 %s303, 1
      %p307 = scmp.eq.s32.totalorder %s33, 1
      %p308 = scmp.ne.s32.totalorder %s303, %s305
      %p309 = scmp.eq.s32.totalorder %s33, 0
      %p310 = por %p308, %p309
      %p311 = scmp.ne.s32.totalorder %s303, %s305
      %p312 = scmp.eq.s32.totalorder %s38, 1
      %p313 = por %p311, %p312
      %p314 = scmp.ne.s32.totalorder %s305, %s306
      %p315 = scmp.eq.s32.totalorder %s38, 0
      %p316 = por %p314, %p315
      %p317 = scmp.ne.s32.totalorder %s305, %s306
      %p318 = scmp.eq.s32.totalorder %s39, 1
      %p319 = por %p317, %p318
      %p321 = scmp.ne.s32.totalorder %s306, %s320
      %p322 = scmp.eq.s32.totalorder %s39, 0
      %p323 = por %p321, %p322
      %s325 = sadd.s32 %s324, 1
      %p328 = scmp.eq.s32.totalorder %s33, 1
      %p329 = scmp.ne.s32.totalorder %s324, %s326
      %p330 = scmp.eq.s32.totalorder %s33, 0
      %p331 = por %p329, %p330
      %p332 = scmp.ne.s32.totalorder %s324, %s326
      %p333 = scmp.eq.s32.totalorder %s38, 1
      %p334 = por %p332, %p333
      %p335 = scmp.ne.s32.totalorder %s326, %s327
      %p336 = scmp.eq.s32.totalorder %s38, 0
      %p337 = por %p335, %p336
      %p338 = scmp.ne.s32.totalorder %s326, %s327
      %p339 = scmp.eq.s32.totalorder %s39, 1
      %p340 = por %p338, %p339
      %p342 = scmp.ne.s32.totalorder %s327, %s341
      %p343 = scmp.eq.s32.totalorder %s39, 0
      %p344 = por %p342, %p343
      %s346 = sadd.s32 %s345, 1
      %p349 = scmp.eq.s32.totalorder %s33, 1
      %p350 = scmp.ne.s32.totalorder %s345, %s347
      %p351 = scmp.eq.s32.totalorder %s33, 0
      %p352 = por %p350, %p351
      %p353 = scmp.ne.s32.totalorder %s345, %s347
      %p354 = scmp.eq.s32.totalorder %s38, 1
      %p355 = por %p353, %p354
      %p356 = scmp.ne.s32.totalorder %s347, %s348
      %p357 = scmp.eq.s32.totalorder %s38, 0
      %p358 = por %p356, %p357
      %p359 = scmp.ne.s32.totalorder %s347, %s348
      %p360 = scmp.eq.s32.totalorder %s39, 1
      %p361 = por %p359, %p360
      %p363 = scmp.ne.s32.totalorder %s348, %s362
      %p364 = scmp.eq.s32.totalorder %s39, 0
      %p365 = por %p363, %p364
      %s367 = sadd.s32 %s366, 1
      %p370 = scmp.eq.s32.totalorder %s33, 1
      %p371 = scmp.ne.s32.totalorder %s366, %s368
      %p372 = scmp.eq.s32.totalorder %s33, 0
      %p373 = por %p371, %p372
      %p374 = scmp.ne.s32.totalorder %s366, %s368
      %p375 = scmp.eq.s32.totalorder %s38, 1
      %p376 = por %p374, %p375
      %p377 = scmp.ne.s32.totalorder %s368, %s369
      %p378 = scmp.eq.s32.totalorder %s38, 0
      %p379 = por %p377, %p378
      %p380 = scmp.ne.s32.totalorder %s368, %s369
      %p381 = scmp.eq.s32.totalorder %s39, 1
      %p382 = por %p380, %p381
      %p384 = scmp.ne.s32.totalorder %s369, %s383
      %p385 = scmp.eq.s32.totalorder %s39, 0
      %p386 = por %p384, %p385
      %s388 = sadd.s32 %s387, 1
      %p391 = scmp.eq.s32.totalorder %s33, 1
      %p392 = scmp.ne.s32.totalorder %s387, %s389
      %p393 = scmp.eq.s32.totalorder %s33, 0
      %p394 = por %p392, %p393
      %p395 = scmp.ne.s32.totalorder %s387, %s389
      %p396 = scmp.eq.s32.totalorder %s38, 1
      %p397 = por %p395, %p396
      %p398 = scmp.ne.s32.totalorder %s389, %s390
      %p399 = scmp.eq.s32.totalorder %s38, 0
      %p400 = por %p398, %p399
      %p401 = scmp.ne.s32.totalorder %s389, %s390
      %p402 = scmp.eq.s32.totalorder %s39, 1
      %p403 = por %p401, %p402
      %p405 = scmp.ne.s32.totalorder %s390, %s404
      %p406 = scmp.eq.s32.totalorder %s39, 0
      %p407 = por %p405, %p406
      %s409 = sadd.s32 %s408, 1
      %p412 = scmp.eq.s32.totalorder %s33, 1
      %p413 = scmp.ne.s32.totalorder %s408, %s410
      %p414 = scmp.eq.s32.totalorder %s33, 0
      %p415 = por %p413, %p414
      %p416 = scmp.ne.s32.totalorder %s408, %s410
      %p417 = scmp.eq.s32.totalorder %s38, 1
      %p418 = por %p416, %p417
      %p419 = scmp.ne.s32.totalorder %s410, %s411
      %p420 = scmp.eq.s32.totalorder %s38, 0
      %p421 = por %p419, %p420
      %p422 = scmp.ne.s32.totalorder %s410, %s411
      %p423 = scmp.eq.s32.totalorder %s39, 1
      %p424 = por %p422, %p423
      %p426 = scmp.ne.s32.totalorder %s411, %s425
      %p427 = scmp.eq.s32.totalorder %s39, 0
      %p428 = por %p426, %p427
      %s430 = sadd.s32 %s429, 1
      %p433 = scmp.eq.s32.totalorder %s33, 1
      %p434 = scmp.ne.s32.totalorder %s429, %s431
      %p435 = scmp.eq.s32.totalorder %s33, 0
      %p436 = por %p434, %p435
      %p437 = scmp.ne.s32.totalorder %s429, %s431
      %p438 = scmp.eq.s32.totalorder %s38, 1
      %p439 = por %p437, %p438
      %p440 = scmp.ne.s32.totalorder %s431, %s432
      %p441 = scmp.eq.s32.totalorder %s38, 0
      %p442 = por %p440, %p441
      %p443 = scmp.ne.s32.totalorder %s431, %s432
      %p444 = scmp.eq.s32.totalorder %s39, 1
      %p445 = por %p443, %p444
      %p447 = scmp.ne.s32.totalorder %s432, %s446
      %p448 = scmp.eq.s32.totalorder %s39, 0
      %p449 = por %p447, %p448
      %s450 = ssub.s32 %s33, %s40
      %p451 = scmp.eq.s32.totalorder %s450, 0
      %s453 = sadd.s32 %s452, 1
      %s454 = scalar_select %p451, %s452, %s453
      %p457 = pneg %p451
      %p458 = scmp.eq.s32.totalorder %s33, 1
      %p459 = por %p457, %p458
      %p460 = scmp.ne.s32.totalorder %s452, %s455
      %p461 = scmp.eq.s32.totalorder %s33, 0
      %p462 = por %p460, %p461
      %p463 = scmp.ne.s32.totalorder %s452, %s455
      %p464 = scmp.eq.s32.totalorder %s38, 1
      %p465 = por %p463, %p464
      %p466 = scmp.ne.s32.totalorder %s455, %s456
      %p467 = scmp.eq.s32.totalorder %s38, 0
      %p468 = por %p466, %p467
      %p469 = scmp.ne.s32.totalorder %s455, %s456
      %p470 = scmp.eq.s32.totalorder %s39, 1
      %p471 = por %p469, %p470
      %p473 = scmp.ne.s32.totalorder %s456, %s472
      %p474 = scmp.eq.s32.totalorder %s39, 0
      %p475 = por %p473, %p474
      %s476 = ssub.s32 %s33, %s40
      %p477 = scmp.eq.s32.totalorder %s476, 0
      %s479 = sadd.s32 %s478, 1
      %s480 = scalar_select %p477, %s478, %s479
      %p483 = pneg %p477
      %p484 = scmp.eq.s32.totalorder %s33, 1
      %p485 = por %p483, %p484
      %p486 = scmp.ne.s32.totalorder %s478, %s481
      %p487 = scmp.eq.s32.totalorder %s33, 0
      %p488 = por %p486, %p487
      %p489 = scmp.ne.s32.totalorder %s478, %s481
      %p490 = scmp.eq.s32.totalorder %s38, 1
      %p491 = por %p489, %p490
      %p492 = scmp.ne.s32.totalorder %s481, %s482
      %p493 = scmp.eq.s32.totalorder %s38, 0
      %p494 = por %p492, %p493
      %p495 = scmp.ne.s32.totalorder %s481, %s482
      %p496 = scmp.eq.s32.totalorder %s39, 1
      %p497 = por %p495, %p496
      %p499 = scmp.ne.s32.totalorder %s482, %s498
      %p500 = scmp.eq.s32.totalorder %s39, 0
      %p501 = por %p499, %p500
      %p502 = scmp.le.s32.totalorder 1, %s33
      %p503 = scmp.lt.s32.totalorder %s33, 3
      %p504 = pnand %p502, %p503
      %p505 = pneg %p504
      // Predicated region
      $region9: #{frame_qa_reason_forward.1} parent=5 // pred_check
        _
      $region10: #{frame_qa_reason_forward.1} parent=5 // pred_check_branch
        %507 = sbr.rel (%p504) target = $region12
      $region11: #{frame_qa_reason_forward.1} parent=5 // pred_region
        %s508 = ssub.s32 %s33, 1
        // Predicated region
        $region13: #{frame_qa_reason_forward.1} parent=11 // pred_check
          %p509 = pneg %p106
        $region14: #{frame_qa_reason_forward.1} parent=11 // pred_check_branch
          %511 = sbr.rel (%p509) target = $region16
        $region15: #{frame_qa_reason_forward.1} parent=11 // pred_region
          _
        $region16: #{frame_qa_reason_forward.1} parent=11 // pred_fallthru
          _
        // Predicated region
        $region17: #{frame_qa_reason_forward.1} parent=11 // pred_check
          %p512 = pneg %p127
        $region18: #{frame_qa_reason_forward.1} parent=11 // pred_check_branch
          %514 = sbr.rel (%p512) target = $region20
        $region19: #{frame_qa_reason_forward.1} parent=11 // pred_region
          _
        $region20: #{frame_qa_reason_forward.1} parent=11 // pred_fallthru
          _
        // Predicated region
        $region21: #{frame_qa_reason_forward.1} parent=11 // pred_check
          %p515 = pneg %p148
        $region22: #{frame_qa_reason_forward.1} parent=11 // pred_check_branch
          %517 = sbr.rel (%p515) target = $region24
        $region23: #{frame_qa_reason_forward.1} parent=11 // pred_region
          _
        $region24: #{frame_qa_reason_forward.1} parent=11 // pred_fallthru
          _
        // Predicated region
        $region25: #{frame_qa_reason_forward.1} parent=11 // pred_check
          %p518 = pneg %p169
        $region26: #{frame_qa_reason_forward.1} parent=11 // pred_check_branch
          %520 = sbr.rel (%p518) target = $region28
        $region27: #{frame_qa_reason_forward.1} parent=11 // pred_region
          _
        $region28: #{frame_qa_reason_forward.1} parent=11 // pred_fallthru
          _
        // Predicated region
        $region29: #{frame_qa_reason_forward.1} parent=11 // pred_check
          %p521 = pneg %p190
        $region30: #{frame_qa_reason_forward.1} parent=11 // pred_check_branch
          %523 = sbr.rel (%p521) target = $region32
        $region31: #{frame_qa_reason_forward.1} parent=11 // pred_region
          _
        $region32: #{frame_qa_reason_forward.1} parent=11 // pred_fallthru
          _
        // Predicated region
        $region33: #{frame_qa_reason_forward.1} parent=11 // pred_check
          %p524 = pneg %p211
        $region34: #{frame_qa_reason_forward.1} parent=11 // pred_check_branch
          %526 = sbr.rel (%p524) target = $region36
        $region35: #{frame_qa_reason_forward.1} parent=11 // pred_region
          _
        $region36: #{frame_qa_reason_forward.1} parent=11 // pred_fallthru
          _
        // Predicated region
        $region37: #{frame_qa_reason_forward.1} parent=11 // pred_check
          %p527 = pneg %p232
        $region38: #{frame_qa_reason_forward.1} parent=11 // pred_check_branch
          %529 = sbr.rel (%p527) target = $region40
        $region39: #{frame_qa_reason_forward.1} parent=11 // pred_region
          _
        $region40: #{frame_qa_reason_forward.1} parent=11 // pred_fallthru
          _
        // Predicated region
        $region41: #{frame_qa_reason_forward.1} parent=11 // pred_check
          %p530 = pneg %p253
        $region42: #{frame_qa_reason_forward.1} parent=11 // pred_check_branch
          %532 = sbr.rel (%p530) target = $region44
        $region43: #{frame_qa_reason_forward.1} parent=11 // pred_region
          _
        $region44: #{frame_qa_reason_forward.1} parent=11 // pred_fallthru
          _
        // Predicated region
        $region45: #{frame_qa_reason_forward.1} parent=11 // pred_check
          %p533 = pneg %p274
        $region46: #{frame_qa_reason_forward.1} parent=11 // pred_check_branch
          %535 = sbr.rel (%p533) target = $region48
        $region47: #{frame_qa_reason_forward.1} parent=11 // pred_region
          _
        $region48: #{frame_qa_reason_forward.1} parent=11 // pred_fallthru
          _
        // Predicated region
        $region49: #{frame_qa_reason_forward.1} parent=11 // pred_check
          %p536 = pneg %p295
        $region50: #{frame_qa_reason_forward.1} parent=11 // pred_check_branch
          %538 = sbr.rel (%p536) target = $region52
        $region51: #{frame_qa_reason_forward.1} parent=11 // pred_region
          _
        $region52: #{frame_qa_reason_forward.1} parent=11 // pred_fallthru
          _
        // Predicated region
        $region53: #{frame_qa_reason_forward.1} parent=11 // pred_check
          %p539 = pneg %p316
        $region54: #{frame_qa_reason_forward.1} parent=11 // pred_check_branch
          %541 = sbr.rel (%p539) target = $region56
        $region55: #{frame_qa_reason_forward.1} parent=11 // pred_region
          _
        $region56: #{frame_qa_reason_forward.1} parent=11 // pred_fallthru
          _
        // Predicated region
        $region57: #{frame_qa_reason_forward.1} parent=11 // pred_check
          %p542 = pneg %p337
        $region58: #{frame_qa_reason_forward.1} parent=11 // pred_check_branch
          %544 = sbr.rel (%p542) target = $region60
        $region59: #{frame_qa_reason_forward.1} parent=11 // pred_region
          _
        $region60: #{frame_qa_reason_forward.1} parent=11 // pred_fallthru
          _
        // Predicated region
        $region61: #{frame_qa_reason_forward.1} parent=11 // pred_check
          %p545 = pneg %p358
        $region62: #{frame_qa_reason_forward.1} parent=11 // pred_check_branch
          %547 = sbr.rel (%p545) target = $region64
        $region63: #{frame_qa_reason_forward.1} parent=11 // pred_region
          _
        $region64: #{frame_qa_reason_forward.1} parent=11 // pred_fallthru
          _
        // Predicated region
        $region65: #{frame_qa_reason_forward.1} parent=11 // pred_check
          %p548 = pneg %p379
        $region66: #{frame_qa_reason_forward.1} parent=11 // pred_check_branch
          %550 = sbr.rel (%p548) target = $region68
        $region67: #{frame_qa_reason_forward.1} parent=11 // pred_region
          _
        $region68: #{frame_qa_reason_forward.1} parent=11 // pred_fallthru
          _
        // Predicated region
        $region69: #{frame_qa_reason_forward.1} parent=11 // pred_check
          %p551 = pneg %p400
        $region70: #{frame_qa_reason_forward.1} parent=11 // pred_check_branch
          %553 = sbr.rel (%p551) target = $region72
        $region71: #{frame_qa_reason_forward.1} parent=11 // pred_region
          _
        $region72: #{frame_qa_reason_forward.1} parent=11 // pred_fallthru
          _
        // Predicated region
        $region73: #{frame_qa_reason_forward.1} parent=11 // pred_check
          %p554 = pneg %p421
        $region74: #{frame_qa_reason_forward.1} parent=11 // pred_check_branch
          %556 = sbr.rel (%p554) target = $region76
        $region75: #{frame_qa_reason_forward.1} parent=11 // pred_region
          _
        $region76: #{frame_qa_reason_forward.1} parent=11 // pred_fallthru
          _
        // Predicated region
        $region77: #{frame_qa_reason_forward.1} parent=11 // pred_check
          %p557 = pneg %p442
        $region78: #{frame_qa_reason_forward.1} parent=11 // pred_check_branch
          %559 = sbr.rel (%p557) target = $region80
        $region79: #{frame_qa_reason_forward.1} parent=11 // pred_region
          _
        $region80: #{frame_qa_reason_forward.1} parent=11 // pred_fallthru
          _
      $region12: #{frame_qa_reason_forward.1} parent=5 // pred_fallthru
        _
      %p560 = scmp.lt.s32.totalorder %s33, 2
      // Predicated region
      $region81: #{frame_qa_reason_forward.1} parent=5 // pred_check
        %p561 = pneg %p560
      $region82: #{frame_qa_reason_forward.1} parent=5 // pred_check_branch
        %563 = sbr.rel (%p561) target = $region84
      $region83: #{frame_qa_reason_forward.1} parent=5 // pred_region
        // Predicated region
        $region85: #{frame_qa_reason_forward.1} parent=83 // pred_check
          %p564 = pneg %p53
        $region86: #{frame_qa_reason_forward.1} parent=83 // pred_check_branch
          %566 = sbr.rel (%p564) target = $region88
        $region87: #{frame_qa_reason_forward.1} parent=83 // pred_region
          %p567 = scmp.lt.s32.totalorder %s33, 1
          %s568 = scalar_select %p567, %s33, 1
          %s569 = smul.addr %s568, 2
          %s570 = smul.addr %s569, 8
          %s571 = scalar_lea.vmem %s0, %s570
        $region88: #{frame_qa_reason_forward.1} parent=83 // pred_fallthru
          _
        // Predicated region
        $region89: #{frame_qa_reason_forward.1} parent=83 // pred_check
          %p572 = pneg %p79
        $region90: #{frame_qa_reason_forward.1} parent=83 // pred_check_branch
          %574 = sbr.rel (%p572) target = $region92
        $region91: #{frame_qa_reason_forward.1} parent=83 // pred_region
          %p575 = scmp.lt.s32.totalorder %s33, 1
          %s576 = scalar_select %p575, %s33, 1
          %s577 = smul.addr %s576, 8
          %s578 = scalar_lea.vmem %s1, %s577
        $region92: #{frame_qa_reason_forward.1} parent=83 // pred_fallthru
          _
      $region84: #{frame_qa_reason_forward.1} parent=5 // pred_fallthru
        _
      %p579 = scmp.le.s32.totalorder 1, %s33
      %p580 = scmp.lt.s32.totalorder %s33, 3
      %p581 = pnand %p579, %p580
      %p582 = pneg %p581
      // Predicated region
      $region93: #{frame_qa_reason_forward.1} parent=5 // pred_check
        _
      $region94: #{frame_qa_reason_forward.1} parent=5 // pred_check_branch
        %584 = sbr.rel (%p581) target = $region96
      $region95: #{frame_qa_reason_forward.1} parent=5 // pred_region
        %s585 = ssub.s32 %s33, 1
        %p586 = scmp.lt.s32.totalorder %s38, 1
        %s587 = scalar_select %p586, %s38, 1
        %s588 = smul.addr %s587, 2
        %s589 = smul.addr %s588, 8
        %s590 = scalar_lea.vmem %s0, %s589
        %p591 = pneg %p59
        %p592 = pneg %p56
        %p593 = scmp.lt.s32.totalorder %s38, 1
        %s594 = scalar_select %p593, %s38, 1
        %s595 = smul.addr %s594, 8
        %s596 = scalar_lea.vmem %s1, %s595
        %p597 = pneg %p85
        %p598 = pneg %p82
        %p599 = pneg %p106
        %p600 = pneg %p103
        %p601 = pneg %p127
        %p602 = pneg %p124
        %p603 = pneg %p148
        %p604 = pneg %p145
        %p605 = pneg %p169
        %p606 = pneg %p166
        %p607 = pneg %p190
        %p608 = pneg %p187
        %p609 = pneg %p211
        %p610 = pneg %p208
        %p611 = pneg %p232
        %p612 = pneg %p229
        %p613 = pneg %p253
        %p614 = pneg %p250
        %p615 = pneg %p274
        %p616 = pneg %p271
        %p617 = pneg %p295
        %p618 = pneg %p292
        %p619 = pneg %p316
        %p620 = pneg %p313
        %p621 = pneg %p337
        %p622 = pneg %p334
        %p623 = pneg %p358
        %p624 = pneg %p355
        %p625 = pneg %p379
        %p626 = pneg %p376
        %p627 = pneg %p400
        %p628 = pneg %p397
        %p629 = pneg %p421
        %p630 = pneg %p418
        %p631 = pneg %p442
        %p632 = pneg %p439
        %p633 = pneg %p468
        %p634 = pneg %p465
        %s635 = sand.u32 %s455, 1
        %s636 = scalar_lea.sflag [#allocation3], %s635
        %s637 = sand.u32 %s455, 1
        %s638 = smul.addr %s637, 16
        %s639 = scalar_lea.vmem [#allocation2], %s638
        %p640 = pneg %p494
        %p641 = pneg %p491
        %s642 = sand.u32 %s481, 1
        %s643 = scalar_lea.sflag [#allocation5], %s642
        %s644 = sand.u32 %s481, 1
        %s645 = smul.addr %s644, 8
        %s646 = scalar_lea.vmem [#allocation4], %s645
        %p647 = scmp.lt.s32.totalorder %s38, 1
        %s648 = scalar_select %p647, %s38, 1
        %s649 = smul.addr %s648, 2
        %s650 = smul.addr %s649, 8
        %s651 = scalar_lea.vmem %s0, %s650
        %p652 = scmp.lt.s32.totalorder %s38, 1
        %s653 = scalar_select %p652, %s38, 1
        %s654 = smul.addr %s653, 8
        %s655 = scalar_lea.vmem %s1, %s654
        %v657 = vld [vmem:[%s651] sm:$0xff]
        %v658 = vld [vmem:[%s651 + $0x8] sm:$0xff]
        %v659 = vld [vmem:[%s655] sm:$0xff]
        %v660 = vpack.c.bf16 %v659, %v659
        %v661 = vld [vmem:[%s3] sm:$0xf]
        %v662 = vld [vmem:[%s3 + $0x4] sm:$0xf]
        %v663 = vld [vmem:[%s3 + $0x8] sm:$0xf]
        %v664 = vld [vmem:[%s3 + $0xc] sm:$0xf]
        %v665 = vld [vmem:[%s3 + $0x10] sm:$0xf]
        %v666 = vld [vmem:[%s3 + $0x14] sm:$0xf]
        %v667 = vld [vmem:[%s3 + $0x18] sm:$0xf]
        %v668 = vld [vmem:[%s3 + $0x1c] sm:$0xf]
        %v669 = vld [vmem:[%s3 + $0x20] sm:$0xf]
        %v670 = vld [vmem:[%s3 + $0x24] sm:$0xf]
        %v671 = vld [vmem:[%s3 + $0x28] sm:$0xf]
        %v672 = vld [vmem:[%s3 + $0x2c] sm:$0xf]
        %v673 = vld [vmem:[%s3 + $0x30] sm:$0xf]
        %v674 = vld [vmem:[%s3 + $0x34] sm:$0xf]
        %v675 = vld [vmem:[%s3 + $0x38] sm:$0xf]
        %v676 = vld [vmem:[%s3 + $0x3c] sm:$0xf]
        %v677 = vld [vmem:[%s2] sm:$0x1]
        %v678 = vperm.slane %v677, 0
        %v695 = vunpack.c.l.b16 %v661
        %v696 = vunpack.c.l.b16 %v662
        %v697 = vunpack.c.l.b16 %v663
        %v698 = vunpack.c.l.b16 %v664
        %v699 = vunpack.c.l.b16 %v665
        %v700 = vunpack.c.l.b16 %v666
        %v701 = vunpack.c.l.b16 %v667
        %v702 = vunpack.c.l.b16 %v668
        %v703 = vunpack.c.l.b16 %v669
        %v704 = vunpack.c.l.b16 %v670
        %v705 = vunpack.c.l.b16 %v671
        %v706 = vunpack.c.l.b16 %v672
        %v707 = vunpack.c.l.b16 %v673
        %v708 = vunpack.c.l.b16 %v674
        %v709 = vunpack.c.l.b16 %v675
        %v710 = vunpack.c.l.b16 %v676
        %v711 = vpack.c.b16 %v696, %v695
        %v712 = vpack.c.b16 %v698, %v697
        %v713 = vpack.c.b16 %v700, %v699
        %v714 = vpack.c.b16 %v702, %v701
        %v715 = vpack.c.b16 %v704, %v703
        %v716 = vpack.c.b16 %v706, %v705
        %v717 = vpack.c.b16 %v708, %v707
        %v718 = vpack.c.b16 %v710, %v709
        %727 = vmatpush.bf16.msra.mxu0 %v718
        %728 = vmatpush.bf16.msra.mxu0 %v717
        %729 = vmatpush.bf16.msra.mxu0 %v716
        %730 = vmatpush.bf16.msra.mxu0 %v715
        %731 = vmatpush.bf16.msra.mxu0 %v714
        %732 = vmatpush.bf16.msra.mxu0 %v713
        %733 = vmatpush.bf16.msra.mxu0 %v712
        %734 = vmatpush.bf16.msra.mxu0 %v711
        %735 = vmatmul.bf16.gmra.mxu0 %v660
        %v736 = vpop.f32.mrf.mxu0
        %v737 = vadd.f32 %v678, %v736
        %v738 = vpop.f32.mrf.mxu0
        %739 = vdwg.mxu0
        %v740 = vld [vmem:[%s4] sm:$0xff]
        %v741 = vld [vmem:[%s4 + $0x8] sm:$0xff]
        %v742 = vld [vmem:[%s4 + $0x10] sm:$0xff]
        %v743 = vld [vmem:[%s4 + $0x18] sm:$0xff]
        %v744 = vld [vmem:[%s4 + $0x20] sm:$0xff]
        %v745 = vld [vmem:[%s4 + $0x28] sm:$0xff]
        %v746 = vld [vmem:[%s4 + $0x30] sm:$0xff]
        %v747 = vld [vmem:[%s4 + $0x38] sm:$0xff]
        %v748 = vld [vmem:[%s4 + $0x40] sm:$0xff]
        %v749 = vld [vmem:[%s4 + $0x48] sm:$0xff]
        %v750 = vld [vmem:[%s4 + $0x50] sm:$0xff]
        %v751 = vld [vmem:[%s4 + $0x58] sm:$0xff]
        %v752 = vld [vmem:[%s4 + $0x60] sm:$0xff]
        %v753 = vld [vmem:[%s4 + $0x68] sm:$0xff]
        %v754 = vld [vmem:[%s4 + $0x70] sm:$0xff]
        %v755 = vld [vmem:[%s4 + $0x78] sm:$0xff]
        %v772 = vunpack.c.l.b16 %v740
        %v773 = vunpack.c.h.b16 %v740
        %v774 = vunpack.c.l.b16 %v741
        %v775 = vunpack.c.h.b16 %v741
        %v776 = vunpack.c.l.b16 %v742
        %v777 = vunpack.c.h.b16 %v742
        %v778 = vunpack.c.l.b16 %v743
        %v779 = vunpack.c.h.b16 %v743
        %v780 = vunpack.c.l.b16 %v744
        %v781 = vunpack.c.h.b16 %v744
        %v782 = vunpack.c.l.b16 %v745
        %v783 = vunpack.c.h.b16 %v745
        %v784 = vunpack.c.l.b16 %v746
        %v785 = vunpack.c.h.b16 %v746
        %v786 = vunpack.c.l.b16 %v747
        %v787 = vunpack.c.h.b16 %v747
        %v788 = vunpack.c.l.b16 %v748
        %v789 = vunpack.c.h.b16 %v748
        %v790 = vunpack.c.l.b16 %v749
        %v791 = vunpack.c.h.b16 %v749
        %v792 = vunpack.c.l.b16 %v750
        %v793 = vunpack.c.h.b16 %v750
        %v794 = vunpack.c.l.b16 %v751
        %v795 = vunpack.c.h.b16 %v751
        %v796 = vunpack.c.l.b16 %v752
        %v797 = vunpack.c.h.b16 %v752
        %v798 = vunpack.c.l.b16 %v753
        %v799 = vunpack.c.h.b16 %v753
        %v800 = vunpack.c.l.b16 %v754
        %v801 = vunpack.c.h.b16 %v754
        %v802 = vunpack.c.l.b16 %v755
        %v803 = vunpack.c.h.b16 %v755
        %v804 = vpack.c.b16 %v774, %v772
        %v805 = vpack.c.b16 %v775, %v773
        %v806 = vpack.c.b16 %v778, %v776
        %v807 = vpack.c.b16 %v779, %v777
        %v808 = vpack.c.b16 %v782, %v780
        %v809 = vpack.c.b16 %v783, %v781
        %v810 = vpack.c.b16 %v786, %v784
        %v811 = vpack.c.b16 %v787, %v785
        %v812 = vpack.c.b16 %v790, %v788
        %v813 = vpack.c.b16 %v791, %v789
        %v814 = vpack.c.b16 %v794, %v792
        %v815 = vpack.c.b16 %v795, %v793
        %v816 = vpack.c.b16 %v798, %v796
        %v817 = vpack.c.b16 %v799, %v797
        %v818 = vpack.c.b16 %v802, %v800
        %v819 = vpack.c.b16 %v803, %v801
        %836 = vmatpush.bf16.msra.mxu0 %v818
        %837 = vmatpush.bf16.msra.mxu0 %v816
        %838 = vmatpush.bf16.msra.mxu0 %v814
        %839 = vmatpush.bf16.msra.mxu0 %v812
        %840 = vmatpush.bf16.msra.mxu0 %v810
        %841 = vmatpush.bf16.msra.mxu0 %v808
        %842 = vmatpush.bf16.msra.mxu0 %v806
        %843 = vmatpush.bf16.msra.mxu0 %v804
        %844 = vmatmul.bf16.gmra.mxu0 %v660
        %v845 = vpop.f32.mrf.mxu0
        %v846 = vadd.f32 0.0, %v845
        %v847 = vpop.f32.mrf.mxu0
        %848 = vdwg.mxu0
        %849 = vmatpush.bf16.msra.mxu0 %v819
        %850 = vmatpush.bf16.msra.mxu0 %v817
        %851 = vmatpush.bf16.msra.mxu0 %v815
        %852 = vmatpush.bf16.msra.mxu0 %v813
        %853 = vmatpush.bf16.msra.mxu0 %v811
        %854 = vmatpush.bf16.msra.mxu0 %v809
        %855 = vmatpush.bf16.msra.mxu0 %v807
        %856 = vmatpush.bf16.msra.mxu0 %v805
        %857 = vmatmul.bf16.gmra.mxu0 %v660
        %v858 = vpop.f32.mrf.mxu0
        %v859 = vadd.f32 0.0, %v858
        %v860 = vpop.f32.mrf.mxu0
        %861 = vdwg.mxu0
        %v862 = vld [vmem:[%s2 + $0x1] sm:$0x1]
        %v863 = vperm.slane %v862, 0
        %v864 = vadd.f32 %v846, %v863
        %v865 = vld [vmem:[%s2 + $0x2] sm:$0x1]
        %v866 = vperm.slane %v865, 0
        %v867 = vadd.f32 %v859, %v866
        %v868 = vpack.c.bf16 %v737, %v737
        %v869 = vpack.c.bf16 %v864, %v864
        %v870 = vpack.c.bf16 %v867, %v867
        %vm871 = vcmask 261120
        %v873 = vsel %vm871, %v868, 0
        %v876 = vsel %vm871, %v869, 0
        %878 = vmatpush.bf16.xpose.msra.mxu0 0
        %879 = vmatpush.bf16.xpose.msra.mxu0 0
        %880 = vmatpush.bf16.xpose.msra.mxu0 0
        %881 = vmatpush.bf16.xpose.msra.mxu0 0
        %882 = vmatpush.bf16.xpose.msra.mxu0 0
        %883 = vmatpush.bf16.xpose.msra.mxu0 0
        %884 = vmatpush.bf16.xpose.msra.mxu0 0
        %885 = vmatpush.bf16.xpose.msra.mxu0 %v876
        %886 = vmatmul.bf16.gmra.mxu0 %v873
        %v887 = vpop.f32.mrf.mxu0
        %v888 = vadd.f32 0.0, %v887
        %v889 = vpop.f32.mrf.mxu0
        %890 = vdwg.mxu0
        %vm891 = vcmask 64512
        %v892 = vsel %vm891, %v888, -inf
        %893 = vmax.xlane.f32.xlu0 %v892
        %v894 = vpop.xlane.xlu0 %893
        %v895 = vsub.f32 %v888, %v894
        %v896 = vmul.f32 %v895, 1.442695
        %v897 = vpow.pop %v896
        %v898 = vsel %vm891, %v897, 0.0
        %899 = vadd.xlane.f32.xlu0 %v898
        %v900 = vpop.xlane.xlu0 %899
        %v901 = vrcp.pop %v900
        %v902 = vmul.f32 %v900, %v901
        %v903 = vsub.f32 1.0, %v902
        %v904 = vmul.f32 %v901, %v903
        %v905 = vadd.f32 %v901, %v904
        %vm906 = vweird.f32 %v900
        %vm907 = vweird.f32 %v901
        %vm908 = vmor %vm906, %vm907
        %v909 = vsel %vm908, %v901, %v905
        %v910 = vand.u32 2147483647, %v900
        %vm911 = vcmp.eq.f32.partialorder %v910, 8.507059e+37
        %v912 = vand.u32 %v900, 2147483648
        %v913 = vor.u32 1.1754944e-38, %v912
        %v914 = vsel %vm911, %v913, %v909
        %v915 = vmul.f32 %v897, %v914
        %v916 = vpack.c.bf16 %v915, %v915
        %v918 = vsel %vm891, %v916, 0
        %vm920 = vcmask 1043456
        %v922 = vsel %vm920, %v870, 0
        %924 = vmatpush.bf16.msra.mxu0 0
        %925 = vmatpush.bf16.msra.mxu0 0
        %926 = vmatpush.bf16.msra.mxu0 0
        %927 = vmatpush.bf16.msra.mxu0 0
        %928 = vmatpush.bf16.msra.mxu0 0
        %929 = vmatpush.bf16.msra.mxu0 0
        %930 = vmatpush.bf16.msra.mxu0 0
        %931 = vmatpush.bf16.msra.mxu0 %v922
        %932 = vmatmul.bf16.gmra.mxu0 %v918
        %v933 = vpop.f32.mrf.mxu0
        %v934 = vadd.f32 0.0, %v933
        %v935 = vpop.f32.mrf.mxu0
        %936 = vdwg.mxu0
        %v938 = vunpack.c.l.b16 %v868
        %v939 = vpack.c.b16 %v938, %v938
        %940 = vrot.lane.b32.xlu0 %v939, 96
        %v941 = vpop.permute.xlu0 %940
        %v943 = vunpack.c.l.b16 %v869
        %v944 = vpack.c.b16 %v943, %v943
        %945 = vrot.lane.b32.xlu0 %v944, 96
        %v946 = vpop.permute.xlu0 %945
        %v948 = vsel %vm871, %v941, 0
        %v951 = vsel %vm871, %v946, 0
        %953 = vmatpush.bf16.xpose.msra.mxu0 0
        %954 = vmatpush.bf16.xpose.msra.mxu0 0
        %955 = vmatpush.bf16.xpose.msra.mxu0 0
        %956 = vmatpush.bf16.xpose.msra.mxu0 0
        %957 = vmatpush.bf16.xpose.msra.mxu0 0
        %958 = vmatpush.bf16.xpose.msra.mxu0 0
        %959 = vmatpush.bf16.xpose.msra.mxu0 0
        %960 = vmatpush.bf16.xpose.msra.mxu0 %v951
        %961 = vmatmul.bf16.gmra.mxu0 %v948
        %v962 = vpop.f32.mrf.mxu0
        %v963 = vadd.f32 0.0, %v962
        %v964 = vpop.f32.mrf.mxu0
        %965 = vdwg.mxu0
        %v966 = vsel %vm891, %v963, -inf
        %967 = vmax.xlane.f32.xlu0 %v966
        %v968 = vpop.xlane.xlu0 %967
        %v969 = vsub.f32 %v963, %v968
        %v970 = vmul.f32 %v969, 1.442695
        %v971 = vpow.pop %v970
        %v972 = vsel %vm891, %v971, 0.0
        %973 = vadd.xlane.f32.xlu0 %v972
        %v974 = vpop.xlane.xlu0 %973
        %v975 = vrcp.pop %v974
        %v976 = vmul.f32 %v974, %v975
        %v977 = vsub.f32 1.0, %v976
        %v978 = vmul.f32 %v975, %v977
        %v979 = vadd.f32 %v975, %v978
        %vm980 = vweird.f32 %v974
        %vm981 = vweird.f32 %v975
        %vm982 = vmor %vm980, %vm981
        %v983 = vsel %vm982, %v975, %v979
        %v984 = vand.u32 2147483647, %v974
        %vm985 = vcmp.eq.f32.partialorder %v984, 8.507059e+37
        %v986 = vand.u32 %v974, 2147483648
        %v987 = vor.u32 1.1754944e-38, %v986
        %v988 = vsel %vm985, %v987, %v983
        %v989 = vmul.f32 %v971, %v988
        %v990 = vpack.c.bf16 %v989, %v989
        %v992 = vunpack.c.l.b16 %v870
        %v993 = vpack.c.b16 %v992, %v992
        %994 = vrot.lane.b32.xlu0 %v993, 96
        %v995 = vpop.permute.xlu0 %994
        %v997 = vsel %vm891, %v990, 0
        %v1000 = vsel %vm920, %v995, 0
        %1002 = vmatpush.bf16.msra.mxu0 0
        %1003 = vmatpush.bf16.msra.mxu0 0
        %1004 = vmatpush.bf16.msra.mxu0 0
        %1005 = vmatpush.bf16.msra.mxu0 0
        %1006 = vmatpush.bf16.msra.mxu0 0
        %1007 = vmatpush.bf16.msra.mxu0 0
        %1008 = vmatpush.bf16.msra.mxu0 0
        %1009 = vmatpush.bf16.msra.mxu0 %v1000
        %1010 = vmatmul.bf16.gmra.mxu0 %v997
        %v1011 = vpop.f32.mrf.mxu0
        %v1012 = vadd.f32 0.0, %v1011
        %v1013 = vpop.f32.mrf.mxu0
        %1014 = vdwg.mxu0
        %1015 = vrot.lane.b32.xlu0 %v939, 64
        %v1016 = vpop.permute.xlu0 %1015
        %1017 = vrot.lane.b32.xlu0 %v944, 64
        %v1018 = vpop.permute.xlu0 %1017
        %v1020 = vsel %vm871, %v1016, 0
        %v1023 = vsel %vm871, %v1018, 0
        %1025 = vmatpush.bf16.xpose.msra.mxu0 0
        %1026 = vmatpush.bf16.xpose.msra.mxu0 0
        %1027 = vmatpush.bf16.xpose.msra.mxu0 0
        %1028 = vmatpush.bf16.xpose.msra.mxu0 0
        %1029 = vmatpush.bf16.xpose.msra.mxu0 0
        %1030 = vmatpush.bf16.xpose.msra.mxu0 0
        %1031 = vmatpush.bf16.xpose.msra.mxu0 0
        %1032 = vmatpush.bf16.xpose.msra.mxu0 %v1023
        %1033 = vmatmul.bf16.gmra.mxu0 %v1020
        %v1034 = vpop.f32.mrf.mxu0
        %v1035 = vadd.f32 0.0, %v1034
        %v1036 = vpop.f32.mrf.mxu0
        %1037 = vdwg.mxu0
        %v1038 = vsel %vm891, %v1035, -inf
        %1039 = vmax.xlane.f32.xlu0 %v1038
        %v1040 = vpop.xlane.xlu0 %1039
        %v1041 = vsub.f32 %v1035, %v1040
        %v1042 = vmul.f32 %v1041, 1.442695
        %v1043 = vpow.pop %v1042
        %v1044 = vsel %vm891, %v1043, 0.0
        %1045 = vadd.xlane.f32.xlu0 %v1044
        %v1046 = vpop.xlane.xlu0 %1045
        %v1047 = vrcp.pop %v1046
        %v1048 = vmul.f32 %v1046, %v1047
        %v1049 = vsub.f32 1.0, %v1048
        %v1050 = vmul.f32 %v1047, %v1049
        %v1051 = vadd.f32 %v1047, %v1050
        %vm1052 = vweird.f32 %v1046
        %vm1053 = vweird.f32 %v1047
        %vm1054 = vmor %vm1052, %vm1053
        %v1055 = vsel %vm1054, %v1047, %v1051
        %v1056 = vand.u32 2147483647, %v1046
        %vm1057 = vcmp.eq.f32.partialorder %v1056, 8.507059e+37
        %v1058 = vand.u32 %v1046, 2147483648
        %v1059 = vor.u32 1.1754944e-38, %v1058
        %v1060 = vsel %vm1057, %v1059, %v1055
        %v1061 = vmul.f32 %v1043, %v1060
        %v1062 = vpack.c.bf16 %v1061, %v1061
        %1063 = vrot.lane.b32.xlu0 %v993, 64
        %v1064 = vpop.permute.xlu0 %1063
        %v1066 = vsel %vm891, %v1062, 0
        %v1069 = vsel %vm920, %v1064, 0
        %1071 = vmatpush.bf16.msra.mxu0 0
        %1072 = vmatpush.bf16.msra.mxu0 0
        %1073 = vmatpush.bf16.msra.mxu0 0
        %1074 = vmatpush.bf16.msra.mxu0 0
        %1075 = vmatpush.bf16.msra.mxu0 0
        %1076 = vmatpush.bf16.msra.mxu0 0
        %1077 = vmatpush.bf16.msra.mxu0 0
        %1078 = vmatpush.bf16.msra.mxu0 %v1069
        %1079 = vmatmul.bf16.gmra.mxu0 %v1066
        %v1080 = vpop.f32.mrf.mxu0
        %v1081 = vadd.f32 0.0, %v1080
        %v1082 = vpop.f32.mrf.mxu0
        %1083 = vdwg.mxu0
        %1084 = vrot.lane.b32.xlu0 %v939, 32
        %v1085 = vpop.permute.xlu0 %1084
        %1086 = vrot.lane.b32.xlu0 %v944, 32
        %v1087 = vpop.permute.xlu0 %1086
        %v1089 = vsel %vm871, %v1085, 0
        %v1092 = vsel %vm871, %v1087, 0
        %1094 = vmatpush.bf16.xpose.msra.mxu0 0
        %1095 = vmatpush.bf16.xpose.msra.mxu0 0
        %1096 = vmatpush.bf16.xpose.msra.mxu0 0
        %1097 = vmatpush.bf16.xpose.msra.mxu0 0
        %1098 = vmatpush.bf16.xpose.msra.mxu0 0
        %1099 = vmatpush.bf16.xpose.msra.mxu0 0
        %1100 = vmatpush.bf16.xpose.msra.mxu0 0
        %1101 = vmatpush.bf16.xpose.msra.mxu0 %v1092
        %1102 = vmatmul.bf16.gmra.mxu0 %v1089
        %v1103 = vpop.f32.mrf.mxu0
        %v1104 = vadd.f32 0.0, %v1103
        %v1105 = vpop.f32.mrf.mxu0
        %1106 = vdwg.mxu0
        %v1107 = vsel %vm891, %v1104, -inf
        %1108 = vmax.xlane.f32.xlu0 %v1107
        %v1109 = vpop.xlane.xlu0 %1108
        %v1110 = vsub.f32 %v1104, %v1109
        %v1111 = vmul.f32 %v1110, 1.442695
        %v1112 = vpow.pop %v1111
        %v1113 = vsel %vm891, %v1112, 0.0
        %1114 = vadd.xlane.f32.xlu0 %v1113
        %v1115 = vpop.xlane.xlu0 %1114
        %v1116 = vrcp.pop %v1115
        %v1117 = vmul.f32 %v1115, %v1116
        %v1118 = vsub.f32 1.0, %v1117
        %v1119 = vmul.f32 %v1116, %v1118
        %v1120 = vadd.f32 %v1116, %v1119
        %vm1121 = vweird.f32 %v1115
        %vm1122 = vweird.f32 %v1116
        %vm1123 = vmor %vm1121, %vm1122
        %v1124 = vsel %vm1123, %v1116, %v1120
        %v1125 = vand.u32 2147483647, %v1115
        %vm1126 = vcmp.eq.f32.partialorder %v1125, 8.507059e+37
        %v1127 = vand.u32 %v1115, 2147483648
        %v1128 = vor.u32 1.1754944e-38, %v1127
        %v1129 = vsel %vm1126, %v1128, %v1124
        %v1130 = vmul.f32 %v1112, %v1129
        %v1131 = vpack.c.bf16 %v1130, %v1130
        %1132 = vrot.lane.b32.xlu0 %v993, 32
        %v1133 = vpop.permute.xlu0 %1132
        %v1135 = vsel %vm891, %v1131, 0
        %v1138 = vsel %vm920, %v1133, 0
        %1140 = vmatpush.bf16.msra.mxu0 0
        %1141 = vmatpush.bf16.msra.mxu0 0
        %1142 = vmatpush.bf16.msra.mxu0 0
        %1143 = vmatpush.bf16.msra.mxu0 0
        %1144 = vmatpush.bf16.msra.mxu0 0
        %1145 = vmatpush.bf16.msra.mxu0 0
        %1146 = vmatpush.bf16.msra.mxu0 0
        %1147 = vmatpush.bf16.msra.mxu0 %v1138
        %1148 = vmatmul.bf16.gmra.mxu0 %v1135
        %v1149 = vpop.f32.mrf.mxu0
        %v1150 = vadd.f32 0.0, %v1149
        %v1151 = vpop.f32.mrf.mxu0
        %1152 = vdwg.mxu0
        %1154 = vrot.lane.b32.xlu0 %v1012, 32
        %v1155 = vpop.permute.xlu0 %1154
        %1158 = vrot.lane.b32.xlu0 %v1081, 64
        %v1159 = vpop.permute.xlu0 %1158
        %1162 = vrot.lane.b32.xlu0 %v1150, 96
        %v1163 = vpop.permute.xlu0 %1162
        %v1165 = vsel %vm871, %v934, %v1155
        %vm1166 = vcmask 523264
        %v1167 = vsel %vm1166, %v1165, %v1159
        %vm1168 = vcmask 785408
        %v1169 = vsel %vm1168, %v1167, %v1163
        %v1170 = vpack.c.bf16 %v1169, %v1169
        %v1171 = vld [vmem:[%s5] sm:$0xf]
        %v1172 = vld [vmem:[%s5 + $0x4] sm:$0xf]
        %v1173 = vld [vmem:[%s5 + $0x8] sm:$0xf]
        %v1174 = vld [vmem:[%s5 + $0xc] sm:$0xf]
        %v1175 = vld [vmem:[%s5 + $0x10] sm:$0xf]
        %v1176 = vld [vmem:[%s5 + $0x14] sm:$0xf]
        %v1177 = vld [vmem:[%s5 + $0x18] sm:$0xf]
        %v1178 = vld [vmem:[%s5 + $0x1c] sm:$0xf]
        %v1179 = vld [vmem:[%s5 + $0x20] sm:$0xf]
        %v1180 = vld [vmem:[%s5 + $0x24] sm:$0xf]
        %v1181 = vld [vmem:[%s5 + $0x28] sm:$0xf]
        %v1182 = vld [vmem:[%s5 + $0x2c] sm:$0xf]
        %v1183 = vld [vmem:[%s5 + $0x30] sm:$0xf]
        %v1184 = vld [vmem:[%s5 + $0x34] sm:$0xf]
        %v1185 = vld [vmem:[%s5 + $0x38] sm:$0xf]
        %v1186 = vld [vmem:[%s5 + $0x3c] sm:$0xf]
        %v1187 = vld [vmem:[%s2 + $0x3] sm:$0x1]
        %v1188 = vperm.slane %v1187, 0
        %v1205 = vunpack.c.l.b16 %v1171
        %v1206 = vunpack.c.l.b16 %v1172
        %v1207 = vunpack.c.l.b16 %v1173
        %v1208 = vunpack.c.l.b16 %v1174
        %v1209 = vunpack.c.l.b16 %v1175
        %v1210 = vunpack.c.l.b16 %v1176
        %v1211 = vunpack.c.l.b16 %v1177
        %v1212 = vunpack.c.l.b16 %v1178
        %v1213 = vunpack.c.l.b16 %v1179
        %v1214 = vunpack.c.l.b16 %v1180
        %v1215 = vunpack.c.l.b16 %v1181
        %v1216 = vunpack.c.l.b16 %v1182
        %v1217 = vunpack.c.l.b16 %v1183
        %v1218 = vunpack.c.l.b16 %v1184
        %v1219 = vunpack.c.l.b16 %v1185
        %v1220 = vunpack.c.l.b16 %v1186
        %v1221 = vpack.c.b16 %v1206, %v1205
        %v1222 = vpack.c.b16 %v1208, %v1207
        %v1223 = vpack.c.b16 %v1210, %v1209
        %v1224 = vpack.c.b16 %v1212, %v1211
        %v1225 = vpack.c.b16 %v1214, %v1213
        %v1226 = vpack.c.b16 %v1216, %v1215
        %v1227 = vpack.c.b16 %v1218, %v1217
        %v1228 = vpack.c.b16 %v1220, %v1219
        %1237 = vmatpush.bf16.msra.mxu0 %v1228
        %1238 = vmatpush.bf16.msra.mxu0 %v1227
        %1239 = vmatpush.bf16.msra.mxu0 %v1226
        %1240 = vmatpush.bf16.msra.mxu0 %v1225
        %1241 = vmatpush.bf16.msra.mxu0 %v1224
        %1242 = vmatpush.bf16.msra.mxu0 %v1223
        %1243 = vmatpush.bf16.msra.mxu0 %v1222
        %1244 = vmatpush.bf16.msra.mxu0 %v1221
        %1245 = vmatmul.bf16.gmra.mxu0 %v1170
        %v1246 = vpop.f32.mrf.mxu0
        %v1247 = vadd.f32 %v1188, %v1246
        %v1248 = vpop.f32.mrf.mxu0
        %1249 = vdwg.mxu0
        %v1250 = vld [vmem:[%s2 + $0x6] sm:$0x1]
        %v1251 = vld [vmem:[%s2 + $0x7] sm:$0x1]
        %v1252 = vadd.f32 %v659, %v1247
        %1253 = vadd.xlane.f32.xlu0 %v1252
        %v1254 = vpop.xlane.xlu0 %1253
        %v1255 = vrcp.pop 128.0
        %v1256 = vmul.f32 128.0, %v1255
        %v1257 = vsub.f32 1.0, %v1256
        %v1258 = vmul.f32 %v1255, %v1257
        %v1259 = vadd.f32 %v1255, %v1258
        %vm1260 = vweird.f32 %v1255
        %v1261 = vsel %vm1260, %v1255, %v1259
        %v1262 = vmul.f32 %v1254, %v1261
        %v1263 = vsub.f32 %v1252, %v1262
        %v1264 = vmul.f32 %v1263, %v1263
        %1265 = vadd.xlane.f32.xlu0 %v1264
        %v1266 = vpop.xlane.xlu0 %1265
        %v1267 = vmul.f32 %v1266, %v1261
        %v1268 = vadd.f32 %v1267, 1e-05
        %v1269 = vrsqrt.pop %v1268
        %v1270 = vmul.f32 %v1269, %v1268
        %v1271 = vmul.f32 %v1270, %v1269
        %v1272 = vmul.f32 0.5, %v1271
        %v1273 = vsub.f32 1.5, %v1272
        %v1274 = vmul.f32 %v1269, %v1273
        %vm1275 = vweird.f32 %v1268
        %vm1276 = vweird.f32 %v1269
        %vm1277 = vmor %vm1275, %vm1276
        %v1278 = vsel %vm1277, %v1269, %v1274
        %v1279 = vmul.f32 %v1263, %v1278
        %v1280 = vperm.slane %v1250, 0
        %v1281 = vmul.f32 %v1279, %v1280
        %v1282 = vperm.slane %v1251, 0
        %v1283 = vadd.f32 %v1281, %v1282
        %v1284 = vpack.c.bf16 %v1283, %v1283
        %v1285 = vld [vmem:[%s6] sm:$0xf]
        %v1286 = vld [vmem:[%s6 + $0x4] sm:$0xf]
        %v1287 = vld [vmem:[%s6 + $0x8] sm:$0xf]
        %v1288 = vld [vmem:[%s6 + $0xc] sm:$0xf]
        %v1289 = vld [vmem:[%s6 + $0x10] sm:$0xf]
        %v1290 = vld [vmem:[%s6 + $0x14] sm:$0xf]
        %v1291 = vld [vmem:[%s6 + $0x18] sm:$0xf]
        %v1292 = vld [vmem:[%s6 + $0x1c] sm:$0xf]
        %v1293 = vld [vmem:[%s6 + $0x20] sm:$0xf]
        %v1294 = vld [vmem:[%s6 + $0x24] sm:$0xf]
        %v1295 = vld [vmem:[%s6 + $0x28] sm:$0xf]
        %v1296 = vld [vmem:[%s6 + $0x2c] sm:$0xf]
        %v1297 = vld [vmem:[%s6 + $0x30] sm:$0xf]
        %v1298 = vld [vmem:[%s6 + $0x34] sm:$0xf]
        %v1299 = vld [vmem:[%s6 + $0x38] sm:$0xf]
        %v1300 = vld [vmem:[%s6 + $0x3c] sm:$0xf]
        %v1301 = vld [vmem:[%s2 + $0x4] sm:$0x1]
        %v1302 = vperm.slane %v1301, 0
        %v1319 = vunpack.c.l.b16 %v1285
        %v1320 = vunpack.c.l.b16 %v1286
        %v1321 = vunpack.c.l.b16 %v1287
        %v1322 = vunpack.c.l.b16 %v1288
        %v1323 = vunpack.c.l.b16 %v1289
        %v1324 = vunpack.c.l.b16 %v1290
        %v1325 = vunpack.c.l.b16 %v1291
        %v1326 = vunpack.c.l.b16 %v1292
        %v1327 = vunpack.c.l.b16 %v1293
        %v1328 = vunpack.c.l.b16 %v1294
        %v1329 = vunpack.c.l.b16 %v1295
        %v1330 = vunpack.c.l.b16 %v1296
        %v1331 = vunpack.c.l.b16 %v1297
        %v1332 = vunpack.c.l.b16 %v1298
        %v1333 = vunpack.c.l.b16 %v1299
        %v1334 = vunpack.c.l.b16 %v1300
        %v1335 = vpack.c.b16 %v1320, %v1319
        %v1336 = vpack.c.b16 %v1322, %v1321
        %v1337 = vpack.c.b16 %v1324, %v1323
        %v1338 = vpack.c.b16 %v1326, %v1325
        %v1339 = vpack.c.b16 %v1328, %v1327
        %v1340 = vpack.c.b16 %v1330, %v1329
        %v1341 = vpack.c.b16 %v1332, %v1331
        %v1342 = vpack.c.b16 %v1334, %v1333
        %1351 = vmatpush.bf16.msra.mxu0 %v1342
        %1352 = vmatpush.bf16.msra.mxu0 %v1341
        %1353 = vmatpush.bf16.msra.mxu0 %v1340
        %1354 = vmatpush.bf16.msra.mxu0 %v1339
        %1355 = vmatpush.bf16.msra.mxu0 %v1338
        %1356 = vmatpush.bf16.msra.mxu0 %v1337
        %1357 = vmatpush.bf16.msra.mxu0 %v1336
        %1358 = vmatpush.bf16.msra.mxu0 %v1335
        %1359 = vmatmul.bf16.gmra.mxu0 %v1284
        %v1360 = vpop.f32.mrf.mxu0
        %v1361 = vadd.f32 %v1302, %v1360
        %v1362 = vpop.f32.mrf.mxu0
        %1363 = vdwg.mxu0
        %v1364 = vmax.f32 %v1361, 0.0
        %v1365 = vpack.c.bf16 %v1364, %v1364
        %v1366 = vld [vmem:[%s7] sm:$0xf]
        %v1367 = vld [vmem:[%s7 + $0x4] sm:$0xf]
        %v1368 = vld [vmem:[%s7 + $0x8] sm:$0xf]
        %v1369 = vld [vmem:[%s7 + $0xc] sm:$0xf]
        %v1370 = vld [vmem:[%s7 + $0x10] sm:$0xf]
        %v1371 = vld [vmem:[%s7 + $0x14] sm:$0xf]
        %v1372 = vld [vmem:[%s7 + $0x18] sm:$0xf]
        %v1373 = vld [vmem:[%s7 + $0x1c] sm:$0xf]
        %v1374 = vld [vmem:[%s7 + $0x20] sm:$0xf]
        %v1375 = vld [vmem:[%s7 + $0x24] sm:$0xf]
        %v1376 = vld [vmem:[%s7 + $0x28] sm:$0xf]
        %v1377 = vld [vmem:[%s7 + $0x2c] sm:$0xf]
        %v1378 = vld [vmem:[%s7 + $0x30] sm:$0xf]
        %v1379 = vld [vmem:[%s7 + $0x34] sm:$0xf]
        %v1380 = vld [vmem:[%s7 + $0x38] sm:$0xf]
        %v1381 = vld [vmem:[%s7 + $0x3c] sm:$0xf]
        %v1382 = vld [vmem:[%s2 + $0x5] sm:$0x1]
        %v1383 = vperm.slane %v1382, 0
        %v1400 = vunpack.c.l.b16 %v1366
        %v1401 = vunpack.c.l.b16 %v1367
        %v1402 = vunpack.c.l.b16 %v1368
        %v1403 = vunpack.c.l.b16 %v1369
        %v1404 = vunpack.c.l.b16 %v1370
        %v1405 = vunpack.c.l.b16 %v1371
        %v1406 = vunpack.c.l.b16 %v1372
        %v1407 = vunpack.c.l.b16 %v1373
        %v1408 = vunpack.c.l.b16 %v1374
        %v1409 = vunpack.c.l.b16 %v1375
        %v1410 = vunpack.c.l.b16 %v1376
        %v1411 = vunpack.c.l.b16 %v1377
        %v1412 = vunpack.c.l.b16 %v1378
        %v1413 = vunpack.c.l.b16 %v1379
        %v1414 = vunpack.c.l.b16 %v1380
        %v1415 = vunpack.c.l.b16 %v1381
        %v1416 = vpack.c.b16 %v1401, %v1400
        %v1417 = vpack.c.b16 %v1403, %v1402
        %v1418 = vpack.c.b16 %v1405, %v1404
        %v1419 = vpack.c.b16 %v1407, %v1406
        %v1420 = vpack.c.b16 %v1409, %v1408
        %v1421 = vpack.c.b16 %v1411, %v1410
        %v1422 = vpack.c.b16 %v1413, %v1412
        %v1423 = vpack.c.b16 %v1415, %v1414
        %1432 = vmatpush.bf16.msra.mxu0 %v1423
        %1433 = vmatpush.bf16.msra.mxu0 %v1422
        %1434 = vmatpush.bf16.msra.mxu0 %v1421
        %1435 = vmatpush.bf16.msra.mxu0 %v1420
        %1436 = vmatpush.bf16.msra.mxu0 %v1419
        %1437 = vmatpush.bf16.msra.mxu0 %v1418
        %1438 = vmatpush.bf16.msra.mxu0 %v1417
        %1439 = vmatpush.bf16.msra.mxu0 %v1416
        %1440 = vmatmul.bf16.gmra.mxu0 %v1365
        %v1441 = vpop.f32.mrf.mxu0
        %v1442 = vadd.f32 %v1383, %v1441
        %v1443 = vpop.f32.mrf.mxu0
        %1444 = vdwg.mxu0
        %v1445 = vld [vmem:[%s2 + $0x8] sm:$0x1]
        %v1446 = vld [vmem:[%s2 + $0x9] sm:$0x1]
        %v1447 = vadd.f32 %v1283, %v1442
        %1448 = vadd.xlane.f32.xlu0 %v1447
        %v1449 = vpop.xlane.xlu0 %1448
        %v1450 = vmul.f32 %v1449, %v1261
        %v1451 = vsub.f32 %v1447, %v1450
        %v1452 = vmul.f32 %v1451, %v1451
        %1453 = vadd.xlane.f32.xlu0 %v1452
        %v1454 = vpop.xlane.xlu0 %1453
        %v1455 = vmul.f32 %v1454, %v1261
        %v1456 = vadd.f32 %v1455, 1e-05
        %v1457 = vrsqrt.pop %v1456
        %v1458 = vmul.f32 %v1457, %v1456
        %v1459 = vmul.f32 %v1458, %v1457
        %v1460 = vmul.f32 0.5, %v1459
        %v1461 = vsub.f32 1.5, %v1460
        %v1462 = vmul.f32 %v1457, %v1461
        %vm1463 = vweird.f32 %v1456
        %vm1464 = vweird.f32 %v1457
        %vm1465 = vmor %vm1463, %vm1464
        %v1466 = vsel %vm1465, %v1457, %v1462
        %v1467 = vmul.f32 %v1451, %v1466
        %v1468 = vperm.slane %v1445, 0
        %v1469 = vmul.f32 %v1467, %v1468
        %v1470 = vperm.slane %v1446, 0
        %v1471 = vadd.f32 %v1469, %v1470
        %v1472 = vpack.c.bf16 %v658, %v657
        %v1473 = vpack.c.bf16 %v1471, %v1471
        %v1474 = vld [vmem:[%s13] sm:$0xf]
        %v1475 = vld [vmem:[%s13 + $0x4] sm:$0xf]
        %v1476 = vld [vmem:[%s13 + $0x8] sm:$0xf]
        %v1477 = vld [vmem:[%s13 + $0xc] sm:$0xf]
        %v1478 = vld [vmem:[%s13 + $0x10] sm:$0xf]
        %v1479 = vld [vmem:[%s13 + $0x14] sm:$0xf]
        %v1480 = vld [vmem:[%s13 + $0x18] sm:$0xf]
        %v1481 = vld [vmem:[%s13 + $0x1c] sm:$0xf]
        %v1482 = vld [vmem:[%s13 + $0x20] sm:$0xf]
        %v1483 = vld [vmem:[%s13 + $0x24] sm:$0xf]
        %v1484 = vld [vmem:[%s13 + $0x28] sm:$0xf]
        %v1485 = vld [vmem:[%s13 + $0x2c] sm:$0xf]
        %v1486 = vld [vmem:[%s13 + $0x30] sm:$0xf]
        %v1487 = vld [vmem:[%s13 + $0x34] sm:$0xf]
        %v1488 = vld [vmem:[%s13 + $0x38] sm:$0xf]
        %v1489 = vld [vmem:[%s13 + $0x3c] sm:$0xf]
        %v1490 = vld [vmem:[%s2 + $0x14] sm:$0x1]
        %v1491 = vperm.slane %v1490, 0
        %v1508 = vunpack.c.l.b16 %v1474
        %v1509 = vunpack.c.l.b16 %v1475
        %v1510 = vunpack.c.l.b16 %v1476
        %v1511 = vunpack.c.l.b16 %v1477
        %v1512 = vunpack.c.l.b16 %v1478
        %v1513 = vunpack.c.l.b16 %v1479
        %v1514 = vunpack.c.l.b16 %v1480
        %v1515 = vunpack.c.l.b16 %v1481
        %v1516 = vunpack.c.l.b16 %v1482
        %v1517 = vunpack.c.l.b16 %v1483
        %v1518 = vunpack.c.l.b16 %v1484
        %v1519 = vunpack.c.l.b16 %v1485
        %v1520 = vunpack.c.l.b16 %v1486
        %v1521 = vunpack.c.l.b16 %v1487
        %v1522 = vunpack.c.l.b16 %v1488
        %v1523 = vunpack.c.l.b16 %v1489
        %v1524 = vpack.c.b16 %v1509, %v1508
        %v1525 = vpack.c.b16 %v1511, %v1510
        %v1526 = vpack.c.b16 %v1513, %v1512
        %v1527 = vpack.c.b16 %v1515, %v1514
        %v1528 = vpack.c.b16 %v1517, %v1516
        %v1529 = vpack.c.b16 %v1519, %v1518
        %v1530 = vpack.c.b16 %v1521, %v1520
        %v1531 = vpack.c.b16 %v1523, %v1522
        %1540 = vmatpush.bf16.msra.mxu0 %v1531
        %1541 = vmatpush.bf16.msra.mxu0 %v1530
        %1542 = vmatpush.bf16.msra.mxu0 %v1529
        %1543 = vmatpush.bf16.msra.mxu0 %v1528
        %1544 = vmatpush.bf16.msra.mxu0 %v1527
        %1545 = vmatpush.bf16.msra.mxu0 %v1526
        %1546 = vmatpush.bf16.msra.mxu0 %v1525
        %1547 = vmatpush.bf16.msra.mxu0 %v1524
        %1548 = vmatmul.bf16.gmra.mxu0 %v1472
        %v1549 = vpop.f32.mrf.mxu0
        %v1550 = vadd.f32 %v1491, %v1549
        %v1551 = vpop.f32.mrf.mxu0
        %v1552 = vadd.f32 %v1491, %v1551
        %1553 = vdwg.mxu0
        %v1554 = vld [vmem:[%s14] sm:$0xff]
        %v1555 = vld [vmem:[%s14 + $0x8] sm:$0xff]
        %v1556 = vld [vmem:[%s14 + $0x10] sm:$0xff]
        %v1557 = vld [vmem:[%s14 + $0x18] sm:$0xff]
        %v1558 = vld [vmem:[%s14 + $0x20] sm:$0xff]
        %v1559 = vld [vmem:[%s14 + $0x28] sm:$0xff]
        %v1560 = vld [vmem:[%s14 + $0x30] sm:$0xff]
        %v1561 = vld [vmem:[%s14 + $0x38] sm:$0xff]
        %v1562 = vld [vmem:[%s14 + $0x40] sm:$0xff]
        %v1563 = vld [vmem:[%s14 + $0x48] sm:$0xff]
        %v1564 = vld [vmem:[%s14 + $0x50] sm:$0xff]
        %v1565 = vld [vmem:[%s14 + $0x58] sm:$0xff]
        %v1566 = vld [vmem:[%s14 + $0x60] sm:$0xff]
        %v1567 = vld [vmem:[%s14 + $0x68] sm:$0xff]
        %v1568 = vld [vmem:[%s14 + $0x70] sm:$0xff]
        %v1569 = vld [vmem:[%s14 + $0x78] sm:$0xff]
        %v1586 = vunpack.c.l.b16 %v1554
        %v1587 = vunpack.c.h.b16 %v1554
        %v1588 = vunpack.c.l.b16 %v1555
        %v1589 = vunpack.c.h.b16 %v1555
        %v1590 = vunpack.c.l.b16 %v1556
        %v1591 = vunpack.c.h.b16 %v1556
        %v1592 = vunpack.c.l.b16 %v1557
        %v1593 = vunpack.c.h.b16 %v1557
        %v1594 = vunpack.c.l.b16 %v1558
        %v1595 = vunpack.c.h.b16 %v1558
        %v1596 = vunpack.c.l.b16 %v1559
        %v1597 = vunpack.c.h.b16 %v1559
        %v1598 = vunpack.c.l.b16 %v1560
        %v1599 = vunpack.c.h.b16 %v1560
        %v1600 = vunpack.c.l.b16 %v1561
        %v1601 = vunpack.c.h.b16 %v1561
        %v1602 = vunpack.c.l.b16 %v1562
        %v1603 = vunpack.c.h.b16 %v1562
        %v1604 = vunpack.c.l.b16 %v1563
        %v1605 = vunpack.c.h.b16 %v1563
        %v1606 = vunpack.c.l.b16 %v1564
        %v1607 = vunpack.c.h.b16 %v1564
        %v1608 = vunpack.c.l.b16 %v1565
        %v1609 = vunpack.c.h.b16 %v1565
        %v1610 = vunpack.c.l.b16 %v1566
        %v1611 = vunpack.c.h.b16 %v1566
        %v1612 = vunpack.c.l.b16 %v1567
        %v1613 = vunpack.c.h.b16 %v1567
        %v1614 = vunpack.c.l.b16 %v1568
        %v1615 = vunpack.c.h.b16 %v1568
        %v1616 = vunpack.c.l.b16 %v1569
        %v1617 = vunpack.c.h.b16 %v1569
        %v1618 = vpack.c.b16 %v1588, %v1586
        %v1619 = vpack.c.b16 %v1589, %v1587
        %v1620 = vpack.c.b16 %v1592, %v1590
        %v1621 = vpack.c.b16 %v1593, %v1591
        %v1622 = vpack.c.b16 %v1596, %v1594
        %v1623 = vpack.c.b16 %v1597, %v1595
        %v1624 = vpack.c.b16 %v1600, %v1598
        %v1625 = vpack.c.b16 %v1601, %v1599
        %v1626 = vpack.c.b16 %v1604, %v1602
        %v1627 = vpack.c.b16 %v1605, %v1603
        %v1628 = vpack.c.b16 %v1608, %v1606
        %v1629 = vpack.c.b16 %v1609, %v1607
        %v1630 = vpack.c.b16 %v1612, %v1610
        %v1631 = vpack.c.b16 %v1613, %v1611
        %v1632 = vpack.c.b16 %v1616, %v1614
        %v1633 = vpack.c.b16 %v1617, %v1615
        %1650 = vmatpush.bf16.msra.mxu0 %v1632
        %1651 = vmatpush.bf16.msra.mxu0 %v1630
        %1652 = vmatpush.bf16.msra.mxu0 %v1628
        %1653 = vmatpush.bf16.msra.mxu0 %v1626
        %1654 = vmatpush.bf16.msra.mxu0 %v1624
        %1655 = vmatpush.bf16.msra.mxu0 %v1622
        %1656 = vmatpush.bf16.msra.mxu0 %v1620
        %1657 = vmatpush.bf16.msra.mxu0 %v1618
        %1658 = vmatmul.bf16.gmra.mxu0 %v1473
        %v1659 = vpop.f32.mrf.mxu0
        %v1660 = vadd.f32 0.0, %v1659
        %v1661 = vpop.f32.mrf.mxu0
        %1662 = vdwg.mxu0
        %1663 = vmatpush.bf16.msra.mxu0 %v1633
        %1664 = vmatpush.bf16.msra.mxu0 %v1631
        %1665 = vmatpush.bf16.msra.mxu0 %v1629
        %1666 = vmatpush.bf16.msra.mxu0 %v1627
        %1667 = vmatpush.bf16.msra.mxu0 %v1625
        %1668 = vmatpush.bf16.msra.mxu0 %v1623
        %1669 = vmatpush.bf16.msra.mxu0 %v1621
        %1670 = vmatpush.bf16.msra.mxu0 %v1619
        %1671 = vmatmul.bf16.gmra.mxu0 %v1473
        %v1672 = vpop.f32.mrf.mxu0
        %v1673 = vadd.f32 0.0, %v1672
        %v1674 = vpop.f32.mrf.mxu0
        %1675 = vdwg.mxu0
        %v1676 = vld [vmem:[%s2 + $0x15] sm:$0x1]
        %v1677 = vperm.slane %v1676, 0
        %v1678 = vadd.f32 %v1660, %v1677
        %v1679 = vld [vmem:[%s2 + $0x16] sm:$0x1]
        %v1680 = vperm.slane %v1679, 0
        %v1681 = vadd.f32 %v1673, %v1680
        %v1682 = vpack.c.bf16 %v1550, %v1550
        %v1683 = vpack.c.bf16 %v1552, %v1552
        %v1684 = vpack.c.bf16 %v1678, %v1678
        %v1685 = vpack.c.bf16 %v1681, %v1681
        %v1688 = vunpack.c.l.b16 %v1682
        %v1689 = vunpack.c.l.b16 %v1683
        %v1690 = vpack.c.b16 %v1689, %v1688
        %v1692 = vsel %vm871, %v1690, 0
        %v1695 = vsel %vm871, %v1684, 0
        %1697 = vmatpush.bf16.xpose.msra.mxu0 0
        %1698 = vmatpush.bf16.xpose.msra.mxu0 0
        %1699 = vmatpush.bf16.xpose.msra.mxu0 0
        %1700 = vmatpush.bf16.xpose.msra.mxu0 0
        %1701 = vmatpush.bf16.xpose.msra.mxu0 0
        %1702 = vmatpush.bf16.xpose.msra.mxu0 0
        %1703 = vmatpush.bf16.xpose.msra.mxu0 0
        %1704 = vmatpush.bf16.xpose.msra.mxu0 %v1695
        %1705 = vmatmul.bf16.gmra.mxu0 %v1692
        %v1706 = vpop.f32.mrf.mxu0
        %v1707 = vadd.f32 0.0, %v1706
        %v1708 = vpop.f32.mrf.mxu0
        %v1709 = vadd.f32 0.0, %v1708
        %1710 = vdwg.mxu0
        %v1711 = vsel %vm891, %v1707, -inf
        %1712 = vmax.xlane.f32.xlu0 %v1711
        %v1713 = vpop.xlane.xlu0 %1712
        %v1714 = vsel %vm891, %v1709, -inf
        %1715 = vmax.xlane.f32.xlu0 %v1714
        %v1716 = vpop.xlane.xlu0 %1715
        %v1717 = vsub.f32 %v1707, %v1713
        %v1718 = vsub.f32 %v1709, %v1716
        %v1719 = vmul.f32 %v1717, 1.442695
        %v1720 = vpow.pop %v1719
        %v1721 = vmul.f32 %v1718, 1.442695
        %v1722 = vpow.pop %v1721
        %v1723 = vsel %vm891, %v1720, 0.0
        %1724 = vadd.xlane.f32.xlu0 %v1723
        %v1725 = vpop.xlane.xlu0 %1724
        %v1726 = vsel %vm891, %v1722, 0.0
        %1727 = vadd.xlane.f32.xlu0 %v1726
        %v1728 = vpop.xlane.xlu0 %1727
        %v1729 = vrcp.pop %v1725
        %v1730 = vmul.f32 %v1725, %v1729
        %v1731 = vsub.f32 1.0, %v1730
        %v1732 = vmul.f32 %v1729, %v1731
        %v1733 = vadd.f32 %v1729, %v1732
        %vm1734 = vweird.f32 %v1725
        %vm1735 = vweird.f32 %v1729
        %vm1736 = vmor %vm1734, %vm1735
        %v1737 = vsel %vm1736, %v1729, %v1733
        %v1738 = vand.u32 2147483647, %v1725
        %vm1739 = vcmp.eq.f32.partialorder %v1738, 8.507059e+37
        %v1740 = vand.u32 %v1725, 2147483648
        %v1741 = vor.u32 1.1754944e-38, %v1740
        %v1742 = vsel %vm1739, %v1741, %v1737
        %v1743 = vmul.f32 %v1720, %v1742
        %v1744 = vrcp.pop %v1728
        %v1745 = vmul.f32 %v1728, %v1744
        %v1746 = vsub.f32 1.0, %v1745
        %v1747 = vmul.f32 %v1744, %v1746
        %v1748 = vadd.f32 %v1744, %v1747
        %vm1749 = vweird.f32 %v1728
        %vm1750 = vweird.f32 %v1744
        %vm1751 = vmor %vm1749, %vm1750
        %v1752 = vsel %vm1751, %v1744, %v1748
        %v1753 = vand.u32 2147483647, %v1728
        %vm1754 = vcmp.eq.f32.partialorder %v1753, 8.507059e+37
        %v1755 = vand.u32 %v1728, 2147483648
        %v1756 = vor.u32 1.1754944e-38, %v1755
        %v1757 = vsel %vm1754, %v1756, %v1752
        %v1758 = vmul.f32 %v1722, %v1757
        %v1759 = vpack.c.bf16 %v1743, %v1743
        %v1760 = vpack.c.bf16 %v1758, %v1758
        %v1763 = vunpack.c.l.b16 %v1759
        %v1764 = vunpack.c.l.b16 %v1760
        %v1765 = vpack.c.b16 %v1764, %v1763
        %v1767 = vsel %vm891, %v1765, 0
        %v1770 = vsel %vm920, %v1685, 0
        %1772 = vmatpush.bf16.msra.mxu0 0
        %1773 = vmatpush.bf16.msra.mxu0 0
        %1774 = vmatpush.bf16.msra.mxu0 0
        %1775 = vmatpush.bf16.msra.mxu0 0
        %1776 = vmatpush.bf16.msra.mxu0 0
        %1777 = vmatpush.bf16.msra.mxu0 0
        %1778 = vmatpush.bf16.msra.mxu0 0
        %1779 = vmatpush.bf16.msra.mxu0 %v1770
        %1780 = vmatmul.bf16.gmra.mxu0 %v1767
        %v1781 = vpop.f32.mrf.mxu0
        %v1782 = vadd.f32 0.0, %v1781
        %v1783 = vpop.f32.mrf.mxu0
        %v1784 = vadd.f32 0.0, %v1783
        %1785 = vdwg.mxu0
        %1786 = vrot.lane.b32.xlu0 %v1690, 96
        %v1787 = vpop.permute.xlu0 %1786
        %v1789 = vunpack.c.l.b16 %v1684
        %v1790 = vpack.c.b16 %v1789, %v1789
        %1791 = vrot.lane.b32.xlu0 %v1790, 96
        %v1792 = vpop.permute.xlu0 %1791
        %v1794 = vsel %vm871, %v1787, 0
        %v1797 = vsel %vm871, %v1792, 0
        %1799 = vmatpush.bf16.xpose.msra.mxu0 0
        %1800 = vmatpush.bf16.xpose.msra.mxu0 0
        %1801 = vmatpush.bf16.xpose.msra.mxu0 0
        %1802 = vmatpush.bf16.xpose.msra.mxu0 0
        %1803 = vmatpush.bf16.xpose.msra.mxu0 0
        %1804 = vmatpush.bf16.xpose.msra.mxu0 0
        %1805 = vmatpush.bf16.xpose.msra.mxu0 0
        %1806 = vmatpush.bf16.xpose.msra.mxu0 %v1797
        %1807 = vmatmul.bf16.gmra.mxu0 %v1794
        %v1808 = vpop.f32.mrf.mxu0
        %v1809 = vadd.f32 0.0, %v1808
        %v1810 = vpop.f32.mrf.mxu0
        %v1811 = vadd.f32 0.0, %v1810
        %1812 = vdwg.mxu0
        %v1813 = vsel %vm891, %v1809, -inf
        %1814 = vmax.xlane.f32.xlu0 %v1813
        %v1815 = vpop.xlane.xlu0 %1814
        %v1816 = vsel %vm891, %v1811, -inf
        %1817 = vmax.xlane.f32.xlu0 %v1816
        %v1818 = vpop.xlane.xlu0 %1817
        %v1819 = vsub.f32 %v1809, %v1815
        %v1820 = vsub.f32 %v1811, %v1818
        %v1821 = vmul.f32 %v1819, 1.442695
        %v1822 = vpow.pop %v1821
        %v1823 = vmul.f32 %v1820, 1.442695
        %v1824 = vpow.pop %v1823
        %v1825 = vsel %vm891, %v1822, 0.0
        %1826 = vadd.xlane.f32.xlu0 %v1825
        %v1827 = vpop.xlane.xlu0 %1826
        %v1828 = vsel %vm891, %v1824, 0.0
        %1829 = vadd.xlane.f32.xlu0 %v1828
        %v1830 = vpop.xlane.xlu0 %1829
        %v1831 = vrcp.pop %v1827
        %v1832 = vmul.f32 %v1827, %v1831
        %v1833 = vsub.f32 1.0, %v1832
        %v1834 = vmul.f32 %v1831, %v1833
        %v1835 = vadd.f32 %v1831, %v1834
        %vm1836 = vweird.f32 %v1827
        %vm1837 = vweird.f32 %v1831
        %vm1838 = vmor %vm1836, %vm1837
        %v1839 = vsel %vm1838, %v1831, %v1835
        %v1840 = vand.u32 2147483647, %v1827
        %vm1841 = vcmp.eq.f32.partialorder %v1840, 8.507059e+37
        %v1842 = vand.u32 %v1827, 2147483648
        %v1843 = vor.u32 1.1754944e-38, %v1842
        %v1844 = vsel %vm1841, %v1843, %v1839
        %v1845 = vmul.f32 %v1822, %v1844
        %v1846 = vrcp.pop %v1830
        %v1847 = vmul.f32 %v1830, %v1846
        %v1848 = vsub.f32 1.0, %v1847
        %v1849 = vmul.f32 %v1846, %v1848
        %v1850 = vadd.f32 %v1846, %v1849
        %vm1851 = vweird.f32 %v1830
        %vm1852 = vweird.f32 %v1846
        %vm1853 = vmor %vm1851, %vm1852
        %v1854 = vsel %vm1853, %v1846, %v1850
        %v1855 = vand.u32 2147483647, %v1830
        %vm1856 = vcmp.eq.f32.partialorder %v1855, 8.507059e+37
        %v1857 = vand.u32 %v1830, 2147483648
        %v1858 = vor.u32 1.1754944e-38, %v1857
        %v1859 = vsel %vm1856, %v1858, %v1854
        %v1860 = vmul.f32 %v1824, %v1859
        %v1861 = vpack.c.bf16 %v1845, %v1845
        %v1862 = vpack.c.bf16 %v1860, %v1860
        %v1865 = vunpack.c.l.b16 %v1861
        %v1866 = vunpack.c.l.b16 %v1862
        %v1867 = vpack.c.b16 %v1866, %v1865
        %v1869 = vunpack.c.l.b16 %v1685
        %v1870 = vpack.c.b16 %v1869, %v1869
        %1871 = vrot.lane.b32.xlu0 %v1870, 96
        %v1872 = vpop.permute.xlu0 %1871
        %v1874 = vsel %vm891, %v1867, 0
        %v1877 = vsel %vm920, %v1872, 0
        %1879 = vmatpush.bf16.msra.mxu0 0
        %1880 = vmatpush.bf16.msra.mxu0 0
        %1881 = vmatpush.bf16.msra.mxu0 0
        %1882 = vmatpush.bf16.msra.mxu0 0
        %1883 = vmatpush.bf16.msra.mxu0 0
        %1884 = vmatpush.bf16.msra.mxu0 0
        %1885 = vmatpush.bf16.msra.mxu0 0
        %1886 = vmatpush.bf16.msra.mxu0 %v1877
        %1887 = vmatmul.bf16.gmra.mxu0 %v1874
        %v1888 = vpop.f32.mrf.mxu0
        %v1889 = vadd.f32 0.0, %v1888
        %v1890 = vpop.f32.mrf.mxu0
        %v1891 = vadd.f32 0.0, %v1890
        %1892 = vdwg.mxu0
        %1893 = vrot.lane.b32.xlu0 %v1690, 64
        %v1894 = vpop.permute.xlu0 %1893
        %1895 = vrot.lane.b32.xlu0 %v1790, 64
        %v1896 = vpop.permute.xlu0 %1895
        %v1898 = vsel %vm871, %v1894, 0
        %v1901 = vsel %vm871, %v1896, 0
        %1903 = vmatpush.bf16.xpose.msra.mxu0 0
        %1904 = vmatpush.bf16.xpose.msra.mxu0 0
        %1905 = vmatpush.bf16.xpose.msra.mxu0 0
        %1906 = vmatpush.bf16.xpose.msra.mxu0 0
        %1907 = vmatpush.bf16.xpose.msra.mxu0 0
        %1908 = vmatpush.bf16.xpose.msra.mxu0 0
        %1909 = vmatpush.bf16.xpose.msra.mxu0 0
        %1910 = vmatpush.bf16.xpose.msra.mxu0 %v1901
        %1911 = vmatmul.bf16.gmra.mxu0 %v1898
        %v1912 = vpop.f32.mrf.mxu0
        %v1913 = vadd.f32 0.0, %v1912
        %v1914 = vpop.f32.mrf.mxu0
        %v1915 = vadd.f32 0.0, %v1914
        %1916 = vdwg.mxu0
        %v1917 = vsel %vm891, %v1913, -inf
        %1918 = vmax.xlane.f32.xlu0 %v1917
        %v1919 = vpop.xlane.xlu0 %1918
        %v1920 = vsel %vm891, %v1915, -inf
        %1921 = vmax.xlane.f32.xlu0 %v1920
        %v1922 = vpop.xlane.xlu0 %1921
        %v1923 = vsub.f32 %v1913, %v1919
        %v1924 = vsub.f32 %v1915, %v1922
        %v1925 = vmul.f32 %v1923, 1.442695
        %v1926 = vpow.pop %v1925
        %v1927 = vmul.f32 %v1924, 1.442695
        %v1928 = vpow.pop %v1927
        %v1929 = vsel %vm891, %v1926, 0.0
        %1930 = vadd.xlane.f32.xlu0 %v1929
        %v1931 = vpop.xlane.xlu0 %1930
        %v1932 = vsel %vm891, %v1928, 0.0
        %1933 = vadd.xlane.f32.xlu0 %v1932
        %v1934 = vpop.xlane.xlu0 %1933
        %v1935 = vrcp.pop %v1931
        %v1936 = vmul.f32 %v1931, %v1935
        %v1937 = vsub.f32 1.0, %v1936
        %v1938 = vmul.f32 %v1935, %v1937
        %v1939 = vadd.f32 %v1935, %v1938
        %vm1940 = vweird.f32 %v1931
        %vm1941 = vweird.f32 %v1935
        %vm1942 = vmor %vm1940, %vm1941
        %v1943 = vsel %vm1942, %v1935, %v1939
        %v1944 = vand.u32 2147483647, %v1931
        %vm1945 = vcmp.eq.f32.partialorder %v1944, 8.507059e+37
        %v1946 = vand.u32 %v1931, 2147483648
        %v1947 = vor.u32 1.1754944e-38, %v1946
        %v1948 = vsel %vm1945, %v1947, %v1943
        %v1949 = vmul.f32 %v1926, %v1948
        %v1950 = vrcp.pop %v1934
        %v1951 = vmul.f32 %v1934, %v1950
        %v1952 = vsub.f32 1.0, %v1951
        %v1953 = vmul.f32 %v1950, %v1952
        %v1954 = vadd.f32 %v1950, %v1953
        %vm1955 = vweird.f32 %v1934
        %vm1956 = vweird.f32 %v1950
        %vm1957 = vmor %vm1955, %vm1956
        %v1958 = vsel %vm1957, %v1950, %v1954
        %v1959 = vand.u32 2147483647, %v1934
        %vm1960 = vcmp.eq.f32.partialorder %v1959, 8.507059e+37
        %v1961 = vand.u32 %v1934, 2147483648
        %v1962 = vor.u32 1.1754944e-38, %v1961
        %v1963 = vsel %vm1960, %v1962, %v1958
        %v1964 = vmul.f32 %v1928, %v1963
        %v1965 = vpack.c.bf16 %v1949, %v1949
        %v1966 = vpack.c.bf16 %v1964, %v1964
        %v1969 = vunpack.c.l.b16 %v1965
        %v1970 = vunpack.c.l.b16 %v1966
        %v1971 = vpack.c.b16 %v1970, %v1969
        %1972 = vrot.lane.b32.xlu0 %v1870, 64
        %v1973 = vpop.permute.xlu0 %1972
        %v1975 = vsel %vm891, %v1971, 0
        %v1978 = vsel %vm920, %v1973, 0
        %1980 = vmatpush.bf16.msra.mxu0 0
        %1981 = vmatpush.bf16.msra.mxu0 0
        %1982 = vmatpush.bf16.msra.mxu0 0
        %1983 = vmatpush.bf16.msra.mxu0 0
        %1984 = vmatpush.bf16.msra.mxu0 0
        %1985 = vmatpush.bf16.msra.mxu0 0
        %1986 = vmatpush.bf16.msra.mxu0 0
        %1987 = vmatpush.bf16.msra.mxu0 %v1978
        %1988 = vmatmul.bf16.gmra.mxu0 %v1975
        %v1989 = vpop.f32.mrf.mxu0
        %v1990 = vadd.f32 0.0, %v1989
        %v1991 = vpop.f32.mrf.mxu0
        %v1992 = vadd.f32 0.0, %v1991
        %1993 = vdwg.mxu0
        %1994 = vrot.lane.b32.xlu0 %v1690, 32
        %v1995 = vpop.permute.xlu0 %1994
        %1996 = vrot.lane.b32.xlu0 %v1790, 32
        %v1997 = vpop.permute.xlu0 %1996
        %v1999 = vsel %vm871, %v1995, 0
        %v2002 = vsel %vm871, %v1997, 0
        %2004 = vmatpush.bf16.xpose.msra.mxu0 0
        %2005 = vmatpush.bf16.xpose.msra.mxu0 0
        %2006 = vmatpush.bf16.xpose.msra.mxu0 0
        %2007 = vmatpush.bf16.xpose.msra.mxu0 0
        %2008 = vmatpush.bf16.xpose.msra.mxu0 0
        %2009 = vmatpush.bf16.xpose.msra.mxu0 0
        %2010 = vmatpush.bf16.xpose.msra.mxu0 0
        %2011 = vmatpush.bf16.xpose.msra.mxu0 %v2002
        %2012 = vmatmul.bf16.gmra.mxu0 %v1999
        %v2013 = vpop.f32.mrf.mxu0
        %v2014 = vadd.f32 0.0, %v2013
        %v2015 = vpop.f32.mrf.mxu0
        %v2016 = vadd.f32 0.0, %v2015
        %2017 = vdwg.mxu0
        %v2018 = vsel %vm891, %v2014, -inf
        %2019 = vmax.xlane.f32.xlu0 %v2018
        %v2020 = vpop.xlane.xlu0 %2019
        %v2021 = vsel %vm891, %v2016, -inf
        %2022 = vmax.xlane.f32.xlu0 %v2021
        %v2023 = vpop.xlane.xlu0 %2022
        %v2024 = vsub.f32 %v2014, %v2020
        %v2025 = vsub.f32 %v2016, %v2023
        %v2026 = vmul.f32 %v2024, 1.442695
        %v2027 = vpow.pop %v2026
        %v2028 = vmul.f32 %v2025, 1.442695
        %v2029 = vpow.pop %v2028
        %v2030 = vsel %vm891, %v2027, 0.0
        %2031 = vadd.xlane.f32.xlu0 %v2030
        %v2032 = vpop.xlane.xlu0 %2031
        %v2033 = vsel %vm891, %v2029, 0.0
        %2034 = vadd.xlane.f32.xlu0 %v2033
        %v2035 = vpop.xlane.xlu0 %2034
        %v2036 = vrcp.pop %v2032
        %v2037 = vmul.f32 %v2032, %v2036
        %v2038 = vsub.f32 1.0, %v2037
        %v2039 = vmul.f32 %v2036, %v2038
        %v2040 = vadd.f32 %v2036, %v2039
        %vm2041 = vweird.f32 %v2032
        %vm2042 = vweird.f32 %v2036
        %vm2043 = vmor %vm2041, %vm2042
        %v2044 = vsel %vm2043, %v2036, %v2040
        %v2045 = vand.u32 2147483647, %v2032
        %vm2046 = vcmp.eq.f32.partialorder %v2045, 8.507059e+37
        %v2047 = vand.u32 %v2032, 2147483648
        %v2048 = vor.u32 1.1754944e-38, %v2047
        %v2049 = vsel %vm2046, %v2048, %v2044
        %v2050 = vmul.f32 %v2027, %v2049
        %v2051 = vrcp.pop %v2035
        %v2052 = vmul.f32 %v2035, %v2051
        %v2053 = vsub.f32 1.0, %v2052
        %v2054 = vmul.f32 %v2051, %v2053
        %v2055 = vadd.f32 %v2051, %v2054
        %vm2056 = vweird.f32 %v2035
        %vm2057 = vweird.f32 %v2051
        %vm2058 = vmor %vm2056, %vm2057
        %v2059 = vsel %vm2058, %v2051, %v2055
        %v2060 = vand.u32 2147483647, %v2035
        %vm2061 = vcmp.eq.f32.partialorder %v2060, 8.507059e+37
        %v2062 = vand.u32 %v2035, 2147483648
        %v2063 = vor.u32 1.1754944e-38, %v2062
        %v2064 = vsel %vm2061, %v2063, %v2059
        %v2065 = vmul.f32 %v2029, %v2064
        %v2066 = vpack.c.bf16 %v2050, %v2050
        %v2067 = vpack.c.bf16 %v2065, %v2065
        %v2070 = vunpack.c.l.b16 %v2066
        %v2071 = vunpack.c.l.b16 %v2067
        %v2072 = vpack.c.b16 %v2071, %v2070
        %2073 = vrot.lane.b32.xlu0 %v1870, 32
        %v2074 = vpop.permute.xlu0 %2073
        %v2076 = vsel %vm891, %v2072, 0
        %v2079 = vsel %vm920, %v2074, 0
        %2081 = vmatpush.bf16.msra.mxu0 0
        %2082 = vmatpush.bf16.msra.mxu0 0
        %2083 = vmatpush.bf16.msra.mxu0 0
        %2084 = vmatpush.bf16.msra.mxu0 0
        %2085 = vmatpush.bf16.msra.mxu0 0
        %2086 = vmatpush.bf16.msra.mxu0 0
        %2087 = vmatpush.bf16.msra.mxu0 0
        %2088 = vmatpush.bf16.msra.mxu0 %v2079
        %2089 = vmatmul.bf16.gmra.mxu0 %v2076
        %v2090 = vpop.f32.mrf.mxu0
        %v2091 = vadd.f32 0.0, %v2090
        %v2092 = vpop.f32.mrf.mxu0
        %v2093 = vadd.f32 0.0, %v2092
        %2094 = vdwg.mxu0
        %2097 = vrot.lane.b32.xlu0 %v1889, 32
        %v2098 = vpop.permute.xlu0 %2097
        %2099 = vrot.lane.b32.xlu0 %v1891, 32
        %v2100 = vpop.permute.xlu0 %2099
        %2105 = vrot.lane.b32.xlu0 %v1990, 64
        %v2106 = vpop.permute.xlu0 %2105
        %2107 = vrot.lane.b32.xlu0 %v1992, 64
        %v2108 = vpop.permute.xlu0 %2107
        %2113 = vrot.lane.b32.xlu0 %v2091, 96
        %v2114 = vpop.permute.xlu0 %2113
        %2115 = vrot.lane.b32.xlu0 %v2093, 96
        %v2116 = vpop.permute.xlu0 %2115
        %v2119 = vsel %vm871, %v1782, %v2098
        %v2120 = vsel %vm871, %v1784, %v2100
        %v2121 = vsel %vm1166, %v2119, %v2106
        %v2122 = vsel %vm1166, %v2120, %v2108
        %v2123 = vsel %vm1168, %v2121, %v2114
        %v2124 = vsel %vm1168, %v2122, %v2116
        %v2125 = vpack.c.bf16 %v2124, %v2123
        %v2126 = vld [vmem:[%s15] sm:$0xf]
        %v2127 = vld [vmem:[%s15 + $0x4] sm:$0xf]
        %v2128 = vld [vmem:[%s15 + $0x8] sm:$0xf]
        %v2129 = vld [vmem:[%s15 + $0xc] sm:$0xf]
        %v2130 = vld [vmem:[%s15 + $0x10] sm:$0xf]
        %v2131 = vld [vmem:[%s15 + $0x14] sm:$0xf]
        %v2132 = vld [vmem:[%s15 + $0x18] sm:$0xf]
        %v2133 = vld [vmem:[%s15 + $0x1c] sm:$0xf]
        %v2134 = vld [vmem:[%s15 + $0x20] sm:$0xf]
        %v2135 = vld [vmem:[%s15 + $0x24] sm:$0xf]
        %v2136 = vld [vmem:[%s15 + $0x28] sm:$0xf]
        %v2137 = vld [vmem:[%s15 + $0x2c] sm:$0xf]
        %v2138 = vld [vmem:[%s15 + $0x30] sm:$0xf]
        %v2139 = vld [vmem:[%s15 + $0x34] sm:$0xf]
        %v2140 = vld [vmem:[%s15 + $0x38] sm:$0xf]
        %v2141 = vld [vmem:[%s15 + $0x3c] sm:$0xf]
        %v2142 = vld [vmem:[%s2 + $0x17] sm:$0x1]
        %v2143 = vperm.slane %v2142, 0
        %v2160 = vunpack.c.l.b16 %v2126
        %v2161 = vunpack.c.l.b16 %v2127
        %v2162 = vunpack.c.l.b16 %v2128
        %v2163 = vunpack.c.l.b16 %v2129
        %v2164 = vunpack.c.l.b16 %v2130
        %v2165 = vunpack.c.l.b16 %v2131
        %v2166 = vunpack.c.l.b16 %v2132
        %v2167 = vunpack.c.l.b16 %v2133
        %v2168 = vunpack.c.l.b16 %v2134
        %v2169 = vunpack.c.l.b16 %v2135
        %v2170 = vunpack.c.l.b16 %v2136
        %v2171 = vunpack.c.l.b16 %v2137
        %v2172 = vunpack.c.l.b16 %v2138
        %v2173 = vunpack.c.l.b16 %v2139
        %v2174 = vunpack.c.l.b16 %v2140
        %v2175 = vunpack.c.l.b16 %v2141
        %v2176 = vpack.c.b16 %v2161, %v2160
        %v2177 = vpack.c.b16 %v2163, %v2162
        %v2178 = vpack.c.b16 %v2165, %v2164
        %v2179 = vpack.c.b16 %v2167, %v2166
        %v2180 = vpack.c.b16 %v2169, %v2168
        %v2181 = vpack.c.b16 %v2171, %v2170
        %v2182 = vpack.c.b16 %v2173, %v2172
        %v2183 = vpack.c.b16 %v2175, %v2174
        %2192 = vmatpush.bf16.msra.mxu0 %v2183
        %2193 = vmatpush.bf16.msra.mxu0 %v2182
        %2194 = vmatpush.bf16.msra.mxu0 %v2181
        %2195 = vmatpush.bf16.msra.mxu0 %v2180
        %2196 = vmatpush.bf16.msra.mxu0 %v2179
        %2197 = vmatpush.bf16.msra.mxu0 %v2178
        %2198 = vmatpush.bf16.msra.mxu0 %v2177
        %2199 = vmatpush.bf16.msra.mxu0 %v2176
        %2200 = vmatmul.bf16.gmra.mxu0 %v2125
        %v2201 = vpop.f32.mrf.mxu0
        %v2202 = vadd.f32 %v2143, %v2201
        %v2203 = vpop.f32.mrf.mxu0
        %v2204 = vadd.f32 %v2143, %v2203
        %2205 = vdwg.mxu0
        %v2206 = vadd.f32 %v2202, %v657
        %v2207 = vadd.f32 %v2204, %v658
        %v2208 = vpack.c.bf16 %v2207, %v2206
        %v2209 = vld [vmem:[%s8] sm:$0xf]
        %v2210 = vld [vmem:[%s8 + $0x4] sm:$0xf]
        %v2211 = vld [vmem:[%s8 + $0x8] sm:$0xf]
        %v2212 = vld [vmem:[%s8 + $0xc] sm:$0xf]
        %v2213 = vld [vmem:[%s8 + $0x10] sm:$0xf]
        %v2214 = vld [vmem:[%s8 + $0x14] sm:$0xf]
        %v2215 = vld [vmem:[%s8 + $0x18] sm:$0xf]
        %v2216 = vld [vmem:[%s8 + $0x1c] sm:$0xf]
        %v2217 = vld [vmem:[%s8 + $0x20] sm:$0xf]
        %v2218 = vld [vmem:[%s8 + $0x24] sm:$0xf]
        %v2219 = vld [vmem:[%s8 + $0x28] sm:$0xf]
        %v2220 = vld [vmem:[%s8 + $0x2c] sm:$0xf]
        %v2221 = vld [vmem:[%s8 + $0x30] sm:$0xf]
        %v2222 = vld [vmem:[%s8 + $0x34] sm:$0xf]
        %v2223 = vld [vmem:[%s8 + $0x38] sm:$0xf]
        %v2224 = vld [vmem:[%s8 + $0x3c] sm:$0xf]
        %v2225 = vld [vmem:[%s2 + $0xa] sm:$0x1]
        %v2226 = vperm.slane %v2225, 0
        %v2243 = vunpack.c.l.b16 %v2209
        %v2244 = vunpack.c.l.b16 %v2210
        %v2245 = vunpack.c.l.b16 %v2211
        %v2246 = vunpack.c.l.b16 %v2212
        %v2247 = vunpack.c.l.b16 %v2213
        %v2248 = vunpack.c.l.b16 %v2214
        %v2249 = vunpack.c.l.b16 %v2215
        %v2250 = vunpack.c.l.b16 %v2216
        %v2251 = vunpack.c.l.b16 %v2217
        %v2252 = vunpack.c.l.b16 %v2218
        %v2253 = vunpack.c.l.b16 %v2219
        %v2254 = vunpack.c.l.b16 %v2220
        %v2255 = vunpack.c.l.b16 %v2221
        %v2256 = vunpack.c.l.b16 %v2222
        %v2257 = vunpack.c.l.b16 %v2223
        %v2258 = vunpack.c.l.b16 %v2224
        %v2259 = vpack.c.b16 %v2244, %v2243
        %v2260 = vpack.c.b16 %v2246, %v2245
        %v2261 = vpack.c.b16 %v2248, %v2247
        %v2262 = vpack.c.b16 %v2250, %v2249
        %v2263 = vpack.c.b16 %v2252, %v2251
        %v2264 = vpack.c.b16 %v2254, %v2253
        %v2265 = vpack.c.b16 %v2256, %v2255
        %v2266 = vpack.c.b16 %v2258, %v2257
        %2275 = vmatpush.bf16.msra.mxu0 %v2266
        %2276 = vmatpush.bf16.msra.mxu0 %v2265
        %2277 = vmatpush.bf16.msra.mxu0 %v2264
        %2278 = vmatpush.bf16.msra.mxu0 %v2263
        %2279 = vmatpush.bf16.msra.mxu0 %v2262
        %2280 = vmatpush.bf16.msra.mxu0 %v2261
        %2281 = vmatpush.bf16.msra.mxu0 %v2260
        %2282 = vmatpush.bf16.msra.mxu0 %v2259
        %2283 = vmatmul.bf16.gmra.mxu0 %v2208
        %v2284 = vpop.f32.mrf.mxu0
        %v2285 = vadd.f32 %v2226, %v2284
        %v2286 = vpop.f32.mrf.mxu0
        %v2287 = vadd.f32 %v2226, %v2286
        %2288 = vdwg.mxu0
        %v2289 = vld [vmem:[%s9] sm:$0xff]
        %v2290 = vld [vmem:[%s9 + $0x8] sm:$0xff]
        %v2291 = vld [vmem:[%s9 + $0x10] sm:$0xff]
        %v2292 = vld [vmem:[%s9 + $0x18] sm:$0xff]
        %v2293 = vld [vmem:[%s9 + $0x20] sm:$0xff]
        %v2294 = vld [vmem:[%s9 + $0x28] sm:$0xff]
        %v2295 = vld [vmem:[%s9 + $0x30] sm:$0xff]
        %v2296 = vld [vmem:[%s9 + $0x38] sm:$0xff]
        %v2297 = vld [vmem:[%s9 + $0x40] sm:$0xff]
        %v2298 = vld [vmem:[%s9 + $0x48] sm:$0xff]
        %v2299 = vld [vmem:[%s9 + $0x50] sm:$0xff]
        %v2300 = vld [vmem:[%s9 + $0x58] sm:$0xff]
        %v2301 = vld [vmem:[%s9 + $0x60] sm:$0xff]
        %v2302 = vld [vmem:[%s9 + $0x68] sm:$0xff]
        %v2303 = vld [vmem:[%s9 + $0x70] sm:$0xff]
        %v2304 = vld [vmem:[%s9 + $0x78] sm:$0xff]
        %v2321 = vunpack.c.l.b16 %v2289
        %v2322 = vunpack.c.h.b16 %v2289
        %v2323 = vunpack.c.l.b16 %v2290
        %v2324 = vunpack.c.h.b16 %v2290
        %v2325 = vunpack.c.l.b16 %v2291
        %v2326 = vunpack.c.h.b16 %v2291
        %v2327 = vunpack.c.l.b16 %v2292
        %v2328 = vunpack.c.h.b16 %v2292
        %v2329 = vunpack.c.l.b16 %v2293
        %v2330 = vunpack.c.h.b16 %v2293
        %v2331 = vunpack.c.l.b16 %v2294
        %v2332 = vunpack.c.h.b16 %v2294
        %v2333 = vunpack.c.l.b16 %v2295
        %v2334 = vunpack.c.h.b16 %v2295
        %v2335 = vunpack.c.l.b16 %v2296
        %v2336 = vunpack.c.h.b16 %v2296
        %v2337 = vunpack.c.l.b16 %v2297
        %v2338 = vunpack.c.h.b16 %v2297
        %v2339 = vunpack.c.l.b16 %v2298
        %v2340 = vunpack.c.h.b16 %v2298
        %v2341 = vunpack.c.l.b16 %v2299
        %v2342 = vunpack.c.h.b16 %v2299
        %v2343 = vunpack.c.l.b16 %v2300
        %v2344 = vunpack.c.h.b16 %v2300
        %v2345 = vunpack.c.l.b16 %v2301
        %v2346 = vunpack.c.h.b16 %v2301
        %v2347 = vunpack.c.l.b16 %v2302
        %v2348 = vunpack.c.h.b16 %v2302
        %v2349 = vunpack.c.l.b16 %v2303
        %v2350 = vunpack.c.h.b16 %v2303
        %v2351 = vunpack.c.l.b16 %v2304
        %v2352 = vunpack.c.h.b16 %v2304
        %v2353 = vpack.c.b16 %v2323, %v2321
        %v2354 = vpack.c.b16 %v2324, %v2322
        %v2355 = vpack.c.b16 %v2327, %v2325
        %v2356 = vpack.c.b16 %v2328, %v2326
        %v2357 = vpack.c.b16 %v2331, %v2329
        %v2358 = vpack.c.b16 %v2332, %v2330
        %v2359 = vpack.c.b16 %v2335, %v2333
        %v2360 = vpack.c.b16 %v2336, %v2334
        %v2361 = vpack.c.b16 %v2339, %v2337
        %v2362 = vpack.c.b16 %v2340, %v2338
        %v2363 = vpack.c.b16 %v2343, %v2341
        %v2364 = vpack.c.b16 %v2344, %v2342
        %v2365 = vpack.c.b16 %v2347, %v2345
        %v2366 = vpack.c.b16 %v2348, %v2346
        %v2367 = vpack.c.b16 %v2351, %v2349
        %v2368 = vpack.c.b16 %v2352, %v2350
        %2385 = vmatpush.bf16.msra.mxu0 %v2367
        %2386 = vmatpush.bf16.msra.mxu0 %v2365
        %2387 = vmatpush.bf16.msra.mxu0 %v2363
        %2388 = vmatpush.bf16.msra.mxu0 %v2361
        %2389 = vmatpush.bf16.msra.mxu0 %v2359
        %2390 = vmatpush.bf16.msra.mxu0 %v2357
        %2391 = vmatpush.bf16.msra.mxu0 %v2355
        %2392 = vmatpush.bf16.msra.mxu0 %v2353
        %2393 = vmatmul.bf16.gmra.mxu0 %v2208
        %v2394 = vpop.f32.mrf.mxu0
        %v2395 = vadd.f32 0.0, %v2394
        %v2396 = vpop.f32.mrf.mxu0
        %v2397 = vadd.f32 0.0, %v2396
        %2398 = vdwg.mxu0
        %2399 = vmatpush.bf16.msra.mxu0 %v2368
        %2400 = vmatpush.bf16.msra.mxu0 %v2366
        %2401 = vmatpush.bf16.msra.mxu0 %v2364
        %2402 = vmatpush.bf16.msra.mxu0 %v2362
        %2403 = vmatpush.bf16.msra.mxu0 %v2360
        %2404 = vmatpush.bf16.msra.mxu0 %v2358
        %2405 = vmatpush.bf16.msra.mxu0 %v2356
        %2406 = vmatpush.bf16.msra.mxu0 %v2354
        %2407 = vmatmul.bf16.gmra.mxu0 %v2208
        %v2408 = vpop.f32.mrf.mxu0
        %v2409 = vadd.f32 0.0, %v2408
        %v2410 = vpop.f32.mrf.mxu0
        %v2411 = vadd.f32 0.0, %v2410
        %2412 = vdwg.mxu0
        %v2413 = vld [vmem:[%s2 + $0xb] sm:$0x1]
        %v2414 = vperm.slane %v2413, 0
        %v2415 = vadd.f32 %v2395, %v2414
        %v2416 = vadd.f32 %v2397, %v2414
        %v2417 = vld [vmem:[%s2 + $0xc] sm:$0x1]
        %v2418 = vperm.slane %v2417, 0
        %v2419 = vadd.f32 %v2409, %v2418
        %v2420 = vadd.f32 %v2411, %v2418
        %v2421 = vpack.c.bf16 %v2285, %v2285
        %v2422 = vpack.c.bf16 %v2287, %v2287
        %v2423 = vpack.c.bf16 %v2415, %v2415
        %v2424 = vpack.c.bf16 %v2416, %v2416
        %v2425 = vpack.c.bf16 %v2419, %v2419
        %v2426 = vpack.c.bf16 %v2420, %v2420
        %v2429 = vunpack.c.l.b16 %v2421
        %v2430 = vunpack.c.l.b16 %v2422
        %v2431 = vpack.c.b16 %v2430, %v2429
        %v2434 = vunpack.c.l.b16 %v2423
        %v2435 = vunpack.c.l.b16 %v2424
        %v2436 = vpack.c.b16 %v2435, %v2434
        %v2438 = vsel %vm871, %v2431, 0
        %v2441 = vsel %vm871, %v2436, 0
        %2443 = vmatpush.bf16.xpose.msra.mxu0 0
        %2444 = vmatpush.bf16.xpose.msra.mxu0 0
        %2445 = vmatpush.bf16.xpose.msra.mxu0 0
        %2446 = vmatpush.bf16.xpose.msra.mxu0 0
        %2447 = vmatpush.bf16.xpose.msra.mxu0 0
        %2448 = vmatpush.bf16.xpose.msra.mxu0 0
        %2449 = vmatpush.bf16.xpose.msra.mxu0 0
        %2450 = vmatpush.bf16.xpose.msra.mxu0 %v2441
        %2451 = vmatmul.bf16.gmra.mxu0 %v2438
        %v2452 = vpop.f32.mrf.mxu0
        %v2453 = vadd.f32 0.0, %v2452
        %v2454 = vpop.f32.mrf.mxu0
        %v2455 = vadd.f32 0.0, %v2454
        %2456 = vdwg.mxu0
        %vm2457 = vcmask 130048
        %v2458 = vsel %vm2457, %v2453, -inf
        %2459 = vmax.xlane.f32.xlu0 %v2458
        %v2460 = vpop.xlane.xlu0 %2459
        %v2461 = vsel %vm2457, %v2455, -inf
        %2462 = vmax.xlane.f32.xlu0 %v2461
        %v2463 = vpop.xlane.xlu0 %2462
        %v2464 = vsub.f32 %v2453, %v2460
        %v2465 = vsub.f32 %v2455, %v2463
        %v2466 = vmul.f32 %v2464, 1.442695
        %v2467 = vpow.pop %v2466
        %v2468 = vmul.f32 %v2465, 1.442695
        %v2469 = vpow.pop %v2468
        %v2470 = vsel %vm2457, %v2467, 0.0
        %2471 = vadd.xlane.f32.xlu0 %v2470
        %v2472 = vpop.xlane.xlu0 %2471
        %v2473 = vsel %vm2457, %v2469, 0.0
        %2474 = vadd.xlane.f32.xlu0 %v2473
        %v2475 = vpop.xlane.xlu0 %2474
        %v2476 = vrcp.pop %v2472
        %v2477 = vmul.f32 %v2472, %v2476
        %v2478 = vsub.f32 1.0, %v2477
        %v2479 = vmul.f32 %v2476, %v2478
        %v2480 = vadd.f32 %v2476, %v2479
        %vm2481 = vweird.f32 %v2472
        %vm2482 = vweird.f32 %v2476
        %vm2483 = vmor %vm2481, %vm2482
        %v2484 = vsel %vm2483, %v2476, %v2480
        %v2485 = vand.u32 2147483647, %v2472
        %vm2486 = vcmp.eq.f32.partialorder %v2485, 8.507059e+37
        %v2487 = vand.u32 %v2472, 2147483648
        %v2488 = vor.u32 1.1754944e-38, %v2487
        %v2489 = vsel %vm2486, %v2488, %v2484
        %v2490 = vmul.f32 %v2467, %v2489
        %v2491 = vrcp.pop %v2475
        %v2492 = vmul.f32 %v2475, %v2491
        %v2493 = vsub.f32 1.0, %v2492
        %v2494 = vmul.f32 %v2491, %v2493
        %v2495 = vadd.f32 %v2491, %v2494
        %vm2496 = vweird.f32 %v2475
        %vm2497 = vweird.f32 %v2491
        %vm2498 = vmor %vm2496, %vm2497
        %v2499 = vsel %vm2498, %v2491, %v2495
        %v2500 = vand.u32 2147483647, %v2475
        %vm2501 = vcmp.eq.f32.partialorder %v2500, 8.507059e+37
        %v2502 = vand.u32 %v2475, 2147483648
        %v2503 = vor.u32 1.1754944e-38, %v2502
        %v2504 = vsel %vm2501, %v2503, %v2499
        %v2505 = vmul.f32 %v2469, %v2504
        %v2506 = vpack.c.bf16 %v2490, %v2490
        %v2507 = vpack.c.bf16 %v2505, %v2505
        %v2510 = vunpack.c.l.b16 %v2506
        %v2511 = vunpack.c.l.b16 %v2507
        %v2512 = vpack.c.b16 %v2511, %v2510
        %v2515 = vunpack.c.l.b16 %v2425
        %v2516 = vunpack.c.l.b16 %v2426
        %v2517 = vpack.c.b16 %v2516, %v2515
        %v2520 = vsel %vm2457, %v2512, 0
        %2522 = vmatpush.bf16.msra.mxu0 0
        %2523 = vmatpush.bf16.msra.mxu0 0
        %2524 = vmatpush.bf16.msra.mxu0 0
        %2525 = vmatpush.bf16.msra.mxu0 0
        %2526 = vmatpush.bf16.msra.mxu0 0
        %2527 = vmatpush.bf16.msra.mxu0 0
        %2528 = vmatpush.bf16.msra.mxu0 0
        %2529 = vmatpush.bf16.msra.mxu0 %v2517
        %2530 = vmatmul.bf16.gmra.mxu0 %v2520
        %v2531 = vpop.f32.mrf.mxu0
        %v2532 = vadd.f32 0.0, %v2531
        %v2533 = vpop.f32.mrf.mxu0
        %v2534 = vadd.f32 0.0, %v2533
        %2535 = vdwg.mxu0
        %2536 = vrot.lane.b32.xlu0 %v2431, 96
        %v2537 = vpop.permute.xlu0 %2536
        %2538 = vrot.lane.b32.xlu0 %v2436, 96
        %v2539 = vpop.permute.xlu0 %2538
        %v2541 = vsel %vm871, %v2537, 0
        %v2544 = vsel %vm871, %v2539, 0
        %2546 = vmatpush.bf16.xpose.msra.mxu0 0
        %2547 = vmatpush.bf16.xpose.msra.mxu0 0
        %2548 = vmatpush.bf16.xpose.msra.mxu0 0
        %2549 = vmatpush.bf16.xpose.msra.mxu0 0
        %2550 = vmatpush.bf16.xpose.msra.mxu0 0
        %2551 = vmatpush.bf16.xpose.msra.mxu0 0
        %2552 = vmatpush.bf16.xpose.msra.mxu0 0
        %2553 = vmatpush.bf16.xpose.msra.mxu0 %v2544
        %2554 = vmatmul.bf16.gmra.mxu0 %v2541
        %v2555 = vpop.f32.mrf.mxu0
        %v2556 = vadd.f32 0.0, %v2555
        %v2557 = vpop.f32.mrf.mxu0
        %v2558 = vadd.f32 0.0, %v2557
        %2559 = vdwg.mxu0
        %v2560 = vsel %vm2457, %v2556, -inf
        %2561 = vmax.xlane.f32.xlu0 %v2560
        %v2562 = vpop.xlane.xlu0 %2561
        %v2563 = vsel %vm2457, %v2558, -inf
        %2564 = vmax.xlane.f32.xlu0 %v2563
        %v2565 = vpop.xlane.xlu0 %2564
        %v2566 = vsub.f32 %v2556, %v2562
        %v2567 = vsub.f32 %v2558, %v2565
        %v2568 = vmul.f32 %v2566, 1.442695
        %v2569 = vpow.pop %v2568
        %v2570 = vmul.f32 %v2567, 1.442695
        %v2571 = vpow.pop %v2570
        %v2572 = vsel %vm2457, %v2569, 0.0
        %2573 = vadd.xlane.f32.xlu0 %v2572
        %v2574 = vpop.xlane.xlu0 %2573
        %v2575 = vsel %vm2457, %v2571, 0.0
        %2576 = vadd.xlane.f32.xlu0 %v2575
        %v2577 = vpop.xlane.xlu0 %2576
        %v2578 = vrcp.pop %v2574
        %v2579 = vmul.f32 %v2574, %v2578
        %v2580 = vsub.f32 1.0, %v2579
        %v2581 = vmul.f32 %v2578, %v2580
        %v2582 = vadd.f32 %v2578, %v2581
        %vm2583 = vweird.f32 %v2574
        %vm2584 = vweird.f32 %v2578
        %vm2585 = vmor %vm2583, %vm2584
        %v2586 = vsel %vm2585, %v2578, %v2582
        %v2587 = vand.u32 2147483647, %v2574
        %vm2588 = vcmp.eq.f32.partialorder %v2587, 8.507059e+37
        %v2589 = vand.u32 %v2574, 2147483648
        %v2590 = vor.u32 1.1754944e-38, %v2589
        %v2591 = vsel %vm2588, %v2590, %v2586
        %v2592 = vmul.f32 %v2569, %v2591
        %v2593 = vrcp.pop %v2577
        %v2594 = vmul.f32 %v2577, %v2593
        %v2595 = vsub.f32 1.0, %v2594
        %v2596 = vmul.f32 %v2593, %v2595
        %v2597 = vadd.f32 %v2593, %v2596
        %vm2598 = vweird.f32 %v2577
        %vm2599 = vweird.f32 %v2593
        %vm2600 = vmor %vm2598, %vm2599
        %v2601 = vsel %vm2600, %v2593, %v2597
        %v2602 = vand.u32 2147483647, %v2577
        %vm2603 = vcmp.eq.f32.partialorder %v2602, 8.507059e+37
        %v2604 = vand.u32 %v2577, 2147483648
        %v2605 = vor.u32 1.1754944e-38, %v2604
        %v2606 = vsel %vm2603, %v2605, %v2601
        %v2607 = vmul.f32 %v2571, %v2606
        %v2608 = vpack.c.bf16 %v2592, %v2592
        %v2609 = vpack.c.bf16 %v2607, %v2607
        %v2612 = vunpack.c.l.b16 %v2608
        %v2613 = vunpack.c.l.b16 %v2609
        %v2614 = vpack.c.b16 %v2613, %v2612
        %2615 = vrot.lane.b32.xlu0 %v2517, 96
        %v2616 = vpop.permute.xlu0 %2615
        %v2619 = vsel %vm2457, %v2614, 0
        %2621 = vmatpush.bf16.msra.mxu0 0
        %2622 = vmatpush.bf16.msra.mxu0 0
        %2623 = vmatpush.bf16.msra.mxu0 0
        %2624 = vmatpush.bf16.msra.mxu0 0
        %2625 = vmatpush.bf16.msra.mxu0 0
        %2626 = vmatpush.bf16.msra.mxu0 0
        %2627 = vmatpush.bf16.msra.mxu0 0
        %2628 = vmatpush.bf16.msra.mxu0 %v2616
        %2629 = vmatmul.bf16.gmra.mxu0 %v2619
        %v2630 = vpop.f32.mrf.mxu0
        %v2631 = vadd.f32 0.0, %v2630
        %v2632 = vpop.f32.mrf.mxu0
        %v2633 = vadd.f32 0.0, %v2632
        %2634 = vdwg.mxu0
        %2635 = vrot.lane.b32.xlu0 %v2431, 64
        %v2636 = vpop.permute.xlu0 %2635
        %2637 = vrot.lane.b32.xlu0 %v2436, 64
        %v2638 = vpop.permute.xlu0 %2637
        %v2640 = vsel %vm871, %v2636, 0
        %v2643 = vsel %vm871, %v2638, 0
        %2645 = vmatpush.bf16.xpose.msra.mxu0 0
        %2646 = vmatpush.bf16.xpose.msra.mxu0 0
        %2647 = vmatpush.bf16.xpose.msra.mxu0 0
        %2648 = vmatpush.bf16.xpose.msra.mxu0 0
        %2649 = vmatpush.bf16.xpose.msra.mxu0 0
        %2650 = vmatpush.bf16.xpose.msra.mxu0 0
        %2651 = vmatpush.bf16.xpose.msra.mxu0 0
        %2652 = vmatpush.bf16.xpose.msra.mxu0 %v2643
        %2653 = vmatmul.bf16.gmra.mxu0 %v2640
        %v2654 = vpop.f32.mrf.mxu0
        %v2655 = vadd.f32 0.0, %v2654
        %v2656 = vpop.f32.mrf.mxu0
        %v2657 = vadd.f32 0.0, %v2656
        %2658 = vdwg.mxu0
        %v2659 = vsel %vm2457, %v2655, -inf
        %2660 = vmax.xlane.f32.xlu0 %v2659
        %v2661 = vpop.xlane.xlu0 %2660
        %v2662 = vsel %vm2457, %v2657, -inf
        %2663 = vmax.xlane.f32.xlu0 %v2662
        %v2664 = vpop.xlane.xlu0 %2663
        %v2665 = vsub.f32 %v2655, %v2661
        %v2666 = vsub.f32 %v2657, %v2664
        %v2667 = vmul.f32 %v2665, 1.442695
        %v2668 = vpow.pop %v2667
        %v2669 = vmul.f32 %v2666, 1.442695
        %v2670 = vpow.pop %v2669
        %v2671 = vsel %vm2457, %v2668, 0.0
        %2672 = vadd.xlane.f32.xlu0 %v2671
        %v2673 = vpop.xlane.xlu0 %2672
        %v2674 = vsel %vm2457, %v2670, 0.0
        %2675 = vadd.xlane.f32.xlu0 %v2674
        %v2676 = vpop.xlane.xlu0 %2675
        %v2677 = vrcp.pop %v2673
        %v2678 = vmul.f32 %v2673, %v2677
        %v2679 = vsub.f32 1.0, %v2678
        %v2680 = vmul.f32 %v2677, %v2679
        %v2681 = vadd.f32 %v2677, %v2680
        %vm2682 = vweird.f32 %v2673
        %vm2683 = vweird.f32 %v2677
        %vm2684 = vmor %vm2682, %vm2683
        %v2685 = vsel %vm2684, %v2677, %v2681
        %v2686 = vand.u32 2147483647, %v2673
        %vm2687 = vcmp.eq.f32.partialorder %v2686, 8.507059e+37
        %v2688 = vand.u32 %v2673, 2147483648
        %v2689 = vor.u32 1.1754944e-38, %v2688
        %v2690 = vsel %vm2687, %v2689, %v2685
        %v2691 = vmul.f32 %v2668, %v2690
        %v2692 = vrcp.pop %v2676
        %v2693 = vmul.f32 %v2676, %v2692
        %v2694 = vsub.f32 1.0, %v2693
        %v2695 = vmul.f32 %v2692, %v2694
        %v2696 = vadd.f32 %v2692, %v2695
        %vm2697 = vweird.f32 %v2676
        %vm2698 = vweird.f32 %v2692
        %vm2699 = vmor %vm2697, %vm2698
        %v2700 = vsel %vm2699, %v2692, %v2696
        %v2701 = vand.u32 2147483647, %v2676
        %vm2702 = vcmp.eq.f32.partialorder %v2701, 8.507059e+37
        %v2703 = vand.u32 %v2676, 2147483648
        %v2704 = vor.u32 1.1754944e-38, %v2703
        %v2705 = vsel %vm2702, %v2704, %v2700
        %v2706 = vmul.f32 %v2670, %v2705
        %v2707 = vpack.c.bf16 %v2691, %v2691
        %v2708 = vpack.c.bf16 %v2706, %v2706
        %v2711 = vunpack.c.l.b16 %v2707
        %v2712 = vunpack.c.l.b16 %v2708
        %v2713 = vpack.c.b16 %v2712, %v2711
        %2714 = vrot.lane.b32.xlu0 %v2517, 64
        %v2715 = vpop.permute.xlu0 %2714
        %v2718 = vsel %vm2457, %v2713, 0
        %2720 = vmatpush.bf16.msra.mxu0 0
        %2721 = vmatpush.bf16.msra.mxu0 0
        %2722 = vmatpush.bf16.msra.mxu0 0
        %2723 = vmatpush.bf16.msra.mxu0 0
        %2724 = vmatpush.bf16.msra.mxu0 0
        %2725 = vmatpush.bf16.msra.mxu0 0
        %2726 = vmatpush.bf16.msra.mxu0 0
        %2727 = vmatpush.bf16.msra.mxu0 %v2715
        %2728 = vmatmul.bf16.gmra.mxu0 %v2718
        %v2729 = vpop.f32.mrf.mxu0
        %v2730 = vadd.f32 0.0, %v2729
        %v2731 = vpop.f32.mrf.mxu0
        %v2732 = vadd.f32 0.0, %v2731
        %2733 = vdwg.mxu0
        %2734 = vrot.lane.b32.xlu0 %v2431, 32
        %v2735 = vpop.permute.xlu0 %2734
        %2736 = vrot.lane.b32.xlu0 %v2436, 32
        %v2737 = vpop.permute.xlu0 %2736
        %v2739 = vsel %vm871, %v2735, 0
        %v2742 = vsel %vm871, %v2737, 0
        %2744 = vmatpush.bf16.xpose.msra.mxu0 0
        %2745 = vmatpush.bf16.xpose.msra.mxu0 0
        %2746 = vmatpush.bf16.xpose.msra.mxu0 0
        %2747 = vmatpush.bf16.xpose.msra.mxu0 0
        %2748 = vmatpush.bf16.xpose.msra.mxu0 0
        %2749 = vmatpush.bf16.xpose.msra.mxu0 0
        %2750 = vmatpush.bf16.xpose.msra.mxu0 0
        %2751 = vmatpush.bf16.xpose.msra.mxu0 %v2742
        %2752 = vmatmul.bf16.gmra.mxu0 %v2739
        %v2753 = vpop.f32.mrf.mxu0
        %v2754 = vadd.f32 0.0, %v2753
        %v2755 = vpop.f32.mrf.mxu0
        %v2756 = vadd.f32 0.0, %v2755
        %2757 = vdwg.mxu0
        %v2758 = vsel %vm2457, %v2754, -inf
        %2759 = vmax.xlane.f32.xlu0 %v2758
        %v2760 = vpop.xlane.xlu0 %2759
        %v2761 = vsel %vm2457, %v2756, -inf
        %2762 = vmax.xlane.f32.xlu0 %v2761
        %v2763 = vpop.xlane.xlu0 %2762
        %v2764 = vsub.f32 %v2754, %v2760
        %v2765 = vsub.f32 %v2756, %v2763
        %v2766 = vmul.f32 %v2764, 1.442695
        %v2767 = vpow.pop %v2766
        %v2768 = vmul.f32 %v2765, 1.442695
        %v2769 = vpow.pop %v2768
        %v2770 = vsel %vm2457, %v2767, 0.0
        %2771 = vadd.xlane.f32.xlu0 %v2770
        %v2772 = vpop.xlane.xlu0 %2771
        %v2773 = vsel %vm2457, %v2769, 0.0
        %2774 = vadd.xlane.f32.xlu0 %v2773
        %v2775 = vpop.xlane.xlu0 %2774
        %v2776 = vrcp.pop %v2772
        %v2777 = vmul.f32 %v2772, %v2776
        %v2778 = vsub.f32 1.0, %v2777
        %v2779 = vmul.f32 %v2776, %v2778
        %v2780 = vadd.f32 %v2776, %v2779
        %vm2781 = vweird.f32 %v2772
        %vm2782 = vweird.f32 %v2776
        %vm2783 = vmor %vm2781, %vm2782
        %v2784 = vsel %vm2783, %v2776, %v2780
        %v2785 = vand.u32 2147483647, %v2772
        %vm2786 = vcmp.eq.f32.partialorder %v2785, 8.507059e+37
        %v2787 = vand.u32 %v2772, 2147483648
        %v2788 = vor.u32 1.1754944e-38, %v2787
        %v2789 = vsel %vm2786, %v2788, %v2784
        %v2790 = vmul.f32 %v2767, %v2789
        %v2791 = vrcp.pop %v2775
        %v2792 = vmul.f32 %v2775, %v2791
        %v2793 = vsub.f32 1.0, %v2792
        %v2794 = vmul.f32 %v2791, %v2793
        %v2795 = vadd.f32 %v2791, %v2794
        %vm2796 = vweird.f32 %v2775
        %vm2797 = vweird.f32 %v2791
        %vm2798 = vmor %vm2796, %vm2797
        %v2799 = vsel %vm2798, %v2791, %v2795
        %v2800 = vand.u32 2147483647, %v2775
        %vm2801 = vcmp.eq.f32.partialorder %v2800, 8.507059e+37
        %v2802 = vand.u32 %v2775, 2147483648
        %v2803 = vor.u32 1.1754944e-38, %v2802
        %v2804 = vsel %vm2801, %v2803, %v2799
        %v2805 = vmul.f32 %v2769, %v2804
        %v2806 = vpack.c.bf16 %v2790, %v2790
        %v2807 = vpack.c.bf16 %v2805, %v2805
        %v2810 = vunpack.c.l.b16 %v2806
        %v2811 = vunpack.c.l.b16 %v2807
        %v2812 = vpack.c.b16 %v2811, %v2810
        %2813 = vrot.lane.b32.xlu0 %v2517, 32
        %v2814 = vpop.permute.xlu0 %2813
        %v2817 = vsel %vm2457, %v2812, 0
        %2819 = vmatpush.bf16.msra.mxu0 0
        %2820 = vmatpush.bf16.msra.mxu0 0
        %2821 = vmatpush.bf16.msra.mxu0 0
        %2822 = vmatpush.bf16.msra.mxu0 0
        %2823 = vmatpush.bf16.msra.mxu0 0
        %2824 = vmatpush.bf16.msra.mxu0 0
        %2825 = vmatpush.bf16.msra.mxu0 0
        %2826 = vmatpush.bf16.msra.mxu0 %v2814
        %2827 = vmatmul.bf16.gmra.mxu0 %v2817
        %v2828 = vpop.f32.mrf.mxu0
        %v2829 = vadd.f32 0.0, %v2828
        %v2830 = vpop.f32.mrf.mxu0
        %v2831 = vadd.f32 0.0, %v2830
        %2832 = vdwg.mxu0
        %2835 = vrot.lane.b32.xlu0 %v2631, 32
        %v2836 = vpop.permute.xlu0 %2835
        %2837 = vrot.lane.b32.xlu0 %v2633, 32
        %v2838 = vpop.permute.xlu0 %2837
        %2843 = vrot.lane.b32.xlu0 %v2730, 64
        %v2844 = vpop.permute.xlu0 %2843
        %2845 = vrot.lane.b32.xlu0 %v2732, 64
        %v2846 = vpop.permute.xlu0 %2845
        %2851 = vrot.lane.b32.xlu0 %v2829, 96
        %v2852 = vpop.permute.xlu0 %2851
        %2853 = vrot.lane.b32.xlu0 %v2831, 96
        %v2854 = vpop.permute.xlu0 %2853
        %v2857 = vsel %vm871, %v2532, %v2836
        %v2858 = vsel %vm871, %v2534, %v2838
        %v2859 = vsel %vm1166, %v2857, %v2844
        %v2860 = vsel %vm1166, %v2858, %v2846
        %v2861 = vsel %vm1168, %v2859, %v2852
        %v2862 = vsel %vm1168, %v2860, %v2854
        %v2863 = vpack.c.bf16 %v2862, %v2861
        %v2864 = vld [vmem:[%s10] sm:$0xf]
        %v2865 = vld [vmem:[%s10 + $0x4] sm:$0xf]
        %v2866 = vld [vmem:[%s10 + $0x8] sm:$0xf]
        %v2867 = vld [vmem:[%s10 + $0xc] sm:$0xf]
        %v2868 = vld [vmem:[%s10 + $0x10] sm:$0xf]
        %v2869 = vld [vmem:[%s10 + $0x14] sm:$0xf]
        %v2870 = vld [vmem:[%s10 + $0x18] sm:$0xf]
        %v2871 = vld [vmem:[%s10 + $0x1c] sm:$0xf]
        %v2872 = vld [vmem:[%s10 + $0x20] sm:$0xf]
        %v2873 = vld [vmem:[%s10 + $0x24] sm:$0xf]
        %v2874 = vld [vmem:[%s10 + $0x28] sm:$0xf]
        %v2875 = vld [vmem:[%s10 + $0x2c] sm:$0xf]
        %v2876 = vld [vmem:[%s10 + $0x30] sm:$0xf]
        %v2877 = vld [vmem:[%s10 + $0x34] sm:$0xf]
        %v2878 = vld [vmem:[%s10 + $0x38] sm:$0xf]
        %v2879 = vld [vmem:[%s10 + $0x3c] sm:$0xf]
        %v2880 = vld [vmem:[%s2 + $0xd] sm:$0x1]
        %v2881 = vperm.slane %v2880, 0
        %v2898 = vunpack.c.l.b16 %v2864
        %v2899 = vunpack.c.l.b16 %v2865
        %v2900 = vunpack.c.l.b16 %v2866
        %v2901 = vunpack.c.l.b16 %v2867
        %v2902 = vunpack.c.l.b16 %v2868
        %v2903 = vunpack.c.l.b16 %v2869
        %v2904 = vunpack.c.l.b16 %v2870
        %v2905 = vunpack.c.l.b16 %v2871
        %v2906 = vunpack.c.l.b16 %v2872
        %v2907 = vunpack.c.l.b16 %v2873
        %v2908 = vunpack.c.l.b16 %v2874
        %v2909 = vunpack.c.l.b16 %v2875
        %v2910 = vunpack.c.l.b16 %v2876
        %v2911 = vunpack.c.l.b16 %v2877
        %v2912 = vunpack.c.l.b16 %v2878
        %v2913 = vunpack.c.l.b16 %v2879
        %v2914 = vpack.c.b16 %v2899, %v2898
        %v2915 = vpack.c.b16 %v2901, %v2900
        %v2916 = vpack.c.b16 %v2903, %v2902
        %v2917 = vpack.c.b16 %v2905, %v2904
        %v2918 = vpack.c.b16 %v2907, %v2906
        %v2919 = vpack.c.b16 %v2909, %v2908
        %v2920 = vpack.c.b16 %v2911, %v2910
        %v2921 = vpack.c.b16 %v2913, %v2912
        %2930 = vmatpush.bf16.msra.mxu0 %v2921
        %2931 = vmatpush.bf16.msra.mxu0 %v2920
        %2932 = vmatpush.bf16.msra.mxu0 %v2919
        %2933 = vmatpush.bf16.msra.mxu0 %v2918
        %2934 = vmatpush.bf16.msra.mxu0 %v2917
        %2935 = vmatpush.bf16.msra.mxu0 %v2916
        %2936 = vmatpush.bf16.msra.mxu0 %v2915
        %2937 = vmatpush.bf16.msra.mxu0 %v2914
        %2938 = vmatmul.bf16.gmra.mxu0 %v2863
        %v2939 = vpop.f32.mrf.mxu0
        %v2940 = vadd.f32 %v2881, %v2939
        %v2941 = vpop.f32.mrf.mxu0
        %v2942 = vadd.f32 %v2881, %v2941
        %2943 = vdwg.mxu0
        %v2944 = vld [vmem:[%s2 + $0x10] sm:$0x1]
        %v2945 = vld [vmem:[%s2 + $0x11] sm:$0x1]
        %v2946 = vadd.f32 %v2206, %v2940
        %v2947 = vadd.f32 %v2207, %v2942
        %2948 = vadd.xlane.f32.xlu0 %v2946
        %v2949 = vpop.xlane.xlu0 %2948
        %2950 = vadd.xlane.f32.xlu0 %v2947
        %v2951 = vpop.xlane.xlu0 %2950
        %v2952 = vmul.f32 %v2949, %v1261
        %v2953 = vmul.f32 %v2951, %v1261
        %v2954 = vsub.f32 %v2946, %v2952
        %v2955 = vsub.f32 %v2947, %v2953
        %v2956 = vmul.f32 %v2954, %v2954
        %v2957 = vmul.f32 %v2955, %v2955
        %2958 = vadd.xlane.f32.xlu0 %v2956
        %v2959 = vpop.xlane.xlu0 %2958
        %2960 = vadd.xlane.f32.xlu0 %v2957
        %v2961 = vpop.xlane.xlu0 %2960
        %v2962 = vmul.f32 %v2959, %v1261
        %v2963 = vmul.f32 %v2961, %v1261
        %v2964 = vadd.f32 %v2962, 1e-05
        %v2965 = vadd.f32 %v2963, 1e-05
        %v2966 = vrsqrt.pop %v2964
        %v2967 = vmul.f32 %v2966, %v2964
        %v2968 = vmul.f32 %v2967, %v2966
        %v2969 = vmul.f32 0.5, %v2968
        %v2970 = vsub.f32 1.5, %v2969
        %v2971 = vmul.f32 %v2966, %v2970
        %vm2972 = vweird.f32 %v2964
        %vm2973 = vweird.f32 %v2966
        %vm2974 = vmor %vm2972, %vm2973
        %v2975 = vsel %vm2974, %v2966, %v2971
        %v2976 = vrsqrt.pop %v2965
        %v2977 = vmul.f32 %v2976, %v2965
        %v2978 = vmul.f32 %v2977, %v2976
        %v2979 = vmul.f32 0.5, %v2978
        %v2980 = vsub.f32 1.5, %v2979
        %v2981 = vmul.f32 %v2976, %v2980
        %vm2982 = vweird.f32 %v2965
        %vm2983 = vweird.f32 %v2976
        %vm2984 = vmor %vm2982, %vm2983
        %v2985 = vsel %vm2984, %v2976, %v2981
        %v2986 = vmul.f32 %v2954, %v2975
        %v2987 = vmul.f32 %v2955, %v2985
        %v2988 = vperm.slane %v2944, 0
        %v2989 = vmul.f32 %v2986, %v2988
        %v2990 = vmul.f32 %v2987, %v2988
        %v2991 = vperm.slane %v2945, 0
        %v2992 = vadd.f32 %v2989, %v2991
        %v2993 = vadd.f32 %v2990, %v2991
        %v2994 = vpack.c.bf16 %v2993, %v2992
        %v2995 = vld [vmem:[%s11] sm:$0xf]
        %v2996 = vld [vmem:[%s11 + $0x4] sm:$0xf]
        %v2997 = vld [vmem:[%s11 + $0x8] sm:$0xf]
        %v2998 = vld [vmem:[%s11 + $0xc] sm:$0xf]
        %v2999 = vld [vmem:[%s11 + $0x10] sm:$0xf]
        %v3000 = vld [vmem:[%s11 + $0x14] sm:$0xf]
        %v3001 = vld [vmem:[%s11 + $0x18] sm:$0xf]
        %v3002 = vld [vmem:[%s11 + $0x1c] sm:$0xf]
        %v3003 = vld [vmem:[%s11 + $0x20] sm:$0xf]
        %v3004 = vld [vmem:[%s11 + $0x24] sm:$0xf]
        %v3005 = vld [vmem:[%s11 + $0x28] sm:$0xf]
        %v3006 = vld [vmem:[%s11 + $0x2c] sm:$0xf]
        %v3007 = vld [vmem:[%s11 + $0x30] sm:$0xf]
        %v3008 = vld [vmem:[%s11 + $0x34] sm:$0xf]
        %v3009 = vld [vmem:[%s11 + $0x38] sm:$0xf]
        %v3010 = vld [vmem:[%s11 + $0x3c] sm:$0xf]
        %v3011 = vld [vmem:[%s2 + $0xe] sm:$0x1]
        %v3012 = vperm.slane %v3011, 0
        %v3029 = vunpack.c.l.b16 %v2995
        %v3030 = vunpack.c.l.b16 %v2996
        %v3031 = vunpack.c.l.b16 %v2997
        %v3032 = vunpack.c.l.b16 %v2998
        %v3033 = vunpack.c.l.b16 %v2999
        %v3034 = vunpack.c.l.b16 %v3000
        %v3035 = vunpack.c.l.b16 %v3001
        %v3036 = vunpack.c.l.b16 %v3002
        %v3037 = vunpack.c.l.b16 %v3003
        %v3038 = vunpack.c.l.b16 %v3004
        %v3039 = vunpack.c.l.b16 %v3005
        %v3040 = vunpack.c.l.b16 %v3006
        %v3041 = vunpack.c.l.b16 %v3007
        %v3042 = vunpack.c.l.b16 %v3008
        %v3043 = vunpack.c.l.b16 %v3009
        %v3044 = vunpack.c.l.b16 %v3010
        %v3045 = vpack.c.b16 %v3030, %v3029
        %v3046 = vpack.c.b16 %v3032, %v3031
        %v3047 = vpack.c.b16 %v3034, %v3033
        %v3048 = vpack.c.b16 %v3036, %v3035
        %v3049 = vpack.c.b16 %v3038, %v3037
        %v3050 = vpack.c.b16 %v3040, %v3039
        %v3051 = vpack.c.b16 %v3042, %v3041
        %v3052 = vpack.c.b16 %v3044, %v3043
        %3061 = vmatpush.bf16.msra.mxu0 %v3052
        %3062 = vmatpush.bf16.msra.mxu0 %v3051
        %3063 = vmatpush.bf16.msra.mxu0 %v3050
        %3064 = vmatpush.bf16.msra.mxu0 %v3049
        %3065 = vmatpush.bf16.msra.mxu0 %v3048
        %3066 = vmatpush.bf16.msra.mxu0 %v3047
        %3067 = vmatpush.bf16.msra.mxu0 %v3046
        %3068 = vmatpush.bf16.msra.mxu0 %v3045
        %3069 = vmatmul.bf16.gmra.mxu0 %v2994
        %v3070 = vpop.f32.mrf.mxu0
        %v3071 = vadd.f32 %v3012, %v3070
        %v3072 = vpop.f32.mrf.mxu0
        %v3073 = vadd.f32 %v3012, %v3072
        %3074 = vdwg.mxu0
        %v3075 = vmax.f32 %v3071, 0.0
        %v3076 = vmax.f32 %v3073, 0.0
        %v3077 = vpack.c.bf16 %v3076, %v3075
        %v3078 = vld [vmem:[%s12] sm:$0xf]
        %v3079 = vld [vmem:[%s12 + $0x4] sm:$0xf]
        %v3080 = vld [vmem:[%s12 + $0x8] sm:$0xf]
        %v3081 = vld [vmem:[%s12 + $0xc] sm:$0xf]
        %v3082 = vld [vmem:[%s12 + $0x10] sm:$0xf]
        %v3083 = vld [vmem:[%s12 + $0x14] sm:$0xf]
        %v3084 = vld [vmem:[%s12 + $0x18] sm:$0xf]
        %v3085 = vld [vmem:[%s12 + $0x1c] sm:$0xf]
        %v3086 = vld [vmem:[%s12 + $0x20] sm:$0xf]
        %v3087 = vld [vmem:[%s12 + $0x24] sm:$0xf]
        %v3088 = vld [vmem:[%s12 + $0x28] sm:$0xf]
        %v3089 = vld [vmem:[%s12 + $0x2c] sm:$0xf]
        %v3090 = vld [vmem:[%s12 + $0x30] sm:$0xf]
        %v3091 = vld [vmem:[%s12 + $0x34] sm:$0xf]
        %v3092 = vld [vmem:[%s12 + $0x38] sm:$0xf]
        %v3093 = vld [vmem:[%s12 + $0x3c] sm:$0xf]
        %v3094 = vld [vmem:[%s2 + $0xf] sm:$0x1]
        %v3095 = vperm.slane %v3094, 0
        %v3112 = vunpack.c.l.b16 %v3078
        %v3113 = vunpack.c.l.b16 %v3079
        %v3114 = vunpack.c.l.b16 %v3080
        %v3115 = vunpack.c.l.b16 %v3081
        %v3116 = vunpack.c.l.b16 %v3082
        %v3117 = vunpack.c.l.b16 %v3083
        %v3118 = vunpack.c.l.b16 %v3084
        %v3119 = vunpack.c.l.b16 %v3085
        %v3120 = vunpack.c.l.b16 %v3086
        %v3121 = vunpack.c.l.b16 %v3087
        %v3122 = vunpack.c.l.b16 %v3088
        %v3123 = vunpack.c.l.b16 %v3089
        %v3124 = vunpack.c.l.b16 %v3090
        %v3125 = vunpack.c.l.b16 %v3091
        %v3126 = vunpack.c.l.b16 %v3092
        %v3127 = vunpack.c.l.b16 %v3093
        %v3128 = vpack.c.b16 %v3113, %v3112
        %v3129 = vpack.c.b16 %v3115, %v3114
        %v3130 = vpack.c.b16 %v3117, %v3116
        %v3131 = vpack.c.b16 %v3119, %v3118
        %v3132 = vpack.c.b16 %v3121, %v3120
        %v3133 = vpack.c.b16 %v3123, %v3122
        %v3134 = vpack.c.b16 %v3125, %v3124
        %v3135 = vpack.c.b16 %v3127, %v3126
        %3144 = vmatpush.bf16.msra.mxu0 %v3135
        %3145 = vmatpush.bf16.msra.mxu0 %v3134
        %3146 = vmatpush.bf16.msra.mxu0 %v3133
        %3147 = vmatpush.bf16.msra.mxu0 %v3132
        %3148 = vmatpush.bf16.msra.mxu0 %v3131
        %3149 = vmatpush.bf16.msra.mxu0 %v3130
        %3150 = vmatpush.bf16.msra.mxu0 %v3129
        %3151 = vmatpush.bf16.msra.mxu0 %v3128
        %3152 = vmatmul.bf16.gmra.mxu0 %v3077
        %v3153 = vpop.f32.mrf.mxu0
        %v3154 = vadd.f32 %v3095, %v3153
        %v3155 = vpop.f32.mrf.mxu0
        %v3156 = vadd.f32 %v3095, %v3155
        %3157 = vdwg.mxu0
        %v3158 = vld [vmem:[%s2 + $0x12] sm:$0x1]
        %v3159 = vld [vmem:[%s2 + $0x13] sm:$0x1]
        %v3160 = vadd.f32 %v2992, %v3154
        %v3161 = vadd.f32 %v2993, %v3156
        %3162 = vadd.xlane.f32.xlu0 %v3160
        %v3163 = vpop.xlane.xlu0 %3162
        %3164 = vadd.xlane.f32.xlu0 %v3161
        %v3165 = vpop.xlane.xlu0 %3164
        %v3166 = vmul.f32 %v3163, %v1261
        %v3167 = vmul.f32 %v3165, %v1261
        %v3168 = vsub.f32 %v3160, %v3166
        %v3169 = vsub.f32 %v3161, %v3167
        %v3170 = vmul.f32 %v3168, %v3168
        %v3171 = vmul.f32 %v3169, %v3169
        %3172 = vadd.xlane.f32.xlu0 %v3170
        %v3173 = vpop.xlane.xlu0 %3172
        %3174 = vadd.xlane.f32.xlu0 %v3171
        %v3175 = vpop.xlane.xlu0 %3174
        %v3176 = vmul.f32 %v3173, %v1261
        %v3177 = vmul.f32 %v3175, %v1261
        %v3178 = vadd.f32 %v3176, 1e-05
        %v3179 = vadd.f32 %v3177, 1e-05
        %v3180 = vrsqrt.pop %v3178
        %v3181 = vmul.f32 %v3180, %v3178
        %v3182 = vmul.f32 %v3181, %v3180
        %v3183 = vmul.f32 0.5, %v3182
        %v3184 = vsub.f32 1.5, %v3183
        %v3185 = vmul.f32 %v3180, %v3184
        %vm3186 = vweird.f32 %v3178
        %vm3187 = vweird.f32 %v3180
        %vm3188 = vmor %vm3186, %vm3187
        %v3189 = vsel %vm3188, %v3180, %v3185
        %v3190 = vrsqrt.pop %v3179
        %v3191 = vmul.f32 %v3190, %v3179
        %v3192 = vmul.f32 %v3191, %v3190
        %v3193 = vmul.f32 0.5, %v3192
        %v3194 = vsub.f32 1.5, %v3193
        %v3195 = vmul.f32 %v3190, %v3194
        %vm3196 = vweird.f32 %v3179
        %vm3197 = vweird.f32 %v3190
        %vm3198 = vmor %vm3196, %vm3197
        %v3199 = vsel %vm3198, %v3190, %v3195
        %v3200 = vmul.f32 %v3168, %v3189
        %v3201 = vmul.f32 %v3169, %v3199
        %v3202 = vperm.slane %v3158, 0
        %v3203 = vmul.f32 %v3200, %v3202
        %v3204 = vmul.f32 %v3201, %v3202
        %v3205 = vperm.slane %v3159, 0
        %v3206 = vadd.f32 %v3203, %v3205
        %v3207 = vadd.f32 %v3204, %v3205
        %v3208 = vpack.c.bf16 %v3207, %v3206
        %v3209 = vld [vmem:[%s16] sm:$0xf]
        %v3210 = vld [vmem:[%s16 + $0x4] sm:$0xf]
        %v3211 = vld [vmem:[%s16 + $0x8] sm:$0xf]
        %v3212 = vld [vmem:[%s16 + $0xc] sm:$0xf]
        %v3213 = vld [vmem:[%s16 + $0x10] sm:$0xf]
        %v3214 = vld [vmem:[%s16 + $0x14] sm:$0xf]
        %v3215 = vld [vmem:[%s16 + $0x18] sm:$0xf]
        %v3216 = vld [vmem:[%s16 + $0x1c] sm:$0xf]
        %v3217 = vld [vmem:[%s16 + $0x20] sm:$0xf]
        %v3218 = vld [vmem:[%s16 + $0x24] sm:$0xf]
        %v3219 = vld [vmem:[%s16 + $0x28] sm:$0xf]
        %v3220 = vld [vmem:[%s16 + $0x2c] sm:$0xf]
        %v3221 = vld [vmem:[%s16 + $0x30] sm:$0xf]
        %v3222 = vld [vmem:[%s16 + $0x34] sm:$0xf]
        %v3223 = vld [vmem:[%s16 + $0x38] sm:$0xf]
        %v3224 = vld [vmem:[%s16 + $0x3c] sm:$0xf]
        %v3225 = vld [vmem:[%s2 + $0x18] sm:$0x1]
        %v3226 = vperm.slane %v3225, 0
        %v3243 = vunpack.c.l.b16 %v3209
        %v3244 = vunpack.c.l.b16 %v3210
        %v3245 = vunpack.c.l.b16 %v3211
        %v3246 = vunpack.c.l.b16 %v3212
        %v3247 = vunpack.c.l.b16 %v3213
        %v3248 = vunpack.c.l.b16 %v3214
        %v3249 = vunpack.c.l.b16 %v3215
        %v3250 = vunpack.c.l.b16 %v3216
        %v3251 = vunpack.c.l.b16 %v3217
        %v3252 = vunpack.c.l.b16 %v3218
        %v3253 = vunpack.c.l.b16 %v3219
        %v3254 = vunpack.c.l.b16 %v3220
        %v3255 = vunpack.c.l.b16 %v3221
        %v3256 = vunpack.c.l.b16 %v3222
        %v3257 = vunpack.c.l.b16 %v3223
        %v3258 = vunpack.c.l.b16 %v3224
        %v3259 = vpack.c.b16 %v3244, %v3243
        %v3260 = vpack.c.b16 %v3246, %v3245
        %v3261 = vpack.c.b16 %v3248, %v3247
        %v3262 = vpack.c.b16 %v3250, %v3249
        %v3263 = vpack.c.b16 %v3252, %v3251
        %v3264 = vpack.c.b16 %v3254, %v3253
        %v3265 = vpack.c.b16 %v3256, %v3255
        %v3266 = vpack.c.b16 %v3258, %v3257
        %3275 = vmatpush.bf16.msra.mxu0 %v3266
        %3276 = vmatpush.bf16.msra.mxu0 %v3265
        %3277 = vmatpush.bf16.msra.mxu0 %v3264
        %3278 = vmatpush.bf16.msra.mxu0 %v3263
        %3279 = vmatpush.bf16.msra.mxu0 %v3262
        %3280 = vmatpush.bf16.msra.mxu0 %v3261
        %3281 = vmatpush.bf16.msra.mxu0 %v3260
        %3282 = vmatpush.bf16.msra.mxu0 %v3259
        %3283 = vmatmul.bf16.gmra.mxu0 %v1473
        %v3284 = vpop.f32.mrf.mxu0
        %v3285 = vadd.f32 %v3226, %v3284
        %v3286 = vpop.f32.mrf.mxu0
        %3287 = vdwg.mxu0
        %v3288 = vld [vmem:[%s17] sm:$0xff]
        %v3289 = vld [vmem:[%s17 + $0x8] sm:$0xff]
        %v3290 = vld [vmem:[%s17 + $0x10] sm:$0xff]
        %v3291 = vld [vmem:[%s17 + $0x18] sm:$0xff]
        %v3292 = vld [vmem:[%s17 + $0x20] sm:$0xff]
        %v3293 = vld [vmem:[%s17 + $0x28] sm:$0xff]
        %v3294 = vld [vmem:[%s17 + $0x30] sm:$0xff]
        %v3295 = vld [vmem:[%s17 + $0x38] sm:$0xff]
        %v3296 = vld [vmem:[%s17 + $0x40] sm:$0xff]
        %v3297 = vld [vmem:[%s17 + $0x48] sm:$0xff]
        %v3298 = vld [vmem:[%s17 + $0x50] sm:$0xff]
        %v3299 = vld [vmem:[%s17 + $0x58] sm:$0xff]
        %v3300 = vld [vmem:[%s17 + $0x60] sm:$0xff]
        %v3301 = vld [vmem:[%s17 + $0x68] sm:$0xff]
        %v3302 = vld [vmem:[%s17 + $0x70] sm:$0xff]
        %v3303 = vld [vmem:[%s17 + $0x78] sm:$0xff]
        %v3320 = vunpack.c.l.b16 %v3288
        %v3321 = vunpack.c.h.b16 %v3288
        %v3322 = vunpack.c.l.b16 %v3289
        %v3323 = vunpack.c.h.b16 %v3289
        %v3324 = vunpack.c.l.b16 %v3290
        %v3325 = vunpack.c.h.b16 %v3290
        %v3326 = vunpack.c.l.b16 %v3291
        %v3327 = vunpack.c.h.b16 %v3291
        %v3328 = vunpack.c.l.b16 %v3292
        %v3329 = vunpack.c.h.b16 %v3292
        %v3330 = vunpack.c.l.b16 %v3293
        %v3331 = vunpack.c.h.b16 %v3293
        %v3332 = vunpack.c.l.b16 %v3294
        %v3333 = vunpack.c.h.b16 %v3294
        %v3334 = vunpack.c.l.b16 %v3295
        %v3335 = vunpack.c.h.b16 %v3295
        %v3336 = vunpack.c.l.b16 %v3296
        %v3337 = vunpack.c.h.b16 %v3296
        %v3338 = vunpack.c.l.b16 %v3297
        %v3339 = vunpack.c.h.b16 %v3297
        %v3340 = vunpack.c.l.b16 %v3298
        %v3341 = vunpack.c.h.b16 %v3298
        %v3342 = vunpack.c.l.b16 %v3299
        %v3343 = vunpack.c.h.b16 %v3299
        %v3344 = vunpack.c.l.b16 %v3300
        %v3345 = vunpack.c.h.b16 %v3300
        %v3346 = vunpack.c.l.b16 %v3301
        %v3347 = vunpack.c.h.b16 %v3301
        %v3348 = vunpack.c.l.b16 %v3302
        %v3349 = vunpack.c.h.b16 %v3302
        %v3350 = vunpack.c.l.b16 %v3303
        %v3351 = vunpack.c.h.b16 %v3303
        %v3352 = vpack.c.b16 %v3322, %v3320
        %v3353 = vpack.c.b16 %v3323, %v3321
        %v3354 = vpack.c.b16 %v3326, %v3324
        %v3355 = vpack.c.b16 %v3327, %v3325
        %v3356 = vpack.c.b16 %v3330, %v3328
        %v3357 = vpack.c.b16 %v3331, %v3329
        %v3358 = vpack.c.b16 %v3334, %v3332
        %v3359 = vpack.c.b16 %v3335, %v3333
        %v3360 = vpack.c.b16 %v3338, %v3336
        %v3361 = vpack.c.b16 %v3339, %v3337
        %v3362 = vpack.c.b16 %v3342, %v3340
        %v3363 = vpack.c.b16 %v3343, %v3341
        %v3364 = vpack.c.b16 %v3346, %v3344
        %v3365 = vpack.c.b16 %v3347, %v3345
        %v3366 = vpack.c.b16 %v3350, %v3348
        %v3367 = vpack.c.b16 %v3351, %v3349
        %3384 = vmatpush.bf16.msra.mxu0 %v3366
        %3385 = vmatpush.bf16.msra.mxu0 %v3364
        %3386 = vmatpush.bf16.msra.mxu0 %v3362
        %3387 = vmatpush.bf16.msra.mxu0 %v3360
        %3388 = vmatpush.bf16.msra.mxu0 %v3358
        %3389 = vmatpush.bf16.msra.mxu0 %v3356
        %3390 = vmatpush.bf16.msra.mxu0 %v3354
        %3391 = vmatpush.bf16.msra.mxu0 %v3352
        %3392 = vmatmul.bf16.gmra.mxu0 %v3208
        %v3393 = vpop.f32.mrf.mxu0
        %v3394 = vadd.f32 0.0, %v3393
        %v3395 = vpop.f32.mrf.mxu0
        %v3396 = vadd.f32 0.0, %v3395
        %3397 = vdwg.mxu0
        %3398 = vmatpush.bf16.msra.mxu0 %v3367
        %3399 = vmatpush.bf16.msra.mxu0 %v3365
        %3400 = vmatpush.bf16.msra.mxu0 %v3363
        %3401 = vmatpush.bf16.msra.mxu0 %v3361
        %3402 = vmatpush.bf16.msra.mxu0 %v3359
        %3403 = vmatpush.bf16.msra.mxu0 %v3357
        %3404 = vmatpush.bf16.msra.mxu0 %v3355
        %3405 = vmatpush.bf16.msra.mxu0 %v3353
        %3406 = vmatmul.bf16.gmra.mxu0 %v3208
        %v3407 = vpop.f32.mrf.mxu0
        %v3408 = vadd.f32 0.0, %v3407
        %v3409 = vpop.f32.mrf.mxu0
        %v3410 = vadd.f32 0.0, %v3409
        %3411 = vdwg.mxu0
        %v3412 = vld [vmem:[%s2 + $0x19] sm:$0x1]
        %v3413 = vperm.slane %v3412, 0
        %v3414 = vadd.f32 %v3394, %v3413
        %v3415 = vadd.f32 %v3396, %v3413
        %v3416 = vld [vmem:[%s2 + $0x1a] sm:$0x1]
        %v3417 = vperm.slane %v3416, 0
        %v3418 = vadd.f32 %v3408, %v3417
        %v3419 = vadd.f32 %v3410, %v3417
        %v3420 = vpack.c.bf16 %v3285, %v3285
        %v3421 = vpack.c.bf16 %v3414, %v3414
        %v3422 = vpack.c.bf16 %v3415, %v3415
        %v3423 = vpack.c.bf16 %v3418, %v3418
        %v3424 = vpack.c.bf16 %v3419, %v3419
        %v3427 = vunpack.c.l.b16 %v3421
        %v3428 = vunpack.c.l.b16 %v3422
        %v3429 = vpack.c.b16 %v3428, %v3427
        %v3431 = vsel %vm871, %v3420, 0
        %v3434 = vsel %vm871, %v3429, 0
        %3436 = vmatpush.bf16.xpose.msra.mxu0 0
        %3437 = vmatpush.bf16.xpose.msra.mxu0 0
        %3438 = vmatpush.bf16.xpose.msra.mxu0 0
        %3439 = vmatpush.bf16.xpose.msra.mxu0 0
        %3440 = vmatpush.bf16.xpose.msra.mxu0 0
        %3441 = vmatpush.bf16.xpose.msra.mxu0 0
        %3442 = vmatpush.bf16.xpose.msra.mxu0 0
        %3443 = vmatpush.bf16.xpose.msra.mxu0 %v3434
        %3444 = vmatmul.bf16.gmra.mxu0 %v3431
        %v3445 = vpop.f32.mrf.mxu0
        %v3446 = vadd.f32 0.0, %v3445
        %v3447 = vpop.f32.mrf.mxu0
        %3448 = vdwg.mxu0
        %v3449 = vsel %vm2457, %v3446, -inf
        %3450 = vmax.xlane.f32.xlu0 %v3449
        %v3451 = vpop.xlane.xlu0 %3450
        %v3452 = vsub.f32 %v3446, %v3451
        %v3453 = vmul.f32 %v3452, 1.442695
        %v3454 = vpow.pop %v3453
        %v3455 = vsel %vm2457, %v3454, 0.0
        %3456 = vadd.xlane.f32.xlu0 %v3455
        %v3457 = vpop.xlane.xlu0 %3456
        %v3458 = vrcp.pop %v3457
        %v3459 = vmul.f32 %v3457, %v3458
        %v3460 = vsub.f32 1.0, %v3459
        %v3461 = vmul.f32 %v3458, %v3460
        %v3462 = vadd.f32 %v3458, %v3461
        %vm3463 = vweird.f32 %v3457
        %vm3464 = vweird.f32 %v3458
        %vm3465 = vmor %vm3463, %vm3464
        %v3466 = vsel %vm3465, %v3458, %v3462
        %v3467 = vand.u32 2147483647, %v3457
        %vm3468 = vcmp.eq.f32.partialorder %v3467, 8.507059e+37
        %v3469 = vand.u32 %v3457, 2147483648
        %v3470 = vor.u32 1.1754944e-38, %v3469
        %v3471 = vsel %vm3468, %v3470, %v3466
        %v3472 = vmul.f32 %v3454, %v3471
        %v3473 = vpack.c.bf16 %v3472, %v3472
        %v3476 = vunpack.c.l.b16 %v3423
        %v3477 = vunpack.c.l.b16 %v3424
        %v3478 = vpack.c.b16 %v3477, %v3476
        %v3481 = vsel %vm2457, %v3473, 0
        %3483 = vmatpush.bf16.msra.mxu0 0
        %3484 = vmatpush.bf16.msra.mxu0 0
        %3485 = vmatpush.bf16.msra.mxu0 0
        %3486 = vmatpush.bf16.msra.mxu0 0
        %3487 = vmatpush.bf16.msra.mxu0 0
        %3488 = vmatpush.bf16.msra.mxu0 0
        %3489 = vmatpush.bf16.msra.mxu0 0
        %3490 = vmatpush.bf16.msra.mxu0 %v3478
        %3491 = vmatmul.bf16.gmra.mxu0 %v3481
        %v3492 = vpop.f32.mrf.mxu0
        %v3493 = vadd.f32 0.0, %v3492
        %v3494 = vpop.f32.mrf.mxu0
        %3495 = vdwg.mxu0
        %v3497 = vunpack.c.l.b16 %v3420
        %v3498 = vpack.c.b16 %v3497, %v3497
        %3499 = vrot.lane.b32.xlu0 %v3498, 96
        %v3500 = vpop.permute.xlu0 %3499
        %3501 = vrot.lane.b32.xlu0 %v3429, 96
        %v3502 = vpop.permute.xlu0 %3501
        %v3504 = vsel %vm871, %v3500, 0
        %v3507 = vsel %vm871, %v3502, 0
        %3509 = vmatpush.bf16.xpose.msra.mxu0 0
        %3510 = vmatpush.bf16.xpose.msra.mxu0 0
        %3511 = vmatpush.bf16.xpose.msra.mxu0 0
        %3512 = vmatpush.bf16.xpose.msra.mxu0 0
        %3513 = vmatpush.bf16.xpose.msra.mxu0 0
        %3514 = vmatpush.bf16.xpose.msra.mxu0 0
        %3515 = vmatpush.bf16.xpose.msra.mxu0 0
        %3516 = vmatpush.bf16.xpose.msra.mxu0 %v3507
        %3517 = vmatmul.bf16.gmra.mxu0 %v3504
        %v3518 = vpop.f32.mrf.mxu0
        %v3519 = vadd.f32 0.0, %v3518
        %v3520 = vpop.f32.mrf.mxu0
        %3521 = vdwg.mxu0
        %v3522 = vsel %vm2457, %v3519, -inf
        %3523 = vmax.xlane.f32.xlu0 %v3522
        %v3524 = vpop.xlane.xlu0 %3523
        %v3525 = vsub.f32 %v3519, %v3524
        %v3526 = vmul.f32 %v3525, 1.442695
        %v3527 = vpow.pop %v3526
        %v3528 = vsel %vm2457, %v3527, 0.0
        %3529 = vadd.xlane.f32.xlu0 %v3528
        %v3530 = vpop.xlane.xlu0 %3529
        %v3531 = vrcp.pop %v3530
        %v3532 = vmul.f32 %v3530, %v3531
        %v3533 = vsub.f32 1.0, %v3532
        %v3534 = vmul.f32 %v3531, %v3533
        %v3535 = vadd.f32 %v3531, %v3534
        %vm3536 = vweird.f32 %v3530
        %vm3537 = vweird.f32 %v3531
        %vm3538 = vmor %vm3536, %vm3537
        %v3539 = vsel %vm3538, %v3531, %v3535
        %v3540 = vand.u32 2147483647, %v3530
        %vm3541 = vcmp.eq.f32.partialorder %v3540, 8.507059e+37
        %v3542 = vand.u32 %v3530, 2147483648
        %v3543 = vor.u32 1.1754944e-38, %v3542
        %v3544 = vsel %vm3541, %v3543, %v3539
        %v3545 = vmul.f32 %v3527, %v3544
        %v3546 = vpack.c.bf16 %v3545, %v3545
        %3547 = vrot.lane.b32.xlu0 %v3478, 96
        %v3548 = vpop.permute.xlu0 %3547
        %v3551 = vsel %vm2457, %v3546, 0
        %3553 = vmatpush.bf16.msra.mxu0 0
        %3554 = vmatpush.bf16.msra.mxu0 0
        %3555 = vmatpush.bf16.msra.mxu0 0
        %3556 = vmatpush.bf16.msra.mxu0 0
        %3557 = vmatpush.bf16.msra.mxu0 0
        %3558 = vmatpush.bf16.msra.mxu0 0
        %3559 = vmatpush.bf16.msra.mxu0 0
        %3560 = vmatpush.bf16.msra.mxu0 %v3548
        %3561 = vmatmul.bf16.gmra.mxu0 %v3551
        %v3562 = vpop.f32.mrf.mxu0
        %v3563 = vadd.f32 0.0, %v3562
        %v3564 = vpop.f32.mrf.mxu0
        %3565 = vdwg.mxu0
        %3566 = vrot.lane.b32.xlu0 %v3498, 64
        %v3567 = vpop.permute.xlu0 %3566
        %3568 = vrot.lane.b32.xlu0 %v3429, 64
        %v3569 = vpop.permute.xlu0 %3568
        %v3571 = vsel %vm871, %v3567, 0
        %v3574 = vsel %vm871, %v3569, 0
        %3576 = vmatpush.bf16.xpose.msra.mxu0 0
        %3577 = vmatpush.bf16.xpose.msra.mxu0 0
        %3578 = vmatpush.bf16.xpose.msra.mxu0 0
        %3579 = vmatpush.bf16.xpose.msra.mxu0 0
        %3580 = vmatpush.bf16.xpose.msra.mxu0 0
        %3581 = vmatpush.bf16.xpose.msra.mxu0 0
        %3582 = vmatpush.bf16.xpose.msra.mxu0 0
        %3583 = vmatpush.bf16.xpose.msra.mxu0 %v3574
        %3584 = vmatmul.bf16.gmra.mxu0 %v3571
        %v3585 = vpop.f32.mrf.mxu0
        %v3586 = vadd.f32 0.0, %v3585
        %v3587 = vpop.f32.mrf.mxu0
        %3588 = vdwg.mxu0
        %v3589 = vsel %vm2457, %v3586, -inf
        %3590 = vmax.xlane.f32.xlu0 %v3589
        %v3591 = vpop.xlane.xlu0 %3590
        %v3592 = vsub.f32 %v3586, %v3591
        %v3593 = vmul.f32 %v3592, 1.442695
        %v3594 = vpow.pop %v3593
        %v3595 = vsel %vm2457, %v3594, 0.0
        %3596 = vadd.xlane.f32.xlu0 %v3595
        %v3597 = vpop.xlane.xlu0 %3596
        %v3598 = vrcp.pop %v3597
        %v3599 = vmul.f32 %v3597, %v3598
        %v3600 = vsub.f32 1.0, %v3599
        %v3601 = vmul.f32 %v3598, %v3600
        %v3602 = vadd.f32 %v3598, %v3601
        %vm3603 = vweird.f32 %v3597
        %vm3604 = vweird.f32 %v3598
        %vm3605 = vmor %vm3603, %vm3604
        %v3606 = vsel %vm3605, %v3598, %v3602
        %v3607 = vand.u32 2147483647, %v3597
        %vm3608 = vcmp.eq.f32.partialorder %v3607, 8.507059e+37
        %v3609 = vand.u32 %v3597, 2147483648
        %v3610 = vor.u32 1.1754944e-38, %v3609
        %v3611 = vsel %vm3608, %v3610, %v3606
        %v3612 = vmul.f32 %v3594, %v3611
        %v3613 = vpack.c.bf16 %v3612, %v3612
        %3614 = vrot.lane.b32.xlu0 %v3478, 64
        %v3615 = vpop.permute.xlu0 %3614
        %v3618 = vsel %vm2457, %v3613, 0
        %3620 = vmatpush.bf16.msra.mxu0 0
        %3621 = vmatpush.bf16.msra.mxu0 0
        %3622 = vmatpush.bf16.msra.mxu0 0
        %3623 = vmatpush.bf16.msra.mxu0 0
        %3624 = vmatpush.bf16.msra.mxu0 0
        %3625 = vmatpush.bf16.msra.mxu0 0
        %3626 = vmatpush.bf16.msra.mxu0 0
        %3627 = vmatpush.bf16.msra.mxu0 %v3615
        %3628 = vmatmul.bf16.gmra.mxu0 %v3618
        %v3629 = vpop.f32.mrf.mxu0
        %v3630 = vadd.f32 0.0, %v3629
        %v3631 = vpop.f32.mrf.mxu0
        %3632 = vdwg.mxu0
        %3633 = vrot.lane.b32.xlu0 %v3498, 32
        %v3634 = vpop.permute.xlu0 %3633
        %3635 = vrot.lane.b32.xlu0 %v3429, 32
        %v3636 = vpop.permute.xlu0 %3635
        %v3638 = vsel %vm871, %v3634, 0
        %v3641 = vsel %vm871, %v3636, 0
        %3643 = vmatpush.bf16.xpose.msra.mxu0 0
        %3644 = vmatpush.bf16.xpose.msra.mxu0 0
        %3645 = vmatpush.bf16.xpose.msra.mxu0 0
        %3646 = vmatpush.bf16.xpose.msra.mxu0 0
        %3647 = vmatpush.bf16.xpose.msra.mxu0 0
        %3648 = vmatpush.bf16.xpose.msra.mxu0 0
        %3649 = vmatpush.bf16.xpose.msra.mxu0 0
        %3650 = vmatpush.bf16.xpose.msra.mxu0 %v3641
        %3651 = vmatmul.bf16.gmra.mxu0 %v3638
        %v3652 = vpop.f32.mrf.mxu0
        %v3653 = vadd.f32 0.0, %v3652
        %v3654 = vpop.f32.mrf.mxu0
        %3655 = vdwg.mxu0
        %v3656 = vsel %vm2457, %v3653, -inf
        %3657 = vmax.xlane.f32.xlu0 %v3656
        %v3658 = vpop.xlane.xlu0 %3657
        %v3659 = vsub.f32 %v3653, %v3658
        %v3660 = vmul.f32 %v3659, 1.442695
        %v3661 = vpow.pop %v3660
        %v3662 = vsel %vm2457, %v3661, 0.0
        %3663 = vadd.xlane.f32.xlu0 %v3662
        %v3664 = vpop.xlane.xlu0 %3663
        %v3665 = vrcp.pop %v3664
        %v3666 = vmul.f32 %v3664, %v3665
        %v3667 = vsub.f32 1.0, %v3666
        %v3668 = vmul.f32 %v3665, %v3667
        %v3669 = vadd.f32 %v3665, %v3668
        %vm3670 = vweird.f32 %v3664
        %vm3671 = vweird.f32 %v3665
        %vm3672 = vmor %vm3670, %vm3671
        %v3673 = vsel %vm3672, %v3665, %v3669
        %v3674 = vand.u32 2147483647, %v3664
        %vm3675 = vcmp.eq.f32.partialorder %v3674, 8.507059e+37
        %v3676 = vand.u32 %v3664, 2147483648
        %v3677 = vor.u32 1.1754944e-38, %v3676
        %v3678 = vsel %vm3675, %v3677, %v3673
        %v3679 = vmul.f32 %v3661, %v3678
        %v3680 = vpack.c.bf16 %v3679, %v3679
        %3681 = vrot.lane.b32.xlu0 %v3478, 32
        %v3682 = vpop.permute.xlu0 %3681
        %v3685 = vsel %vm2457, %v3680, 0
        %3687 = vmatpush.bf16.msra.mxu0 0
        %3688 = vmatpush.bf16.msra.mxu0 0
        %3689 = vmatpush.bf16.msra.mxu0 0
        %3690 = vmatpush.bf16.msra.mxu0 0
        %3691 = vmatpush.bf16.msra.mxu0 0
        %3692 = vmatpush.bf16.msra.mxu0 0
        %3693 = vmatpush.bf16.msra.mxu0 0
        %3694 = vmatpush.bf16.msra.mxu0 %v3682
        %3695 = vmatmul.bf16.gmra.mxu0 %v3685
        %v3696 = vpop.f32.mrf.mxu0
        %v3697 = vadd.f32 0.0, %v3696
        %v3698 = vpop.f32.mrf.mxu0
        %3699 = vdwg.mxu0
        %3701 = vrot.lane.b32.xlu0 %v3563, 32
        %v3702 = vpop.permute.xlu0 %3701
        %3705 = vrot.lane.b32.xlu0 %v3630, 64
        %v3706 = vpop.permute.xlu0 %3705
        %3709 = vrot.lane.b32.xlu0 %v3697, 96
        %v3710 = vpop.permute.xlu0 %3709
        %v3712 = vsel %vm871, %v3493, %v3702
        %v3713 = vsel %vm1166, %v3712, %v3706
        %v3714 = vsel %vm1168, %v3713, %v3710
        %v3715 = vpack.c.bf16 %v3714, %v3714
        %v3716 = vld [vmem:[%s18] sm:$0xf]
        %v3717 = vld [vmem:[%s18 + $0x4] sm:$0xf]
        %v3718 = vld [vmem:[%s18 + $0x8] sm:$0xf]
        %v3719 = vld [vmem:[%s18 + $0xc] sm:$0xf]
        %v3720 = vld [vmem:[%s18 + $0x10] sm:$0xf]
        %v3721 = vld [vmem:[%s18 + $0x14] sm:$0xf]
        %v3722 = vld [vmem:[%s18 + $0x18] sm:$0xf]
        %v3723 = vld [vmem:[%s18 + $0x1c] sm:$0xf]
        %v3724 = vld [vmem:[%s18 + $0x20] sm:$0xf]
        %v3725 = vld [vmem:[%s18 + $0x24] sm:$0xf]
        %v3726 = vld [vmem:[%s18 + $0x28] sm:$0xf]
        %v3727 = vld [vmem:[%s18 + $0x2c] sm:$0xf]
        %v3728 = vld [vmem:[%s18 + $0x30] sm:$0xf]
        %v3729 = vld [vmem:[%s18 + $0x34] sm:$0xf]
        %v3730 = vld [vmem:[%s18 + $0x38] sm:$0xf]
        %v3731 = vld [vmem:[%s18 + $0x3c] sm:$0xf]
        %v3732 = vld [vmem:[%s2 + $0x1b] sm:$0x1]
        %v3733 = vperm.slane %v3732, 0
        %v3750 = vunpack.c.l.b16 %v3716
        %v3751 = vunpack.c.l.b16 %v3717
        %v3752 = vunpack.c.l.b16 %v3718
        %v3753 = vunpack.c.l.b16 %v3719
        %v3754 = vunpack.c.l.b16 %v3720
        %v3755 = vunpack.c.l.b16 %v3721
        %v3756 = vunpack.c.l.b16 %v3722
        %v3757 = vunpack.c.l.b16 %v3723
        %v3758 = vunpack.c.l.b16 %v3724
        %v3759 = vunpack.c.l.b16 %v3725
        %v3760 = vunpack.c.l.b16 %v3726
        %v3761 = vunpack.c.l.b16 %v3727
        %v3762 = vunpack.c.l.b16 %v3728
        %v3763 = vunpack.c.l.b16 %v3729
        %v3764 = vunpack.c.l.b16 %v3730
        %v3765 = vunpack.c.l.b16 %v3731
        %v3766 = vpack.c.b16 %v3751, %v3750
        %v3767 = vpack.c.b16 %v3753, %v3752
        %v3768 = vpack.c.b16 %v3755, %v3754
        %v3769 = vpack.c.b16 %v3757, %v3756
        %v3770 = vpack.c.b16 %v3759, %v3758
        %v3771 = vpack.c.b16 %v3761, %v3760
        %v3772 = vpack.c.b16 %v3763, %v3762
        %v3773 = vpack.c.b16 %v3765, %v3764
        %3782 = vmatpush.bf16.msra.mxu0 %v3773
        %3783 = vmatpush.bf16.msra.mxu0 %v3772
        %3784 = vmatpush.bf16.msra.mxu0 %v3771
        %3785 = vmatpush.bf16.msra.mxu0 %v3770
        %3786 = vmatpush.bf16.msra.mxu0 %v3769
        %3787 = vmatpush.bf16.msra.mxu0 %v3768
        %3788 = vmatpush.bf16.msra.mxu0 %v3767
        %3789 = vmatpush.bf16.msra.mxu0 %v3766
        %3790 = vmatmul.bf16.gmra.mxu0 %v3715
        %v3791 = vpop.f32.mrf.mxu0
        %v3792 = vadd.f32 %v3733, %v3791
        %v3793 = vpop.f32.mrf.mxu0
        %3794 = vdwg.mxu0
        %v3795 = vadd.f32 %v3792, %v1471
        %3796 = vst [vmem:[%s639] sm:$0xff] %v3206
        %3797 = vst [vmem:[%s639 + $0x8] sm:$0xff] %v3207
        %3798 = vst [vmem:[%s646] sm:$0xff] %v3795
        %s3799 = sand.u32 %s455, 1
        %s3800 = scalar_lea.sflag [#allocation3], %s3799
        %s3801 = sand.u32 %s455, 1
        %s3802 = smul.addr %s3801, 16
        %s3803 = scalar_lea.vmem [#allocation2], %s3802
        %s3804 = sand.u32 %s481, 1
        %s3805 = scalar_lea.sflag [#allocation5], %s3804
        %s3806 = sand.u32 %s481, 1
        %s3807 = smul.addr %s3806, 8
        %s3808 = scalar_lea.vmem [#allocation4], %s3807
        // Predicated region
        $region97: #{frame_qa_reason_forward.1} parent=95 // pred_check
          %p3809 = pneg %p465
        $region98: #{frame_qa_reason_forward.1} parent=95 // pred_check_branch
          %3811 = sbr.rel (%p3809) target = $region100
        $region99: #{frame_qa_reason_forward.1} parent=95 // pred_region
          %3813 = vsyncadd %s3800, 0
          %s3814 = smul.addr %s38, 2
          %s3815 = smul.addr %s3814, 8
          %s3816 = scalar_lea.hbm %s19, %s3815
          %s3817 = sshll.u32 %s3803, 4
          %s3818 = int_to_ptr.vmem [resolvable:$true] %s3817
          %s3819 = sshll.u32 %s3816, 4
          %s3820 = int_to_ptr.hbm [resolvable:$true] %s3819
          %3825 = dma.vmem_to_hbm [thread:$0]  %s3818, 256, %s3820, %s3800, 128, 128, 8
        $region100: #{frame_qa_reason_forward.1} parent=95 // pred_fallthru
          _
        // Predicated region
        $region101: #{frame_qa_reason_forward.1} parent=95 // pred_check
          %p3826 = pneg %p491
        $region102: #{frame_qa_reason_forward.1} parent=95 // pred_check_branch
          %3828 = sbr.rel (%p3826) target = $region104
        $region103: #{frame_qa_reason_forward.1} parent=95 // pred_region
          %3830 = vsyncadd %s3805, 0
          %s3831 = smul.addr %s38, 8
          %s3832 = scalar_lea.hbm %s20, %s3831
          %s3834 = sshll.u32 %s3808, 4
          %s3835 = int_to_ptr.vmem [resolvable:$true] %s3834
          %s3836 = sshll.u32 %s3832, 4
          %s3837 = int_to_ptr.hbm [resolvable:$true] %s3836
          %3839 = dma.vmem_to_hbm [thread:$0]  %s3835, 128, %s3837, %s3805
        $region104: #{frame_qa_reason_forward.1} parent=95 // pred_fallthru
          _
      $region96: #{frame_qa_reason_forward.1} parent=5 // pred_fallthru
        _
      %p3840 = scmp.le.s32.totalorder 2, %s33
      // Predicated region
      $region105: #{frame_qa_reason_forward.1} parent=5 // pred_check
        %p3841 = pneg %p3840
      $region106: #{frame_qa_reason_forward.1} parent=5 // pred_check_branch
        %3843 = sbr.rel (%p3841) target = $region108
      $region107: #{frame_qa_reason_forward.1} parent=5 // pred_region
        %s3844 = ssub.s32 %s33, 2
        // Predicated region
        $region109: #{frame_qa_reason_forward.1} parent=107 // pred_check
          %p3845 = pneg %p471
        $region110: #{frame_qa_reason_forward.1} parent=107 // pred_check_branch
          %3847 = sbr.rel (%p3845) target = $region112
        $region111: #{frame_qa_reason_forward.1} parent=107 // pred_region
          %s3848 = sand.u32 %s456, 1
          %s3849 = scalar_lea.sflag [#allocation3], %s3848
          %s3850 = sand.u32 %s456, 1
          %s3851 = smul.addr %s3850, 16
          %s3852 = scalar_lea.vmem [#allocation2], %s3851
          %3854 = dma.done %s3849, 256
        $region112: #{frame_qa_reason_forward.1} parent=107 // pred_fallthru
          _
        // Predicated region
        $region113: #{frame_qa_reason_forward.1} parent=107 // pred_check
          %p3855 = pneg %p497
        $region114: #{frame_qa_reason_forward.1} parent=107 // pred_check_branch
          %3857 = sbr.rel (%p3855) target = $region116
        $region115: #{frame_qa_reason_forward.1} parent=107 // pred_region
          %s3858 = sand.u32 %s482, 1
          %s3859 = scalar_lea.sflag [#allocation5], %s3858
          %s3860 = sand.u32 %s482, 1
          %s3861 = smul.addr %s3860, 8
          %s3862 = scalar_lea.vmem [#allocation4], %s3861
          %3864 = dma.done %s3859, 128
        $region116: #{frame_qa_reason_forward.1} parent=107 // pred_fallthru
          _
      $region108: #{frame_qa_reason_forward.1} parent=5 // pred_fallthru
        _
    $region6: #{frame_qa_reason_forward.1} parent=1 // loop_footer
      %s37 = sadd.s32 1, %s33
    $region7: #{frame_qa_reason_forward.1} parent=1 // loop_footer_branch
      %32 = sbr.rel target = $region3
    $region8: #{frame_qa_reason_forward.1} parent=1 // loop_exit
      _
    %3865 = vsyncpa [#allocation3], 1
    %s3866 = scalar_lea.sflag [#allocation3], 1
    %3867 = vsyncpa %s3866, 1
    %3868 = vsyncpa [#allocation5], 1
    %s3869 = scalar_lea.sflag [#allocation5], 1
    %3870 = vsyncpa %s3869, 1

</llo_original>
